<compile_context>
chip_gen: v7x
topology: tpu7x:2x2x1
jax: 0.10.0
libtpu: 0.0.40
codegen_flags: <defaults>
</compile_context>

<pallas_src>
import functools

import jax
import jax.numpy as jnp
from jax.experimental import pallas as pl
from jax.experimental.pallas import tpu as pltpu

LN_EPS = 1e-5  # torch.nn.LayerNorm default


# ----------------------------- in-kernel helpers -----------------------------
def _layernorm_last(x, gamma, beta):
    """LayerNorm over the last axis (biased variance, matches torch)."""
    mean = jnp.mean(x, axis=-1, keepdims=True)
    xc = x - mean
    var = jnp.mean(xc * xc, axis=-1, keepdims=True)
    return xc * jax.lax.rsqrt(var + LN_EPS) * gamma + beta


def _gelu(x):
    # tanh-approximation GELU (routes through the EUP tanh slot).
    # TODO(synk): torch.nn.GELU() uses exact erf; tanh approx differs by <~1e-3.
    c = 0.7978845608028654  # sqrt(2/pi)
    return 0.5 * x * (1.0 + jnp.tanh(c * (x + 0.044715 * x * x * x)))


# --------------------------------- kernel ------------------------------------
def _transformer_kernel(x_ref,
                        ln1_g_ref, ln1_b_ref, wqkv_ref, rw_ref, rg_ref, rb_ref,
                        wout_ref, bout_ref,
                        ln2_g_ref, ln2_b_ref, w1_ref, b1_ref, w2_ref, b2_ref,
                        fg_ref, fb_ref, o_ref,
                        *, B, N, heads, dim_head, scale):
    l = pl.program_id(0)
    inner = heads * dim_head

    # Layer 0: seed the VMEM-resident activation (output block, constant index).
    @pl.when(l == 0)
    def _():
        o_ref[...] = x_ref[...]

    x = o_ref[...]                                      # (B*N, D) f32

    # ------------------- attention block: x = x + Attn(LN(x)) ----------------
    xn = _layernorm_last(x, ln1_g_ref[0], ln1_b_ref[0])
    qkv = jnp.dot(xn.astype(jnp.bfloat16), wqkv_ref[0],
                  preferred_element_type=jnp.float32)   # (B*N, 3*inner) f32
    rw = rw_ref[0]                                      # (H, H) re-attention mix
    rg = rg_ref[0]                                      # (1, H) head-LN gamma
    rb = rb_ref[0]                                      # (1, H) head-LN beta

    lane = jax.lax.broadcasted_iota(jnp.int32, (1, inner), 1)

    batch_outs = []
    for b in range(B):                                  # static unroll, B small
        r0 = b * N
        q = qkv[r0:r0 + N, 0:inner]
        k = qkv[r0:r0 + N, inner:2 * inner]
        v = qkv[r0:r0 + N, 2 * inner:3 * inner]

        # Per-head scores stacked on the sublane axis -> one softmax for all
        # heads of this batch element.
        dots = []
        for h in range(heads):
            qh = q[:, h * dim_head:(h + 1) * dim_head]
            kh = k[:, h * dim_head:(h + 1) * dim_head]
            dots.append(jax.lax.dot_general(
                qh, kh, (((1,), (1,)), ((), ())),
                preferred_element_type=jnp.float32))
        s = jnp.concatenate(dots, axis=0) * scale        # (H*N, N)
        s = s - jnp.max(s, axis=-1, keepdims=True)
        e = jnp.exp(s)
        p = e * pl.reciprocal(jnp.sum(e, axis=-1, keepdims=True), approx=True)
        attn = [p[h * N:(h + 1) * N, :] for h in range(heads)]

        # Re-attention mixing across heads + LayerNorm over the head axis.
        mixed = []
        for g in range(heads):
            acc = attn[0] * rw[0:1, g:g + 1]
            for h in range(1, heads):
                acc = acc + attn[h] * rw[h:h + 1, g:g + 1]
            mixed.append(acc)
        mean = mixed[0]
        for g in range(1, heads):
            mean = mean + mixed[g]
        mean = mean * (1.0 / heads)
        var = (mixed[0] - mean) * (mixed[0] - mean)
        for g in range(1, heads):
            var = var + (mixed[g] - mean) * (mixed[g] - mean)
        var = var * (1.0 / heads)
        rstd = jax.lax.rsqrt(var + LN_EPS)

        # out_b[:, h*dh:(h+1)*dh] = attn_norm_h @ v_h, accumulated in registers
        # by masking V to head h's lanes (disjoint masks -> implicit concat).
        out_b = None
        for h in range(heads):
            nh = (mixed[h] - mean) * rstd * rg[0:1, h:h + 1] + rb[0:1, h:h + 1]
            vh = jnp.where((lane >= h * dim_head) & (lane < (h + 1) * dim_head),
                           v, 0.0)
            term = jnp.dot(nh, vh, preferred_element_type=jnp.float32)
            out_b = term if out_b is None else out_b + term
        batch_outs.append(out_b)                         # (N, inner)

    attn_out = jnp.concatenate(batch_outs, axis=0)       # (B*N, inner)
    x = x + jnp.dot(attn_out.astype(jnp.bfloat16), wout_ref[0],
                    preferred_element_type=jnp.float32) + bout_ref[0]

    # ------------------ feed-forward block: x = x + FF(LN(x)) ----------------
    xn = _layernorm_last(x, ln2_g_ref[0], ln2_b_ref[0])
    h1 = jnp.dot(xn.astype(jnp.bfloat16), w1_ref[0],
                 preferred_element_type=jnp.float32) + b1_ref[0]
    h1 = _gelu(h1)
    x = x + jnp.dot(h1.astype(jnp.bfloat16), w2_ref[0],
                    preferred_element_type=jnp.float32) + b2_ref[0]

    o_ref[...] = x

    # Last layer: apply the final LayerNorm in place.
    @pl.when(l == pl.num_programs(0) - 1)
    def _():
        o_ref[...] = _layernorm_last(o_ref[...], fg_ref[...], fb_ref[...])


# --------------------------------- wrapper -----------------------------------
def transformer_forward(x, p, *, heads, dim_head):
    B, N, D = x.shape
    depth = p["wqkv"].shape[0]
    inner = heads * dim_head
    M = p["w1"].shape[2]
    R = B * N
    x2 = x.reshape(R, D)
    bf = lambda w: w.astype(jnp.bfloat16)   # cast weight stacks once (DMA/MXU win)

    def per_layer(shape):
        nd = len(shape)
        return pl.BlockSpec((1,) + shape, lambda l, _nd=nd: (l,) + (0,) * _nd)

    def const(shape):
        nd = len(shape)
        return pl.BlockSpec(shape, lambda l, _nd=nd: (0,) * _nd)

    kernel = functools.partial(_transformer_kernel, B=B, N=N, heads=heads,
                               dim_head=dim_head, scale=dim_head ** -0.5)

    out2 = pl.pallas_call(
        kernel,
        out_shape=jax.ShapeDtypeStruct((R, D), jnp.float32),
        grid_spec=pltpu.PrefetchScalarGridSpec(
            num_scalar_prefetch=0,
            grid=(depth,),
            in_specs=[
                const((R, D)),                               # x (loaded once)
                per_layer((1, D)), per_layer((1, D)),        # prenorm gamma/beta
                per_layer((D, 3 * inner)),                   # Wqkv (bf16)
                per_layer((heads, heads)),                   # reattn mix weights
                per_layer((1, heads)), per_layer((1, heads)),  # reattn LN g/b
                per_layer((inner, D)), per_layer((1, D)),    # Wout (bf16), bout
                per_layer((1, D)), per_layer((1, D)),        # ff prenorm g/b
                per_layer((D, M)), per_layer((1, M)),        # W1 (bf16), b1
                per_layer((M, D)), per_layer((1, D)),        # W2 (bf16), b2
                const((1, D)), const((1, D)),                # final LN g/b
            ],
            out_specs=const((R, D)),                         # VMEM-resident act
        ),
        compiler_params=pltpu.CompilerParams(
            dimension_semantics=("arbitrary",)),             # layers are sequential
    )(x2,
      p["ln1_g"], p["ln1_b"], bf(p["wqkv"]), p["reattn_w"], p["reattn_g"],
      p["reattn_b"], bf(p["wout"]), p["bout"],
      p["ln2_g"], p["ln2_b"], bf(p["w1"]), p["b1"], bf(p["w2"]), p["b2"],
      p["final_g"], p["final_b"])
    return out2.reshape(B, N, D)


# ---------------------------- parameter creation ------------------------------
def init_params(key, dim, depth, heads, dim_head, mlp_dim):
    inner = heads * dim_head
    k = jax.random.split(key, 5)
    return dict(
        ln1_g=jnp.ones((depth, 1, dim), jnp.float32),
        ln1_b=jnp.zeros((depth, 1, dim), jnp.float32),
        wqkv=0.05 * jax.random.normal(k[0], (depth, dim, 3 * inner), jnp.float32),
        reattn_w=jax.random.normal(k[1], (depth, heads, heads), jnp.float32),
        reattn_g=jnp.ones((depth, 1, heads), jnp.float32),
        reattn_b=jnp.zeros((depth, 1, heads), jnp.float32),
        wout=0.05 * jax.random.normal(k[2], (depth, inner, dim), jnp.float32),
        bout=jnp.zeros((depth, 1, dim), jnp.float32),
        ln2_g=jnp.ones((depth, 1, dim), jnp.float32),
        ln2_b=jnp.zeros((depth, 1, dim), jnp.float32),
        w1=0.05 * jax.random.normal(k[3], (depth, dim, mlp_dim), jnp.float32),
        b1=jnp.zeros((depth, 1, mlp_dim), jnp.float32),
        w2=0.05 * jax.random.normal(k[4], (depth, mlp_dim, dim), jnp.float32),
        b2=jnp.zeros((depth, 1, dim), jnp.float32),
        final_g=jnp.ones((1, dim), jnp.float32),
        final_b=jnp.zeros((1, dim), jnp.float32),
    )


# --------------------------- pure-JAX reference -------------------------------
def _ln_ref(x, g, b):
    m = jnp.mean(x, axis=-1, keepdims=True)
    v = jnp.mean((x - m) ** 2, axis=-1, keepdims=True)
    return (x - m) / jnp.sqrt(v + LN_EPS) * g + b


def reference_forward(x, p, *, heads, dim_head):
    B, N, D = x.shape
    depth = p["wqkv"].shape[0]
    inner = heads * dim_head
    scale = dim_head ** -0.5
    for l in range(depth):
        xn = _ln_ref(x, p["ln1_g"][l], p["ln1_b"][l])
        qkv = xn @ p["wqkv"][l]
        q, k, v = jnp.split(qkv, 3, axis=-1)
        rs = lambda t: t.reshape(B, N, heads, dim_head).transpose(0, 2, 1, 3)
        q, k, v = rs(q), rs(k), rs(v)
        dots = jnp.einsum("bhid,bhjd->bhij", q, k) * scale
        attn = jax.nn.softmax(dots, axis=-1)
        attn = jnp.einsum("bhij,hg->bgij", attn, p["reattn_w"][l])
        attn = attn.transpose(0, 2, 3, 1)                    # b i j h
        attn = _ln_ref(attn, p["reattn_g"][l][0], p["reattn_b"][l][0])
        attn = attn.transpose(0, 3, 1, 2)                    # b h i j
        out = jnp.einsum("bhij,bhjd->bhid", attn, v)
        out = out.transpose(0, 2, 1, 3).reshape(B, N, inner)
        x = out @ p["wout"][l] + p["bout"][l] + x
        xn = _ln_ref(x, p["ln2_g"][l], p["ln2_b"][l])
        h = jax.nn.gelu(xn @ p["w1"][l] + p["b1"][l], approximate=False)
        x = h @ p["w2"][l] + p["b2"][l] + x
    return _ln_ref(x, p["final_g"], p["final_b"])


# ----------------------------------- main -------------------------------------
if __name__ == "__main__":
    B, N, dim = 2, 8, 32
    heads, dim_head, mlp_dim, depth = 4, 8, 64, 2

    key = jax.random.PRNGKey(0)
    kx, kp = jax.random.split(key)
    x = jax.random.normal(kx, (B, N, dim), jnp.float32)
    params = init_params(kp, dim, depth, heads, dim_head, mlp_dim)

    y = transformer_forward(x, params, heads=heads, dim_head=dim_head)
    jax.block_until_ready(y)

    y_ref = reference_forward(x, params, heads=heads, dim_head=dim_head)
    assert y.shape == (B, N, dim)
    # Kernel uses bf16 MXU operands, tanh-GELU and an approx reciprocal vs the
    # all-f32 / exact-erf reference, so the tolerance is loosened accordingly.
    assert jnp.max(jnp.abs(y - y_ref)) < 5e-2, "mismatch vs pure-JAX reference"

    print("KERNEL_OK")
</pallas_src>

<mosaic_0001>
module attributes {stable_mosaic.version = 11 : i64} {
  func.func @_transformer_kernel(%arg0: i32, %arg1: memref<16x32xf32, #tpu.memory_space<vmem>>, %arg2: memref<1x1x32xf32, #tpu.memory_space<vmem>>, %arg3: memref<1x1x32xf32, #tpu.memory_space<vmem>>, %arg4: memref<1x32x96xbf16, #tpu.memory_space<vmem>>, %arg5: memref<1x4x4xf32, #tpu.memory_space<vmem>>, %arg6: memref<1x1x4xf32, #tpu.memory_space<vmem>>, %arg7: memref<1x1x4xf32, #tpu.memory_space<vmem>>, %arg8: memref<1x32x32xbf16, #tpu.memory_space<vmem>>, %arg9: memref<1x1x32xf32, #tpu.memory_space<vmem>>, %arg10: memref<1x1x32xf32, #tpu.memory_space<vmem>>, %arg11: memref<1x1x32xf32, #tpu.memory_space<vmem>>, %arg12: memref<1x32x64xbf16, #tpu.memory_space<vmem>>, %arg13: memref<1x1x64xf32, #tpu.memory_space<vmem>>, %arg14: memref<1x64x32xbf16, #tpu.memory_space<vmem>>, %arg15: memref<1x1x32xf32, #tpu.memory_space<vmem>>, %arg16: memref<1x32xf32, #tpu.memory_space<vmem>>, %arg17: memref<1x32xf32, #tpu.memory_space<vmem>>, %arg18: memref<16x32xf32, #tpu.memory_space<vmem>>) attributes {dimension_semantics = [#tpu.dimension_semantics<arbitrary>], iteration_bounds = array<i64: 2>, scalar_prefetch = 0 : i64, scratch_operands = 0 : i64, tpu.core_type = #tpu.core_type<tc>, window_params = [{pipeline_mode = #tpu.pipeline_mode<synchronous>, transform_indices = @transform_0, window_bounds = array<i64: 16, 32>}, {transform_indices = @transform_1, window_bounds = array<i64: 1, 1, 32>}, {transform_indices = @transform_2, window_bounds = array<i64: 1, 1, 32>}, {transform_indices = @transform_3, window_bounds = array<i64: 1, 32, 96>}, {transform_indices = @transform_4, window_bounds = array<i64: 1, 4, 4>}, {transform_indices = @transform_5, window_bounds = array<i64: 1, 1, 4>}, {transform_indices = @transform_6, window_bounds = array<i64: 1, 1, 4>}, {transform_indices = @transform_7, window_bounds = array<i64: 1, 32, 32>}, {transform_indices = @transform_8, window_bounds = array<i64: 1, 1, 32>}, {transform_indices = @transform_9, window_bounds = array<i64: 1, 1, 32>}, {transform_indices = @transform_10, window_bounds = array<i64: 1, 1, 32>}, {transform_indices = @transform_11, window_bounds = array<i64: 1, 32, 64>}, {transform_indices = @transform_12, window_bounds = array<i64: 1, 1, 64>}, {transform_indices = @transform_13, window_bounds = array<i64: 1, 64, 32>}, {transform_indices = @transform_14, window_bounds = array<i64: 1, 1, 32>}, {pipeline_mode = #tpu.pipeline_mode<synchronous>, transform_indices = @transform_15, window_bounds = array<i64: 1, 32>}, {pipeline_mode = #tpu.pipeline_mode<synchronous>, transform_indices = @transform_16, window_bounds = array<i64: 1, 32>}, {pipeline_mode = #tpu.pipeline_mode<synchronous>, transform_indices = @transform_17, window_bounds = array<i64: 16, 32>}]} {
    %c0_i32 = arith.constant 0 : i32
    %0 = arith.cmpi eq, %arg0, %c0_i32 : i32
    %1 = arith.extui %0 : i1 to i32
    %c0_i32_0 = arith.constant 0 : i32
    %2 = arith.cmpi ne, %1, %c0_i32_0 : i32
    scf.if %2 {
      %c0_112 = arith.constant 0 : index
      %c0_113 = arith.constant 0 : index
      %491 = vector.load %arg1[%c0_112, %c0_113] : memref<16x32xf32, #tpu.memory_space<vmem>>, vector<16x32xf32>
      %c0_114 = arith.constant 0 : index
      %c0_115 = arith.constant 0 : index
      %492 = vector.load %arg18[%c0_114, %c0_115] : memref<16x32xf32, #tpu.memory_space<vmem>>, vector<16x32xf32>
      tpu.vector_store %arg18[%c0_114, %c0_115], %491 {strides = array<i32>} : memref<16x32xf32, #tpu.memory_space<vmem>>, vector<16x32xf32>,
    } else {
    }
    %c0 = arith.constant 0 : index
    %c0_1 = arith.constant 0 : index
    %3 = vector.load %arg18[%c0, %c0_1] : memref<16x32xf32, #tpu.memory_space<vmem>>, vector<16x32xf32>
    %c0_2 = arith.constant 0 : index
    %c0_3 = arith.constant 0 : index
    %c0_4 = arith.constant 0 : index
    %4 = vector.load %arg2[%c0_2, %c0_3, %c0_4] : memref<1x1x32xf32, #tpu.memory_space<vmem>>, vector<1x1x32xf32>
    %5 = vector.shape_cast %4 : vector<1x1x32xf32> to vector<1x32xf32>
    %c0_5 = arith.constant 0 : index
    %c0_6 = arith.constant 0 : index
    %c0_7 = arith.constant 0 : index
    %6 = vector.load %arg3[%c0_5, %c0_6, %c0_7] : memref<1x1x32xf32, #tpu.memory_space<vmem>>, vector<1x1x32xf32>
    %7 = vector.shape_cast %6 : vector<1x1x32xf32> to vector<1x32xf32>
    %cst = arith.constant dense<0.000000e+00> : vector<16xf32>
    %8 = vector.multi_reduction <add>, %3, %cst [1] : vector<16x32xf32> to vector<16xf32>
    %9 = vector.shape_cast %8 : vector<16xf32> to vector<16x1xf32>
    %cst_8 = arith.constant 3.200000e+01 : f32
    %10 = vector.broadcast %cst_8 : f32 to vector<16x1xf32>
    %11 = arith.divf %9, %10 : vector<16x1xf32>
    %12 = vector.broadcast %11 : vector<16x1xf32> to vector<16x32xf32>
    %13 = arith.subf %3, %12 : vector<16x32xf32>
    %14 = arith.mulf %13, %13 : vector<16x32xf32>
    %cst_9 = arith.constant dense<0.000000e+00> : vector<16xf32>
    %15 = vector.multi_reduction <add>, %14, %cst_9 [1] : vector<16x32xf32> to vector<16xf32>
    %16 = vector.shape_cast %15 : vector<16xf32> to vector<16x1xf32>
    %cst_10 = arith.constant 3.200000e+01 : f32
    %17 = vector.broadcast %cst_10 : f32 to vector<16x1xf32>
    %18 = arith.divf %16, %17 : vector<16x1xf32>
    %cst_11 = arith.constant 9.99999974E-6 : f32
    %19 = vector.broadcast %cst_11 : f32 to vector<16x1xf32>
    %20 = arith.addf %18, %19 : vector<16x1xf32>
    %21 = math.rsqrt %20 : vector<16x1xf32>
    %22 = vector.broadcast %21 : vector<16x1xf32> to vector<16x32xf32>
    %23 = arith.mulf %13, %22 : vector<16x32xf32>
    %24 = vector.broadcast %5 : vector<1x32xf32> to vector<16x32xf32>
    %25 = arith.mulf %23, %24 : vector<16x32xf32>
    %26 = vector.broadcast %7 : vector<1x32xf32> to vector<16x32xf32>
    %27 = arith.addf %25, %26 : vector<16x32xf32>
    %28 = arith.truncf %27 : vector<16x32xf32> to vector<16x32xbf16>
    %c0_12 = arith.constant 0 : index
    %c0_13 = arith.constant 0 : index
    %c0_14 = arith.constant 0 : index
    %29 = vector.load %arg4[%c0_12, %c0_13, %c0_14] : memref<1x32x96xbf16, #tpu.memory_space<vmem>>, vector<1x32x96xbf16>
    %30 = vector.shape_cast %29 : vector<1x32x96xbf16> to vector<32x96xbf16>
    %cst_15 = arith.constant dense<0.000000e+00> : vector<16x96xf32>
    %31 = tpu.matmul %28, %30, %cst_15 {dimension_numbers = #tpu.dot_dimension_numbers<[1], [0], [0], [1], [0, 0, 1, 1], [], []>} : vector<16x32xbf16>, vector<32x96xbf16>, vector<16x96xf32> -> vector<16x96xf32>
    %c0_16 = arith.constant 0 : index
    %c0_17 = arith.constant 0 : index
    %c0_18 = arith.constant 0 : index
    %32 = vector.load %arg5[%c0_16, %c0_17, %c0_18] : memref<1x4x4xf32, #tpu.memory_space<vmem>>, vector<1x4x4xf32>
    %33 = vector.shape_cast %32 : vector<1x4x4xf32> to vector<4x4xf32>
    %c0_19 = arith.constant 0 : index
    %c0_20 = arith.constant 0 : index
    %c0_21 = arith.constant 0 : index
    %34 = vector.load %arg6[%c0_19, %c0_20, %c0_21] : memref<1x1x4xf32, #tpu.memory_space<vmem>>, vector<1x1x4xf32>
    %35 = vector.shape_cast %34 : vector<1x1x4xf32> to vector<1x4xf32>
    %c0_22 = arith.constant 0 : index
    %c0_23 = arith.constant 0 : index
    %c0_24 = arith.constant 0 : index
    %36 = vector.load %arg7[%c0_22, %c0_23, %c0_24] : memref<1x1x4xf32, #tpu.memory_space<vmem>>, vector<1x1x4xf32>
    %37 = vector.shape_cast %36 : vector<1x1x4xf32> to vector<1x4xf32>
    %38 = tpu.iota {dimensions = array<i32: 1>} : vector<1x32xi32>
    %39 = vector.extract_strided_slice %31 {offsets = [0, 0], sizes = [8, 32], strides = [1, 1]} : vector<16x96xf32> to vector<8x32xf32>
    %40 = vector.extract_strided_slice %31 {offsets = [0, 32], sizes = [8, 32], strides = [1, 1]} : vector<16x96xf32> to vector<8x32xf32>
    %41 = vector.extract_strided_slice %31 {offsets = [0, 64], sizes = [8, 32], strides = [1, 1]} : vector<16x96xf32> to vector<8x32xf32>
    %42 = vector.extract_strided_slice %39 {offsets = [0, 0], sizes = [8, 8], strides = [1, 1]} : vector<8x32xf32> to vector<8x8xf32>
    %43 = vector.extract_strided_slice %40 {offsets = [0, 0], sizes = [8, 8], strides = [1, 1]} : vector<8x32xf32> to vector<8x8xf32>
    %cst_25 = arith.constant dense<0.000000e+00> : vector<8x8xf32>
    %44 = tpu.matmul %42, %43, %cst_25 {dimension_numbers = #tpu.dot_dimension_numbers<[1], [1], [0], [0], [0, 0, 1, 0], [], []>} : vector<8x8xf32>, vector<8x8xf32>, vector<8x8xf32> -> vector<8x8xf32>
    %45 = vector.extract_strided_slice %39 {offsets = [0, 8], sizes = [8, 8], strides = [1, 1]} : vector<8x32xf32> to vector<8x8xf32>
    %46 = vector.extract_strided_slice %40 {offsets = [0, 8], sizes = [8, 8], strides = [1, 1]} : vector<8x32xf32> to vector<8x8xf32>
    %cst_26 = arith.constant dense<0.000000e+00> : vector<8x8xf32>
    %47 = tpu.matmul %45, %46, %cst_26 {dimension_numbers = #tpu.dot_dimension_numbers<[1], [1], [0], [0], [0, 0, 1, 0], [], []>} : vector<8x8xf32>, vector<8x8xf32>, vector<8x8xf32> -> vector<8x8xf32>
    %48 = vector.extract_strided_slice %39 {offsets = [0, 16], sizes = [8, 8], strides = [1, 1]} : vector<8x32xf32> to vector<8x8xf32>
    %49 = vector.extract_strided_slice %40 {offsets = [0, 16], sizes = [8, 8], strides = [1, 1]} : vector<8x32xf32> to vector<8x8xf32>
    %cst_27 = arith.constant dense<0.000000e+00> : vector<8x8xf32>
    %50 = tpu.matmul %48, %49, %cst_27 {dimension_numbers = #tpu.dot_dimension_numbers<[1], [1], [0], [0], [0, 0, 1, 0], [], []>} : vector<8x8xf32>, vector<8x8xf32>, vector<8x8xf32> -> vector<8x8xf32>
    %51 = vector.extract_strided_slice %39 {offsets = [0, 24], sizes = [8, 8], strides = [1, 1]} : vector<8x32xf32> to vector<8x8xf32>
    %52 = vector.extract_strided_slice %40 {offsets = [0, 24], sizes = [8, 8], strides = [1, 1]} : vector<8x32xf32> to vector<8x8xf32>
    %cst_28 = arith.constant dense<0.000000e+00> : vector<8x8xf32>
    %53 = tpu.matmul %51, %52, %cst_28 {dimension_numbers = #tpu.dot_dimension_numbers<[1], [1], [0], [0], [0, 0, 1, 0], [], []>} : vector<8x8xf32>, vector<8x8xf32>, vector<8x8xf32> -> vector<8x8xf32>
    %54 = tpu.concatenate %44, %47, %50, %53 in 0 : vector<8x8xf32>, vector<8x8xf32>, vector<8x8xf32>, vector<8x8xf32> -> vector<32x8xf32>
    %cst_29 = arith.constant 0.353553385 : f32
    %55 = vector.broadcast %cst_29 : f32 to vector<32x8xf32>
    %56 = arith.mulf %54, %55 : vector<32x8xf32>
    %cst_30 = arith.constant dense<0xFF800000> : vector<32xf32>
    %57 = vector.multi_reduction <maximumf>, %56, %cst_30 [1] : vector<32x8xf32> to vector<32xf32>
    %58 = vector.shape_cast %57 : vector<32xf32> to vector<32x1xf32>
    %59 = vector.broadcast %58 : vector<32x1xf32> to vector<32x8xf32>
    %60 = arith.subf %56, %59 : vector<32x8xf32>
    %61 = math.exp %60 : vector<32x8xf32>
    %cst_31 = arith.constant dense<0.000000e+00> : vector<32xf32>
    %62 = vector.multi_reduction <add>, %61, %cst_31 [1] : vector<32x8xf32> to vector<32xf32>
    %63 = vector.shape_cast %62 : vector<32xf32> to vector<32x1xf32>
    %64 = tpu.reciprocal %63 {approx = true} : vector<32x1xf32> -> vector<32x1xf32>
    %65 = vector.broadcast %64 : vector<32x1xf32> to vector<32x8xf32>
    %66 = arith.mulf %61, %65 : vector<32x8xf32>
    %67 = vector.extract_strided_slice %66 {offsets = [0, 0], sizes = [8, 8], strides = [1, 1]} : vector<32x8xf32> to vector<8x8xf32>
    %68 = vector.extract_strided_slice %66 {offsets = [8, 0], sizes = [8, 8], strides = [1, 1]} : vector<32x8xf32> to vector<8x8xf32>
    %69 = vector.extract_strided_slice %66 {offsets = [16, 0], sizes = [8, 8], strides = [1, 1]} : vector<32x8xf32> to vector<8x8xf32>
    %70 = vector.extract_strided_slice %66 {offsets = [24, 0], sizes = [8, 8], strides = [1, 1]} : vector<32x8xf32> to vector<8x8xf32>
    %71 = vector.extract_strided_slice %33 {offsets = [0, 0], sizes = [1, 1], strides = [1, 1]} : vector<4x4xf32> to vector<1x1xf32>
    %72 = vector.broadcast %71 : vector<1x1xf32> to vector<8x8xf32>
    %73 = arith.mulf %67, %72 : vector<8x8xf32>
    %74 = vector.extract_strided_slice %33 {offsets = [1, 0], sizes = [1, 1], strides = [1, 1]} : vector<4x4xf32> to vector<1x1xf32>
    %75 = vector.broadcast %74 : vector<1x1xf32> to vector<8x8xf32>
    %76 = arith.mulf %68, %75 : vector<8x8xf32>
    %77 = arith.addf %73, %76 : vector<8x8xf32>
    %78 = vector.extract_strided_slice %33 {offsets = [2, 0], sizes = [1, 1], strides = [1, 1]} : vector<4x4xf32> to vector<1x1xf32>
    %79 = vector.broadcast %78 : vector<1x1xf32> to vector<8x8xf32>
    %80 = arith.mulf %69, %79 : vector<8x8xf32>
    %81 = arith.addf %77, %80 : vector<8x8xf32>
    %82 = vector.extract_strided_slice %33 {offsets = [3, 0], sizes = [1, 1], strides = [1, 1]} : vector<4x4xf32> to vector<1x1xf32>
    %83 = vector.broadcast %82 : vector<1x1xf32> to vector<8x8xf32>
    %84 = arith.mulf %70, %83 : vector<8x8xf32>
    %85 = arith.addf %81, %84 : vector<8x8xf32>
    %86 = vector.extract_strided_slice %33 {offsets = [0, 1], sizes = [1, 1], strides = [1, 1]} : vector<4x4xf32> to vector<1x1xf32>
    %87 = vector.broadcast %86 : vector<1x1xf32> to vector<8x8xf32>
    %88 = arith.mulf %67, %87 : vector<8x8xf32>
    %89 = vector.extract_strided_slice %33 {offsets = [1, 1], sizes = [1, 1], strides = [1, 1]} : vector<4x4xf32> to vector<1x1xf32>
    %90 = vector.broadcast %89 : vector<1x1xf32> to vector<8x8xf32>
    %91 = arith.mulf %68, %90 : vector<8x8xf32>
    %92 = arith.addf %88, %91 : vector<8x8xf32>
    %93 = vector.extract_strided_slice %33 {offsets = [2, 1], sizes = [1, 1], strides = [1, 1]} : vector<4x4xf32> to vector<1x1xf32>
    %94 = vector.broadcast %93 : vector<1x1xf32> to vector<8x8xf32>
    %95 = arith.mulf %69, %94 : vector<8x8xf32>
    %96 = arith.addf %92, %95 : vector<8x8xf32>
    %97 = vector.extract_strided_slice %33 {offsets = [3, 1], sizes = [1, 1], strides = [1, 1]} : vector<4x4xf32> to vector<1x1xf32>
    %98 = vector.broadcast %97 : vector<1x1xf32> to vector<8x8xf32>
    %99 = arith.mulf %70, %98 : vector<8x8xf32>
    %100 = arith.addf %96, %99 : vector<8x8xf32>
    %101 = vector.extract_strided_slice %33 {offsets = [0, 2], sizes = [1, 1], strides = [1, 1]} : vector<4x4xf32> to vector<1x1xf32>
    %102 = vector.broadcast %101 : vector<1x1xf32> to vector<8x8xf32>
    %103 = arith.mulf %67, %102 : vector<8x8xf32>
    %104 = vector.extract_strided_slice %33 {offsets = [1, 2], sizes = [1, 1], strides = [1, 1]} : vector<4x4xf32> to vector<1x1xf32>
    %105 = vector.broadcast %104 : vector<1x1xf32> to vector<8x8xf32>
    %106 = arith.mulf %68, %105 : vector<8x8xf32>
    %107 = arith.addf %103, %106 : vector<8x8xf32>
    %108 = vector.extract_strided_slice %33 {offsets = [2, 2], sizes = [1, 1], strides = [1, 1]} : vector<4x4xf32> to vector<1x1xf32>
    %109 = vector.broadcast %108 : vector<1x1xf32> to vector<8x8xf32>
    %110 = arith.mulf %69, %109 : vector<8x8xf32>
    %111 = arith.addf %107, %110 : vector<8x8xf32>
    %112 = vector.extract_strided_slice %33 {offsets = [3, 2], sizes = [1, 1], strides = [1, 1]} : vector<4x4xf32> to vector<1x1xf32>
    %113 = vector.broadcast %112 : vector<1x1xf32> to vector<8x8xf32>
    %114 = arith.mulf %70, %113 : vector<8x8xf32>
    %115 = arith.addf %111, %114 : vector<8x8xf32>
    %116 = vector.extract_strided_slice %33 {offsets = [0, 3], sizes = [1, 1], strides = [1, 1]} : vector<4x4xf32> to vector<1x1xf32>
    %117 = vector.broadcast %116 : vector<1x1xf32> to vector<8x8xf32>
    %118 = arith.mulf %67, %117 : vector<8x8xf32>
    %119 = vector.extract_strided_slice %33 {offsets = [1, 3], sizes = [1, 1], strides = [1, 1]} : vector<4x4xf32> to vector<1x1xf32>
    %120 = vector.broadcast %119 : vector<1x1xf32> to vector<8x8xf32>
    %121 = arith.mulf %68, %120 : vector<8x8xf32>
    %122 = arith.addf %118, %121 : vector<8x8xf32>
    %123 = vector.extract_strided_slice %33 {offsets = [2, 3], sizes = [1, 1], strides = [1, 1]} : vector<4x4xf32> to vector<1x1xf32>
    %124 = vector.broadcast %123 : vector<1x1xf32> to vector<8x8xf32>
    %125 = arith.mulf %69, %124 : vector<8x8xf32>
    %126 = arith.addf %122, %125 : vector<8x8xf32>
    %127 = vector.extract_strided_slice %33 {offsets = [3, 3], sizes = [1, 1], strides = [1, 1]} : vector<4x4xf32> to vector<1x1xf32>
    %128 = vector.broadcast %127 : vector<1x1xf32> to vector<8x8xf32>
    %129 = arith.mulf %70, %128 : vector<8x8xf32>
    %130 = arith.addf %126, %129 : vector<8x8xf32>
    %131 = arith.addf %85, %100 : vector<8x8xf32>
    %132 = arith.addf %131, %115 : vector<8x8xf32>
    %133 = arith.addf %132, %130 : vector<8x8xf32>
    %cst_32 = arith.constant 2.500000e-01 : f32
    %134 = vector.broadcast %cst_32 : f32 to vector<8x8xf32>
    %135 = arith.mulf %133, %134 : vector<8x8xf32>
    %136 = arith.subf %85, %135 : vector<8x8xf32>
    %137 = arith.subf %85, %135 : vector<8x8xf32>
    %138 = arith.mulf %136, %137 : vector<8x8xf32>
    %139 = arith.subf %100, %135 : vector<8x8xf32>
    %140 = arith.subf %100, %135 : vector<8x8xf32>
    %141 = arith.mulf %139, %140 : vector<8x8xf32>
    %142 = arith.addf %138, %141 : vector<8x8xf32>
    %143 = arith.subf %115, %135 : vector<8x8xf32>
    %144 = arith.subf %115, %135 : vector<8x8xf32>
    %145 = arith.mulf %143, %144 : vector<8x8xf32>
    %146 = arith.addf %142, %145 : vector<8x8xf32>
    %147 = arith.subf %130, %135 : vector<8x8xf32>
    %148 = arith.subf %130, %135 : vector<8x8xf32>
    %149 = arith.mulf %147, %148 : vector<8x8xf32>
    %150 = arith.addf %146, %149 : vector<8x8xf32>
    %cst_33 = arith.constant 2.500000e-01 : f32
    %151 = vector.broadcast %cst_33 : f32 to vector<8x8xf32>
    %152 = arith.mulf %150, %151 : vector<8x8xf32>
    %cst_34 = arith.constant 9.99999974E-6 : f32
    %153 = vector.broadcast %cst_34 : f32 to vector<8x8xf32>
    %154 = arith.addf %152, %153 : vector<8x8xf32>
    %155 = math.rsqrt %154 : vector<8x8xf32>
    %156 = arith.subf %85, %135 : vector<8x8xf32>
    %157 = arith.mulf %156, %155 : vector<8x8xf32>
    %158 = vector.extract_strided_slice %35 {offsets = [0, 0], sizes = [1, 1], strides = [1, 1]} : vector<1x4xf32> to vector<1x1xf32>
    %159 = vector.broadcast %158 : vector<1x1xf32> to vector<8x8xf32>
    %160 = arith.mulf %157, %159 : vector<8x8xf32>
    %161 = vector.extract_strided_slice %37 {offsets = [0, 0], sizes = [1, 1], strides = [1, 1]} : vector<1x4xf32> to vector<1x1xf32>
    %162 = vector.broadcast %161 : vector<1x1xf32> to vector<8x8xf32>
    %163 = arith.addf %160, %162 : vector<8x8xf32>
    %c0_i32_35 = arith.constant 0 : i32
    %164 = vector.broadcast %c0_i32_35 : i32 to vector<1x32xi32>
    %165 = arith.cmpi sge, %38, %164 : vector<1x32xi32>
    %c8_i32 = arith.constant 8 : i32
    %166 = vector.broadcast %c8_i32 : i32 to vector<1x32xi32>
    %167 = arith.cmpi slt, %38, %166 : vector<1x32xi32>
    %168 = arith.andi %165, %167 : vector<1x32xi1>
    %cst_36 = arith.constant 0.000000e+00 : f32
    %169 = vector.shape_cast %168 : vector<1x32xi1> to vector<1x32xi1>
    %170 = vector.broadcast %169 : vector<1x32xi1> to vector<8x32xi1>
    %171 = vector.broadcast %cst_36 : f32 to vector<8x32xf32>
    %172 = arith.select %170, %41, %171 : vector<8x32xi1>, vector<8x32xf32>
    %cst_37 = arith.constant dense<0.000000e+00> : vector<8x32xf32>
    %173 = tpu.matmul %163, %172, %cst_37 {dimension_numbers = #tpu.dot_dimension_numbers<[1], [0], [0], [1], [0, 0, 1, 1], [], []>} : vector<8x8xf32>, vector<8x32xf32>, vector<8x32xf32> -> vector<8x32xf32>
    %174 = arith.subf %100, %135 : vector<8x8xf32>
    %175 = arith.mulf %174, %155 : vector<8x8xf32>
    %176 = vector.extract_strided_slice %35 {offsets = [0, 1], sizes = [1, 1], strides = [1, 1]} : vector<1x4xf32> to vector<1x1xf32>
    %177 = vector.broadcast %176 : vector<1x1xf32> to vector<8x8xf32>
    %178 = arith.mulf %175, %177 : vector<8x8xf32>
    %179 = vector.extract_strided_slice %37 {offsets = [0, 1], sizes = [1, 1], strides = [1, 1]} : vector<1x4xf32> to vector<1x1xf32>
    %180 = vector.broadcast %179 : vector<1x1xf32> to vector<8x8xf32>
    %181 = arith.addf %178, %180 : vector<8x8xf32>
    %c8_i32_38 = arith.constant 8 : i32
    %182 = vector.broadcast %c8_i32_38 : i32 to vector<1x32xi32>
    %183 = arith.cmpi sge, %38, %182 : vector<1x32xi32>
    %c16_i32 = arith.constant 16 : i32
    %184 = vector.broadcast %c16_i32 : i32 to vector<1x32xi32>
    %185 = arith.cmpi slt, %38, %184 : vector<1x32xi32>
    %186 = arith.andi %183, %185 : vector<1x32xi1>
    %cst_39 = arith.constant 0.000000e+00 : f32
    %187 = vector.shape_cast %186 : vector<1x32xi1> to vector<1x32xi1>
    %188 = vector.broadcast %187 : vector<1x32xi1> to vector<8x32xi1>
    %189 = vector.broadcast %cst_39 : f32 to vector<8x32xf32>
    %190 = arith.select %188, %41, %189 : vector<8x32xi1>, vector<8x32xf32>
    %cst_40 = arith.constant dense<0.000000e+00> : vector<8x32xf32>
    %191 = tpu.matmul %181, %190, %cst_40 {dimension_numbers = #tpu.dot_dimension_numbers<[1], [0], [0], [1], [0, 0, 1, 1], [], []>} : vector<8x8xf32>, vector<8x32xf32>, vector<8x32xf32> -> vector<8x32xf32>
    %192 = arith.addf %173, %191 : vector<8x32xf32>
    %193 = arith.subf %115, %135 : vector<8x8xf32>
    %194 = arith.mulf %193, %155 : vector<8x8xf32>
    %195 = vector.extract_strided_slice %35 {offsets = [0, 2], sizes = [1, 1], strides = [1, 1]} : vector<1x4xf32> to vector<1x1xf32>
    %196 = vector.broadcast %195 : vector<1x1xf32> to vector<8x8xf32>
    %197 = arith.mulf %194, %196 : vector<8x8xf32>
    %198 = vector.extract_strided_slice %37 {offsets = [0, 2], sizes = [1, 1], strides = [1, 1]} : vector<1x4xf32> to vector<1x1xf32>
    %199 = vector.broadcast %198 : vector<1x1xf32> to vector<8x8xf32>
    %200 = arith.addf %197, %199 : vector<8x8xf32>
    %c16_i32_41 = arith.constant 16 : i32
    %201 = vector.broadcast %c16_i32_41 : i32 to vector<1x32xi32>
    %202 = arith.cmpi sge, %38, %201 : vector<1x32xi32>
    %c24_i32 = arith.constant 24 : i32
    %203 = vector.broadcast %c24_i32 : i32 to vector<1x32xi32>
    %204 = arith.cmpi slt, %38, %203 : vector<1x32xi32>
    %205 = arith.andi %202, %204 : vector<1x32xi1>
    %cst_42 = arith.constant 0.000000e+00 : f32
    %206 = vector.shape_cast %205 : vector<1x32xi1> to vector<1x32xi1>
    %207 = vector.broadcast %206 : vector<1x32xi1> to vector<8x32xi1>
    %208 = vector.broadcast %cst_42 : f32 to vector<8x32xf32>
    %209 = arith.select %207, %41, %208 : vector<8x32xi1>, vector<8x32xf32>
    %cst_43 = arith.constant dense<0.000000e+00> : vector<8x32xf32>
    %210 = tpu.matmul %200, %209, %cst_43 {dimension_numbers = #tpu.dot_dimension_numbers<[1], [0], [0], [1], [0, 0, 1, 1], [], []>} : vector<8x8xf32>, vector<8x32xf32>, vector<8x32xf32> -> vector<8x32xf32>
    %211 = arith.addf %192, %210 : vector<8x32xf32>
    %212 = arith.subf %130, %135 : vector<8x8xf32>
    %213 = arith.mulf %212, %155 : vector<8x8xf32>
    %214 = vector.extract_strided_slice %35 {offsets = [0, 3], sizes = [1, 1], strides = [1, 1]} : vector<1x4xf32> to vector<1x1xf32>
    %215 = vector.broadcast %214 : vector<1x1xf32> to vector<8x8xf32>
    %216 = arith.mulf %213, %215 : vector<8x8xf32>
    %217 = vector.extract_strided_slice %37 {offsets = [0, 3], sizes = [1, 1], strides = [1, 1]} : vector<1x4xf32> to vector<1x1xf32>
    %218 = vector.broadcast %217 : vector<1x1xf32> to vector<8x8xf32>
    %219 = arith.addf %216, %218 : vector<8x8xf32>
    %c24_i32_44 = arith.constant 24 : i32
    %220 = vector.broadcast %c24_i32_44 : i32 to vector<1x32xi32>
    %221 = arith.cmpi sge, %38, %220 : vector<1x32xi32>
    %c32_i32 = arith.constant 32 : i32
    %222 = vector.broadcast %c32_i32 : i32 to vector<1x32xi32>
    %223 = arith.cmpi slt, %38, %222 : vector<1x32xi32>
    %224 = arith.andi %221, %223 : vector<1x32xi1>
    %cst_45 = arith.constant 0.000000e+00 : f32
    %225 = vector.shape_cast %224 : vector<1x32xi1> to vector<1x32xi1>
    %226 = vector.broadcast %225 : vector<1x32xi1> to vector<8x32xi1>
    %227 = vector.broadcast %cst_45 : f32 to vector<8x32xf32>
    %228 = arith.select %226, %41, %227 : vector<8x32xi1>, vector<8x32xf32>
    %cst_46 = arith.constant dense<0.000000e+00> : vector<8x32xf32>
    %229 = tpu.matmul %219, %228, %cst_46 {dimension_numbers = #tpu.dot_dimension_numbers<[1], [0], [0], [1], [0, 0, 1, 1], [], []>} : vector<8x8xf32>, vector<8x32xf32>, vector<8x32xf32> -> vector<8x32xf32>
    %230 = arith.addf %211, %229 : vector<8x32xf32>
    %231 = vector.extract_strided_slice %31 {offsets = [8, 0], sizes = [8, 32], strides = [1, 1]} : vector<16x96xf32> to vector<8x32xf32>
    %232 = vector.extract_strided_slice %31 {offsets = [8, 32], sizes = [8, 32], strides = [1, 1]} : vector<16x96xf32> to vector<8x32xf32>
    %233 = vector.extract_strided_slice %31 {offsets = [8, 64], sizes = [8, 32], strides = [1, 1]} : vector<16x96xf32> to vector<8x32xf32>
    %234 = vector.extract_strided_slice %231 {offsets = [0, 0], sizes = [8, 8], strides = [1, 1]} : vector<8x32xf32> to vector<8x8xf32>
    %235 = vector.extract_strided_slice %232 {offsets = [0, 0], sizes = [8, 8], strides = [1, 1]} : vector<8x32xf32> to vector<8x8xf32>
    %cst_47 = arith.constant dense<0.000000e+00> : vector<8x8xf32>
    %236 = tpu.matmul %234, %235, %cst_47 {dimension_numbers = #tpu.dot_dimension_numbers<[1], [1], [0], [0], [0, 0, 1, 0], [], []>} : vector<8x8xf32>, vector<8x8xf32>, vector<8x8xf32> -> vector<8x8xf32>
    %237 = vector.extract_strided_slice %231 {offsets = [0, 8], sizes = [8, 8], strides = [1, 1]} : vector<8x32xf32> to vector<8x8xf32>
    %238 = vector.extract_strided_slice %232 {offsets = [0, 8], sizes = [8, 8], strides = [1, 1]} : vector<8x32xf32> to vector<8x8xf32>
    %cst_48 = arith.constant dense<0.000000e+00> : vector<8x8xf32>
    %239 = tpu.matmul %237, %238, %cst_48 {dimension_numbers = #tpu.dot_dimension_numbers<[1], [1], [0], [0], [0, 0, 1, 0], [], []>} : vector<8x8xf32>, vector<8x8xf32>, vector<8x8xf32> -> vector<8x8xf32>
    %240 = vector.extract_strided_slice %231 {offsets = [0, 16], sizes = [8, 8], strides = [1, 1]} : vector<8x32xf32> to vector<8x8xf32>
    %241 = vector.extract_strided_slice %232 {offsets = [0, 16], sizes = [8, 8], strides = [1, 1]} : vector<8x32xf32> to vector<8x8xf32>
    %cst_49 = arith.constant dense<0.000000e+00> : vector<8x8xf32>
    %242 = tpu.matmul %240, %241, %cst_49 {dimension_numbers = #tpu.dot_dimension_numbers<[1], [1], [0], [0], [0, 0, 1, 0], [], []>} : vector<8x8xf32>, vector<8x8xf32>, vector<8x8xf32> -> vector<8x8xf32>
    %243 = vector.extract_strided_slice %231 {offsets = [0, 24], sizes = [8, 8], strides = [1, 1]} : vector<8x32xf32> to vector<8x8xf32>
    %244 = vector.extract_strided_slice %232 {offsets = [0, 24], sizes = [8, 8], strides = [1, 1]} : vector<8x32xf32> to vector<8x8xf32>
    %cst_50 = arith.constant dense<0.000000e+00> : vector<8x8xf32>
    %245 = tpu.matmul %243, %244, %cst_50 {dimension_numbers = #tpu.dot_dimension_numbers<[1], [1], [0], [0], [0, 0, 1, 0], [], []>} : vector<8x8xf32>, vector<8x8xf32>, vector<8x8xf32> -> vector<8x8xf32>
    %246 = tpu.concatenate %236, %239, %242, %245 in 0 : vector<8x8xf32>, vector<8x8xf32>, vector<8x8xf32>, vector<8x8xf32> -> vector<32x8xf32>
    %cst_51 = arith.constant 0.353553385 : f32
    %247 = vector.broadcast %cst_51 : f32 to vector<32x8xf32>
    %248 = arith.mulf %246, %247 : vector<32x8xf32>
    %cst_52 = arith.constant dense<0xFF800000> : vector<32xf32>
    %249 = vector.multi_reduction <maximumf>, %248, %cst_52 [1] : vector<32x8xf32> to vector<32xf32>
    %250 = vector.shape_cast %249 : vector<32xf32> to vector<32x1xf32>
    %251 = vector.broadcast %250 : vector<32x1xf32> to vector<32x8xf32>
    %252 = arith.subf %248, %251 : vector<32x8xf32>
    %253 = math.exp %252 : vector<32x8xf32>
    %cst_53 = arith.constant dense<0.000000e+00> : vector<32xf32>
    %254 = vector.multi_reduction <add>, %253, %cst_53 [1] : vector<32x8xf32> to vector<32xf32>
    %255 = vector.shape_cast %254 : vector<32xf32> to vector<32x1xf32>
    %256 = tpu.reciprocal %255 {approx = true} : vector<32x1xf32> -> vector<32x1xf32>
    %257 = vector.broadcast %256 : vector<32x1xf32> to vector<32x8xf32>
    %258 = arith.mulf %253, %257 : vector<32x8xf32>
    %259 = vector.extract_strided_slice %258 {offsets = [0, 0], sizes = [8, 8], strides = [1, 1]} : vector<32x8xf32> to vector<8x8xf32>
    %260 = vector.extract_strided_slice %258 {offsets = [8, 0], sizes = [8, 8], strides = [1, 1]} : vector<32x8xf32> to vector<8x8xf32>
    %261 = vector.extract_strided_slice %258 {offsets = [16, 0], sizes = [8, 8], strides = [1, 1]} : vector<32x8xf32> to vector<8x8xf32>
    %262 = vector.extract_strided_slice %258 {offsets = [24, 0], sizes = [8, 8], strides = [1, 1]} : vector<32x8xf32> to vector<8x8xf32>
    %263 = vector.extract_strided_slice %33 {offsets = [0, 0], sizes = [1, 1], strides = [1, 1]} : vector<4x4xf32> to vector<1x1xf32>
    %264 = vector.broadcast %263 : vector<1x1xf32> to vector<8x8xf32>
    %265 = arith.mulf %259, %264 : vector<8x8xf32>
    %266 = vector.extract_strided_slice %33 {offsets = [1, 0], sizes = [1, 1], strides = [1, 1]} : vector<4x4xf32> to vector<1x1xf32>
    %267 = vector.broadcast %266 : vector<1x1xf32> to vector<8x8xf32>
    %268 = arith.mulf %260, %267 : vector<8x8xf32>
    %269 = arith.addf %265, %268 : vector<8x8xf32>
    %270 = vector.extract_strided_slice %33 {offsets = [2, 0], sizes = [1, 1], strides = [1, 1]} : vector<4x4xf32> to vector<1x1xf32>
    %271 = vector.broadcast %270 : vector<1x1xf32> to vector<8x8xf32>
    %272 = arith.mulf %261, %271 : vector<8x8xf32>
    %273 = arith.addf %269, %272 : vector<8x8xf32>
    %274 = vector.extract_strided_slice %33 {offsets = [3, 0], sizes = [1, 1], strides = [1, 1]} : vector<4x4xf32> to vector<1x1xf32>
    %275 = vector.broadcast %274 : vector<1x1xf32> to vector<8x8xf32>
    %276 = arith.mulf %262, %275 : vector<8x8xf32>
    %277 = arith.addf %273, %276 : vector<8x8xf32>
    %278 = vector.extract_strided_slice %33 {offsets = [0, 1], sizes = [1, 1], strides = [1, 1]} : vector<4x4xf32> to vector<1x1xf32>
    %279 = vector.broadcast %278 : vector<1x1xf32> to vector<8x8xf32>
    %280 = arith.mulf %259, %279 : vector<8x8xf32>
    %281 = vector.extract_strided_slice %33 {offsets = [1, 1], sizes = [1, 1], strides = [1, 1]} : vector<4x4xf32> to vector<1x1xf32>
    %282 = vector.broadcast %281 : vector<1x1xf32> to vector<8x8xf32>
    %283 = arith.mulf %260, %282 : vector<8x8xf32>
    %284 = arith.addf %280, %283 : vector<8x8xf32>
    %285 = vector.extract_strided_slice %33 {offsets = [2, 1], sizes = [1, 1], strides = [1, 1]} : vector<4x4xf32> to vector<1x1xf32>
    %286 = vector.broadcast %285 : vector<1x1xf32> to vector<8x8xf32>
    %287 = arith.mulf %261, %286 : vector<8x8xf32>
    %288 = arith.addf %284, %287 : vector<8x8xf32>
    %289 = vector.extract_strided_slice %33 {offsets = [3, 1], sizes = [1, 1], strides = [1, 1]} : vector<4x4xf32> to vector<1x1xf32>
    %290 = vector.broadcast %289 : vector<1x1xf32> to vector<8x8xf32>
    %291 = arith.mulf %262, %290 : vector<8x8xf32>
    %292 = arith.addf %288, %291 : vector<8x8xf32>
    %293 = vector.extract_strided_slice %33 {offsets = [0, 2], sizes = [1, 1], strides = [1, 1]} : vector<4x4xf32> to vector<1x1xf32>
    %294 = vector.broadcast %293 : vector<1x1xf32> to vector<8x8xf32>
    %295 = arith.mulf %259, %294 : vector<8x8xf32>
    %296 = vector.extract_strided_slice %33 {offsets = [1, 2], sizes = [1, 1], strides = [1, 1]} : vector<4x4xf32> to vector<1x1xf32>
    %297 = vector.broadcast %296 : vector<1x1xf32> to vector<8x8xf32>
    %298 = arith.mulf %260, %297 : vector<8x8xf32>
    %299 = arith.addf %295, %298 : vector<8x8xf32>
    %300 = vector.extract_strided_slice %33 {offsets = [2, 2], sizes = [1, 1], strides = [1, 1]} : vector<4x4xf32> to vector<1x1xf32>
    %301 = vector.broadcast %300 : vector<1x1xf32> to vector<8x8xf32>
    %302 = arith.mulf %261, %301 : vector<8x8xf32>
    %303 = arith.addf %299, %302 : vector<8x8xf32>
    %304 = vector.extract_strided_slice %33 {offsets = [3, 2], sizes = [1, 1], strides = [1, 1]} : vector<4x4xf32> to vector<1x1xf32>
    %305 = vector.broadcast %304 : vector<1x1xf32> to vector<8x8xf32>
    %306 = arith.mulf %262, %305 : vector<8x8xf32>
    %307 = arith.addf %303, %306 : vector<8x8xf32>
    %308 = vector.extract_strided_slice %33 {offsets = [0, 3], sizes = [1, 1], strides = [1, 1]} : vector<4x4xf32> to vector<1x1xf32>
    %309 = vector.broadcast %308 : vector<1x1xf32> to vector<8x8xf32>
    %310 = arith.mulf %259, %309 : vector<8x8xf32>
    %311 = vector.extract_strided_slice %33 {offsets = [1, 3], sizes = [1, 1], strides = [1, 1]} : vector<4x4xf32> to vector<1x1xf32>
    %312 = vector.broadcast %311 : vector<1x1xf32> to vector<8x8xf32>
    %313 = arith.mulf %260, %312 : vector<8x8xf32>
    %314 = arith.addf %310, %313 : vector<8x8xf32>
    %315 = vector.extract_strided_slice %33 {offsets = [2, 3], sizes = [1, 1], strides = [1, 1]} : vector<4x4xf32> to vector<1x1xf32>
    %316 = vector.broadcast %315 : vector<1x1xf32> to vector<8x8xf32>
    %317 = arith.mulf %261, %316 : vector<8x8xf32>
    %318 = arith.addf %314, %317 : vector<8x8xf32>
    %319 = vector.extract_strided_slice %33 {offsets = [3, 3], sizes = [1, 1], strides = [1, 1]} : vector<4x4xf32> to vector<1x1xf32>
    %320 = vector.broadcast %319 : vector<1x1xf32> to vector<8x8xf32>
    %321 = arith.mulf %262, %320 : vector<8x8xf32>
    %322 = arith.addf %318, %321 : vector<8x8xf32>
    %323 = arith.addf %277, %292 : vector<8x8xf32>
    %324 = arith.addf %323, %307 : vector<8x8xf32>
    %325 = arith.addf %324, %322 : vector<8x8xf32>
    %cst_54 = arith.constant 2.500000e-01 : f32
    %326 = vector.broadcast %cst_54 : f32 to vector<8x8xf32>
    %327 = arith.mulf %325, %326 : vector<8x8xf32>
    %328 = arith.subf %277, %327 : vector<8x8xf32>
    %329 = arith.subf %277, %327 : vector<8x8xf32>
    %330 = arith.mulf %328, %329 : vector<8x8xf32>
    %331 = arith.subf %292, %327 : vector<8x8xf32>
    %332 = arith.subf %292, %327 : vector<8x8xf32>
    %333 = arith.mulf %331, %332 : vector<8x8xf32>
    %334 = arith.addf %330, %333 : vector<8x8xf32>
    %335 = arith.subf %307, %327 : vector<8x8xf32>
    %336 = arith.subf %307, %327 : vector<8x8xf32>
    %337 = arith.mulf %335, %336 : vector<8x8xf32>
    %338 = arith.addf %334, %337 : vector<8x8xf32>
    %339 = arith.subf %322, %327 : vector<8x8xf32>
    %340 = arith.subf %322, %327 : vector<8x8xf32>
    %341 = arith.mulf %339, %340 : vector<8x8xf32>
    %342 = arith.addf %338, %341 : vector<8x8xf32>
    %cst_55 = arith.constant 2.500000e-01 : f32
    %343 = vector.broadcast %cst_55 : f32 to vector<8x8xf32>
    %344 = arith.mulf %342, %343 : vector<8x8xf32>
    %cst_56 = arith.constant 9.99999974E-6 : f32
    %345 = vector.broadcast %cst_56 : f32 to vector<8x8xf32>
    %346 = arith.addf %344, %345 : vector<8x8xf32>
    %347 = math.rsqrt %346 : vector<8x8xf32>
    %348 = arith.subf %277, %327 : vector<8x8xf32>
    %349 = arith.mulf %348, %347 : vector<8x8xf32>
    %350 = vector.extract_strided_slice %35 {offsets = [0, 0], sizes = [1, 1], strides = [1, 1]} : vector<1x4xf32> to vector<1x1xf32>
    %351 = vector.broadcast %350 : vector<1x1xf32> to vector<8x8xf32>
    %352 = arith.mulf %349, %351 : vector<8x8xf32>
    %353 = vector.extract_strided_slice %37 {offsets = [0, 0], sizes = [1, 1], strides = [1, 1]} : vector<1x4xf32> to vector<1x1xf32>
    %354 = vector.broadcast %353 : vector<1x1xf32> to vector<8x8xf32>
    %355 = arith.addf %352, %354 : vector<8x8xf32>
    %c0_i32_57 = arith.constant 0 : i32
    %356 = vector.broadcast %c0_i32_57 : i32 to vector<1x32xi32>
    %357 = arith.cmpi sge, %38, %356 : vector<1x32xi32>
    %c8_i32_58 = arith.constant 8 : i32
    %358 = vector.broadcast %c8_i32_58 : i32 to vector<1x32xi32>
    %359 = arith.cmpi slt, %38, %358 : vector<1x32xi32>
    %360 = arith.andi %357, %359 : vector<1x32xi1>
    %cst_59 = arith.constant 0.000000e+00 : f32
    %361 = vector.shape_cast %360 : vector<1x32xi1> to vector<1x32xi1>
    %362 = vector.broadcast %361 : vector<1x32xi1> to vector<8x32xi1>
    %363 = vector.broadcast %cst_59 : f32 to vector<8x32xf32>
    %364 = arith.select %362, %233, %363 : vector<8x32xi1>, vector<8x32xf32>
    %cst_60 = arith.constant dense<0.000000e+00> : vector<8x32xf32>
    %365 = tpu.matmul %355, %364, %cst_60 {dimension_numbers = #tpu.dot_dimension_numbers<[1], [0], [0], [1], [0, 0, 1, 1], [], []>} : vector<8x8xf32>, vector<8x32xf32>, vector<8x32xf32> -> vector<8x32xf32>
    %366 = arith.subf %292, %327 : vector<8x8xf32>
    %367 = arith.mulf %366, %347 : vector<8x8xf32>
    %368 = vector.extract_strided_slice %35 {offsets = [0, 1], sizes = [1, 1], strides = [1, 1]} : vector<1x4xf32> to vector<1x1xf32>
    %369 = vector.broadcast %368 : vector<1x1xf32> to vector<8x8xf32>
    %370 = arith.mulf %367, %369 : vector<8x8xf32>
    %371 = vector.extract_strided_slice %37 {offsets = [0, 1], sizes = [1, 1], strides = [1, 1]} : vector<1x4xf32> to vector<1x1xf32>
    %372 = vector.broadcast %371 : vector<1x1xf32> to vector<8x8xf32>
    %373 = arith.addf %370, %372 : vector<8x8xf32>
    %c8_i32_61 = arith.constant 8 : i32
    %374 = vector.broadcast %c8_i32_61 : i32 to vector<1x32xi32>
    %375 = arith.cmpi sge, %38, %374 : vector<1x32xi32>
    %c16_i32_62 = arith.constant 16 : i32
    %376 = vector.broadcast %c16_i32_62 : i32 to vector<1x32xi32>
    %377 = arith.cmpi slt, %38, %376 : vector<1x32xi32>
    %378 = arith.andi %375, %377 : vector<1x32xi1>
    %cst_63 = arith.constant 0.000000e+00 : f32
    %379 = vector.shape_cast %378 : vector<1x32xi1> to vector<1x32xi1>
    %380 = vector.broadcast %379 : vector<1x32xi1> to vector<8x32xi1>
    %381 = vector.broadcast %cst_63 : f32 to vector<8x32xf32>
    %382 = arith.select %380, %233, %381 : vector<8x32xi1>, vector<8x32xf32>
    %cst_64 = arith.constant dense<0.000000e+00> : vector<8x32xf32>
    %383 = tpu.matmul %373, %382, %cst_64 {dimension_numbers = #tpu.dot_dimension_numbers<[1], [0], [0], [1], [0, 0, 1, 1], [], []>} : vector<8x8xf32>, vector<8x32xf32>, vector<8x32xf32> -> vector<8x32xf32>
    %384 = arith.addf %365, %383 : vector<8x32xf32>
    %385 = arith.subf %307, %327 : vector<8x8xf32>
    %386 = arith.mulf %385, %347 : vector<8x8xf32>
    %387 = vector.extract_strided_slice %35 {offsets = [0, 2], sizes = [1, 1], strides = [1, 1]} : vector<1x4xf32> to vector<1x1xf32>
    %388 = vector.broadcast %387 : vector<1x1xf32> to vector<8x8xf32>
    %389 = arith.mulf %386, %388 : vector<8x8xf32>
    %390 = vector.extract_strided_slice %37 {offsets = [0, 2], sizes = [1, 1], strides = [1, 1]} : vector<1x4xf32> to vector<1x1xf32>
    %391 = vector.broadcast %390 : vector<1x1xf32> to vector<8x8xf32>
    %392 = arith.addf %389, %391 : vector<8x8xf32>
    %c16_i32_65 = arith.constant 16 : i32
    %393 = vector.broadcast %c16_i32_65 : i32 to vector<1x32xi32>
    %394 = arith.cmpi sge, %38, %393 : vector<1x32xi32>
    %c24_i32_66 = arith.constant 24 : i32
    %395 = vector.broadcast %c24_i32_66 : i32 to vector<1x32xi32>
    %396 = arith.cmpi slt, %38, %395 : vector<1x32xi32>
    %397 = arith.andi %394, %396 : vector<1x32xi1>
    %cst_67 = arith.constant 0.000000e+00 : f32
    %398 = vector.shape_cast %397 : vector<1x32xi1> to vector<1x32xi1>
    %399 = vector.broadcast %398 : vector<1x32xi1> to vector<8x32xi1>
    %400 = vector.broadcast %cst_67 : f32 to vector<8x32xf32>
    %401 = arith.select %399, %233, %400 : vector<8x32xi1>, vector<8x32xf32>
    %cst_68 = arith.constant dense<0.000000e+00> : vector<8x32xf32>
    %402 = tpu.matmul %392, %401, %cst_68 {dimension_numbers = #tpu.dot_dimension_numbers<[1], [0], [0], [1], [0, 0, 1, 1], [], []>} : vector<8x8xf32>, vector<8x32xf32>, vector<8x32xf32> -> vector<8x32xf32>
    %403 = arith.addf %384, %402 : vector<8x32xf32>
    %404 = arith.subf %322, %327 : vector<8x8xf32>
    %405 = arith.mulf %404, %347 : vector<8x8xf32>
    %406 = vector.extract_strided_slice %35 {offsets = [0, 3], sizes = [1, 1], strides = [1, 1]} : vector<1x4xf32> to vector<1x1xf32>
    %407 = vector.broadcast %406 : vector<1x1xf32> to vector<8x8xf32>
    %408 = arith.mulf %405, %407 : vector<8x8xf32>
    %409 = vector.extract_strided_slice %37 {offsets = [0, 3], sizes = [1, 1], strides = [1, 1]} : vector<1x4xf32> to vector<1x1xf32>
    %410 = vector.broadcast %409 : vector<1x1xf32> to vector<8x8xf32>
    %411 = arith.addf %408, %410 : vector<8x8xf32>
    %c24_i32_69 = arith.constant 24 : i32
    %412 = vector.broadcast %c24_i32_69 : i32 to vector<1x32xi32>
    %413 = arith.cmpi sge, %38, %412 : vector<1x32xi32>
    %c32_i32_70 = arith.constant 32 : i32
    %414 = vector.broadcast %c32_i32_70 : i32 to vector<1x32xi32>
    %415 = arith.cmpi slt, %38, %414 : vector<1x32xi32>
    %416 = arith.andi %413, %415 : vector<1x32xi1>
    %cst_71 = arith.constant 0.000000e+00 : f32
    %417 = vector.shape_cast %416 : vector<1x32xi1> to vector<1x32xi1>
    %418 = vector.broadcast %417 : vector<1x32xi1> to vector<8x32xi1>
    %419 = vector.broadcast %cst_71 : f32 to vector<8x32xf32>
    %420 = arith.select %418, %233, %419 : vector<8x32xi1>, vector<8x32xf32>
    %cst_72 = arith.constant dense<0.000000e+00> : vector<8x32xf32>
    %421 = tpu.matmul %411, %420, %cst_72 {dimension_numbers = #tpu.dot_dimension_numbers<[1], [0], [0], [1], [0, 0, 1, 1], [], []>} : vector<8x8xf32>, vector<8x32xf32>, vector<8x32xf32> -> vector<8x32xf32>
    %422 = arith.addf %403, %421 : vector<8x32xf32>
    %423 = tpu.concatenate %230, %422 in 0 : vector<8x32xf32>, vector<8x32xf32> -> vector<16x32xf32>
    %424 = arith.truncf %423 : vector<16x32xf32> to vector<16x32xbf16>
    %c0_73 = arith.constant 0 : index
    %c0_74 = arith.constant 0 : index
    %c0_75 = arith.constant 0 : index
    %425 = vector.load %arg8[%c0_73, %c0_74, %c0_75] : memref<1x32x32xbf16, #tpu.memory_space<vmem>>, vector<1x32x32xbf16>
    %426 = vector.shape_cast %425 : vector<1x32x32xbf16> to vector<32x32xbf16>
    %cst_76 = arith.constant dense<0.000000e+00> : vector<16x32xf32>
    %427 = tpu.matmul %424, %426, %cst_76 {dimension_numbers = #tpu.dot_dimension_numbers<[1], [0], [0], [1], [0, 0, 1, 1], [], []>} : vector<16x32xbf16>, vector<32x32xbf16>, vector<16x32xf32> -> vector<16x32xf32>
    %428 = arith.addf %3, %427 : vector<16x32xf32>
    %c0_77 = arith.constant 0 : index
    %c0_78 = arith.constant 0 : index
    %c0_79 = arith.constant 0 : index
    %429 = vector.load %arg9[%c0_77, %c0_78, %c0_79] : memref<1x1x32xf32, #tpu.memory_space<vmem>>, vector<1x1x32xf32>
    %430 = vector.shape_cast %429 : vector<1x1x32xf32> to vector<1x32xf32>
    %431 = vector.broadcast %430 : vector<1x32xf32> to vector<16x32xf32>
    %432 = arith.addf %428, %431 : vector<16x32xf32>
    %c0_80 = arith.constant 0 : index
    %c0_81 = arith.constant 0 : index
    %c0_82 = arith.constant 0 : index
    %433 = vector.load %arg10[%c0_80, %c0_81, %c0_82] : memref<1x1x32xf32, #tpu.memory_space<vmem>>, vector<1x1x32xf32>
    %434 = vector.shape_cast %433 : vector<1x1x32xf32> to vector<1x32xf32>
    %c0_83 = arith.constant 0 : index
    %c0_84 = arith.constant 0 : index
    %c0_85 = arith.constant 0 : index
    %435 = vector.load %arg11[%c0_83, %c0_84, %c0_85] : memref<1x1x32xf32, #tpu.memory_space<vmem>>, vector<1x1x32xf32>
    %436 = vector.shape_cast %435 : vector<1x1x32xf32> to vector<1x32xf32>
    %cst_86 = arith.constant dense<0.000000e+00> : vector<16xf32>
    %437 = vector.multi_reduction <add>, %432, %cst_86 [1] : vector<16x32xf32> to vector<16xf32>
    %438 = vector.shape_cast %437 : vector<16xf32> to vector<16x1xf32>
    %cst_87 = arith.constant 3.200000e+01 : f32
    %439 = vector.broadcast %cst_87 : f32 to vector<16x1xf32>
    %440 = arith.divf %438, %439 : vector<16x1xf32>
    %441 = vector.broadcast %440 : vector<16x1xf32> to vector<16x32xf32>
    %442 = arith.subf %432, %441 : vector<16x32xf32>
    %443 = arith.mulf %442, %442 : vector<16x32xf32>
    %cst_88 = arith.constant dense<0.000000e+00> : vector<16xf32>
    %444 = vector.multi_reduction <add>, %443, %cst_88 [1] : vector<16x32xf32> to vector<16xf32>
    %445 = vector.shape_cast %444 : vector<16xf32> to vector<16x1xf32>
    %cst_89 = arith.constant 3.200000e+01 : f32
    %446 = vector.broadcast %cst_89 : f32 to vector<16x1xf32>
    %447 = arith.divf %445, %446 : vector<16x1xf32>
    %cst_90 = arith.constant 9.99999974E-6 : f32
    %448 = vector.broadcast %cst_90 : f32 to vector<16x1xf32>
    %449 = arith.addf %447, %448 : vector<16x1xf32>
    %450 = math.rsqrt %449 : vector<16x1xf32>
    %451 = vector.broadcast %450 : vector<16x1xf32> to vector<16x32xf32>
    %452 = arith.mulf %442, %451 : vector<16x32xf32>
    %453 = vector.broadcast %434 : vector<1x32xf32> to vector<16x32xf32>
    %454 = arith.mulf %452, %453 : vector<16x32xf32>
    %455 = vector.broadcast %436 : vector<1x32xf32> to vector<16x32xf32>
    %456 = arith.addf %454, %455 : vector<16x32xf32>
    %457 = arith.truncf %456 : vector<16x32xf32> to vector<16x32xbf16>
    %c0_91 = arith.constant 0 : index
    %c0_92 = arith.constant 0 : index
    %c0_93 = arith.constant 0 : index
    %458 = vector.load %arg12[%c0_91, %c0_92, %c0_93] : memref<1x32x64xbf16, #tpu.memory_space<vmem>>, vector<1x32x64xbf16>
    %459 = vector.shape_cast %458 : vector<1x32x64xbf16> to vector<32x64xbf16>
    %cst_94 = arith.constant dense<0.000000e+00> : vector<16x64xf32>
    %460 = tpu.matmul %457, %459, %cst_94 {dimension_numbers = #tpu.dot_dimension_numbers<[1], [0], [0], [1], [0, 0, 1, 1], [], []>} : vector<16x32xbf16>, vector<32x64xbf16>, vector<16x64xf32> -> vector<16x64xf32>
    %c0_95 = arith.constant 0 : index
    %c0_96 = arith.constant 0 : index
    %c0_97 = arith.constant 0 : index
    %461 = vector.load %arg13[%c0_95, %c0_96, %c0_97] : memref<1x1x64xf32, #tpu.memory_space<vmem>>, vector<1x1x64xf32>
    %462 = vector.shape_cast %461 : vector<1x1x64xf32> to vector<1x64xf32>
    %463 = vector.broadcast %462 : vector<1x64xf32> to vector<16x64xf32>
    %464 = arith.addf %460, %463 : vector<16x64xf32>
    %cst_98 = arith.constant 5.000000e-01 : f32
    %465 = vector.broadcast %cst_98 : f32 to vector<16x64xf32>
    %466 = arith.mulf %465, %464 : vector<16x64xf32>
    %cst_99 = arith.constant 4.471500e-02 : f32
    %467 = vector.broadcast %cst_99 : f32 to vector<16x64xf32>
    %468 = arith.mulf %467, %464 : vector<16x64xf32>
    %469 = arith.mulf %468, %464 : vector<16x64xf32>
    %470 = arith.mulf %469, %464 : vector<16x64xf32>
    %471 = arith.addf %464, %470 : vector<16x64xf32>
    %cst_100 = arith.constant 0.797884583 : f32
    %472 = vector.broadcast %cst_100 : f32 to vector<16x64xf32>
    %473 = arith.mulf %472, %471 : vector<16x64xf32>
    %474 = math.tanh %473 : vector<16x64xf32>
    %cst_101 = arith.constant 1.000000e+00 : f32
    %475 = vector.broadcast %cst_101 : f32 to vector<16x64xf32>
    %476 = arith.addf %475, %474 : vector<16x64xf32>
    %477 = arith.mulf %466, %476 : vector<16x64xf32>
    %478 = arith.truncf %477 : vector<16x64xf32> to vector<16x64xbf16>
    %c0_102 = arith.constant 0 : index
    %c0_103 = arith.constant 0 : index
    %c0_104 = arith.constant 0 : index
    %479 = vector.load %arg14[%c0_102, %c0_103, %c0_104] : memref<1x64x32xbf16, #tpu.memory_space<vmem>>, vector<1x64x32xbf16>
    %480 = vector.shape_cast %479 : vector<1x64x32xbf16> to vector<64x32xbf16>
    %cst_105 = arith.constant dense<0.000000e+00> : vector<16x32xf32>
    %481 = tpu.matmul %478, %480, %cst_105 {dimension_numbers = #tpu.dot_dimension_numbers<[1], [0], [0], [1], [0, 0, 1, 1], [], []>} : vector<16x64xbf16>, vector<64x32xbf16>, vector<16x32xf32> -> vector<16x32xf32>
    %482 = arith.addf %432, %481 : vector<16x32xf32>
    %c0_106 = arith.constant 0 : index
    %c0_107 = arith.constant 0 : index
    %c0_108 = arith.constant 0 : index
    %483 = vector.load %arg15[%c0_106, %c0_107, %c0_108] : memref<1x1x32xf32, #tpu.memory_space<vmem>>, vector<1x1x32xf32>
    %484 = vector.shape_cast %483 : vector<1x1x32xf32> to vector<1x32xf32>
    %485 = vector.broadcast %484 : vector<1x32xf32> to vector<16x32xf32>
    %486 = arith.addf %482, %485 : vector<16x32xf32>
    %c0_109 = arith.constant 0 : index
    %c0_110 = arith.constant 0 : index
    %487 = vector.load %arg18[%c0_109, %c0_110] : memref<16x32xf32, #tpu.memory_space<vmem>>, vector<16x32xf32>
    tpu.vector_store %arg18[%c0_109, %c0_110], %486 {strides = array<i32>} : memref<16x32xf32, #tpu.memory_space<vmem>>, vector<16x32xf32>,
    %c1_i32 = arith.constant 1 : i32
    %488 = arith.cmpi eq, %arg0, %c1_i32 : i32
    %489 = arith.extui %488 : i1 to i32
    %c0_i32_111 = arith.constant 0 : i32
    %490 = arith.cmpi ne, %489, %c0_i32_111 : i32
    scf.if %490 {
      %c0_112 = arith.constant 0 : index
      %c0_113 = arith.constant 0 : index
      %491 = vector.load %arg18[%c0_112, %c0_113] : memref<16x32xf32, #tpu.memory_space<vmem>>, vector<16x32xf32>
      %c0_114 = arith.constant 0 : index
      %c0_115 = arith.constant 0 : index
      %492 = vector.load %arg16[%c0_114, %c0_115] : memref<1x32xf32, #tpu.memory_space<vmem>>, vector<1x32xf32>
      %c0_116 = arith.constant 0 : index
      %c0_117 = arith.constant 0 : index
      %493 = vector.load %arg17[%c0_116, %c0_117] : memref<1x32xf32, #tpu.memory_space<vmem>>, vector<1x32xf32>
      %cst_118 = arith.constant dense<0.000000e+00> : vector<16xf32>
      %494 = vector.multi_reduction <add>, %491, %cst_118 [1] : vector<16x32xf32> to vector<16xf32>
      %495 = vector.shape_cast %494 : vector<16xf32> to vector<16x1xf32>
      %cst_119 = arith.constant 3.200000e+01 : f32
      %496 = vector.broadcast %cst_119 : f32 to vector<16x1xf32>
      %497 = arith.divf %495, %496 : vector<16x1xf32>
      %498 = vector.broadcast %497 : vector<16x1xf32> to vector<16x32xf32>
      %499 = arith.subf %491, %498 : vector<16x32xf32>
      %500 = arith.mulf %499, %499 : vector<16x32xf32>
      %cst_120 = arith.constant dense<0.000000e+00> : vector<16xf32>
      %501 = vector.multi_reduction <add>, %500, %cst_120 [1] : vector<16x32xf32> to vector<16xf32>
      %502 = vector.shape_cast %501 : vector<16xf32> to vector<16x1xf32>
      %cst_121 = arith.constant 3.200000e+01 : f32
      %503 = vector.broadcast %cst_121 : f32 to vector<16x1xf32>
      %504 = arith.divf %502, %503 : vector<16x1xf32>
      %cst_122 = arith.constant 9.99999974E-6 : f32
      %505 = vector.broadcast %cst_122 : f32 to vector<16x1xf32>
      %506 = arith.addf %504, %505 : vector<16x1xf32>
      %507 = math.rsqrt %506 : vector<16x1xf32>
      %508 = vector.broadcast %507 : vector<16x1xf32> to vector<16x32xf32>
      %509 = arith.mulf %499, %508 : vector<16x32xf32>
      %510 = vector.broadcast %492 : vector<1x32xf32> to vector<16x32xf32>
      %511 = arith.mulf %509, %510 : vector<16x32xf32>
      %512 = vector.broadcast %493 : vector<1x32xf32> to vector<16x32xf32>
      %513 = arith.addf %511, %512 : vector<16x32xf32>
      %c0_123 = arith.constant 0 : index
      %c0_124 = arith.constant 0 : index
      %514 = vector.load %arg18[%c0_123, %c0_124] : memref<16x32xf32, #tpu.memory_space<vmem>>, vector<16x32xf32>
      tpu.vector_store %arg18[%c0_123, %c0_124], %513 {strides = array<i32>} : memref<16x32xf32, #tpu.memory_space<vmem>>, vector<16x32xf32>,
    } else {
    }
    return
  }
  func.func @transform_0(%arg0: i32) -> (i32, i32) {
    %c0_i32 = arith.constant 0 : i32
    %c0_i32_0 = arith.constant 0 : i32
    %c0_i32_1 = arith.constant 0 : i32
    return %c0_i32, %c0_i32_0 : i32, i32
  }
  func.func @transform_1(%arg0: i32) -> (i32, i32, i32) {
    %c0_i32 = arith.constant 0 : i32
    %c0_i32_0 = arith.constant 0 : i32
    %c0_i32_1 = arith.constant 0 : i32
    return %arg0, %c0_i32, %c0_i32_0 : i32, i32, i32
  }
  func.func @transform_2(%arg0: i32) -> (i32, i32, i32) {
    %c0_i32 = arith.constant 0 : i32
    %c0_i32_0 = arith.constant 0 : i32
    %c0_i32_1 = arith.constant 0 : i32
    return %arg0, %c0_i32, %c0_i32_0 : i32, i32, i32
  }
  func.func @transform_3(%arg0: i32) -> (i32, i32, i32) {
    %c0_i32 = arith.constant 0 : i32
    %c0_i32_0 = arith.constant 0 : i32
    %c0_i32_1 = arith.constant 0 : i32
    return %arg0, %c0_i32, %c0_i32_0 : i32, i32, i32
  }
  func.func @transform_4(%arg0: i32) -> (i32, i32, i32) {
    %c0_i32 = arith.constant 0 : i32
    %c0_i32_0 = arith.constant 0 : i32
    %c0_i32_1 = arith.constant 0 : i32
    return %arg0, %c0_i32, %c0_i32_0 : i32, i32, i32
  }
  func.func @transform_5(%arg0: i32) -> (i32, i32, i32) {
    %c0_i32 = arith.constant 0 : i32
    %c0_i32_0 = arith.constant 0 : i32
    %c0_i32_1 = arith.constant 0 : i32
    return %arg0, %c0_i32, %c0_i32_0 : i32, i32, i32
  }
  func.func @transform_6(%arg0: i32) -> (i32, i32, i32) {
    %c0_i32 = arith.constant 0 : i32
    %c0_i32_0 = arith.constant 0 : i32
    %c0_i32_1 = arith.constant 0 : i32
    return %arg0, %c0_i32, %c0_i32_0 : i32, i32, i32
  }
  func.func @transform_7(%arg0: i32) -> (i32, i32, i32) {
    %c0_i32 = arith.constant 0 : i32
    %c0_i32_0 = arith.constant 0 : i32
    %c0_i32_1 = arith.constant 0 : i32
    return %arg0, %c0_i32, %c0_i32_0 : i32, i32, i32
  }
  func.func @transform_8(%arg0: i32) -> (i32, i32, i32) {
    %c0_i32 = arith.constant 0 : i32
    %c0_i32_0 = arith.constant 0 : i32
    %c0_i32_1 = arith.constant 0 : i32
    return %arg0, %c0_i32, %c0_i32_0 : i32, i32, i32
  }
  func.func @transform_9(%arg0: i32) -> (i32, i32, i32) {
    %c0_i32 = arith.constant 0 : i32
    %c0_i32_0 = arith.constant 0 : i32
    %c0_i32_1 = arith.constant 0 : i32
    return %arg0, %c0_i32, %c0_i32_0 : i32, i32, i32
  }
  func.func @transform_10(%arg0: i32) -> (i32, i32, i32) {
    %c0_i32 = arith.constant 0 : i32
    %c0_i32_0 = arith.constant 0 : i32
    %c0_i32_1 = arith.constant 0 : i32
    return %arg0, %c0_i32, %c0_i32_0 : i32, i32, i32
  }
  func.func @transform_11(%arg0: i32) -> (i32, i32, i32) {
    %c0_i32 = arith.constant 0 : i32
    %c0_i32_0 = arith.constant 0 : i32
    %c0_i32_1 = arith.constant 0 : i32
    return %arg0, %c0_i32, %c0_i32_0 : i32, i32, i32
  }
  func.func @transform_12(%arg0: i32) -> (i32, i32, i32) {
    %c0_i32 = arith.constant 0 : i32
    %c0_i32_0 = arith.constant 0 : i32
    %c0_i32_1 = arith.constant 0 : i32
    return %arg0, %c0_i32, %c0_i32_0 : i32, i32, i32
  }
  func.func @transform_13(%arg0: i32) -> (i32, i32, i32) {
    %c0_i32 = arith.constant 0 : i32
    %c0_i32_0 = arith.constant 0 : i32
    %c0_i32_1 = arith.constant 0 : i32
    return %arg0, %c0_i32, %c0_i32_0 : i32, i32, i32
  }
  func.func @transform_14(%arg0: i32) -> (i32, i32, i32) {
    %c0_i32 = arith.constant 0 : i32
    %c0_i32_0 = arith.constant 0 : i32
    %c0_i32_1 = arith.constant 0 : i32
    return %arg0, %c0_i32, %c0_i32_0 : i32, i32, i32
  }
  func.func @transform_15(%arg0: i32) -> (i32, i32) {
    %c0_i32 = arith.constant 0 : i32
    %c0_i32_0 = arith.constant 0 : i32
    %c0_i32_1 = arith.constant 0 : i32
    return %c0_i32, %c0_i32_0 : i32, i32
  }
  func.func @transform_16(%arg0: i32) -> (i32, i32) {
    %c0_i32 = arith.constant 0 : i32
    %c0_i32_0 = arith.constant 0 : i32
    %c0_i32_1 = arith.constant 0 : i32
    return %c0_i32, %c0_i32_0 : i32, i32
  }
  func.func @transform_17(%arg0: i32) -> (i32, i32) {
    %c0_i32 = arith.constant 0 : i32
    %c0_i32_0 = arith.constant 0 : i32
    %c0_i32_1 = arith.constant 0 : i32
    return %c0_i32, %c0_i32_0 : i32, i32
  }
}

</mosaic_0001>

<llo_original>
// kernel: tpu_custom_call.1
$region0: #{tpu_custom_call.1}
  #allocation0 [shape = 'u32[]', space=smem, size = 0x4, offset = 0x4, fixed_abs, tag = 'smem constant byte address 0x4 - core index']
  #allocation1 [shape = 'u32[144,128]{1,0:T(1,128)}', space=vmem, size = 0x12000, scoped, tag = 'internal scratch']
  %s0 = inlined_call_operand.hbm [shape: f32[16,32], index: 0, kind: input, shape index: {}]
  %s1 = inlined_call_operand.vmem [shape: f32[2,1,32], index: 1, kind: input, shape index: {}]
  %s2 = inlined_call_operand.hbm [shape: f32[2,1,32], index: 2, kind: input, shape index: {}]
  %s3 = inlined_call_operand.vmem [shape: bf16[2,32,96], index: 3, kind: input, shape index: {}]
  %s4 = inlined_call_operand.vmem [shape: f32[2,4,4], index: 4, kind: input, shape index: {}]
  %s5 = inlined_call_operand.vmem [shape: f32[2,1,4], index: 5, kind: input, shape index: {}]
  %s6 = inlined_call_operand.vmem [shape: f32[2,1,4], index: 6, kind: input, shape index: {}]
  %s7 = inlined_call_operand.vmem [shape: bf16[2,32,32], index: 7, kind: input, shape index: {}]
  %s8 = inlined_call_operand.vmem [shape: f32[2,1,32], index: 8, kind: input, shape index: {}]
  %s9 = inlined_call_operand.hbm [shape: f32[2,1,32], index: 9, kind: input, shape index: {}]
  %s10 = inlined_call_operand.hbm [shape: f32[2,1,32], index: 10, kind: input, shape index: {}]
  %s11 = inlined_call_operand.vmem [shape: bf16[2,32,64], index: 11, kind: input, shape index: {}]
  %s12 = inlined_call_operand.hbm [shape: f32[2,1,64], index: 12, kind: input, shape index: {}]
  %s13 = inlined_call_operand.vmem [shape: bf16[2,64,32], index: 13, kind: input, shape index: {}]
  %s14 = inlined_call_operand.vmem [shape: f32[2,1,32], index: 14, kind: input, shape index: {}]
  %s15 = inlined_call_operand.vmem [shape: f32[1,32], index: 15, kind: input, shape index: {}]
  %s16 = inlined_call_operand.vmem [shape: f32[1,32], index: 16, kind: input, shape index: {}]
  %s17 = inlined_call_operand.hbm [shape: f32[16,32], index: 17, kind: output, shape index: {}]
  %s18 = sld [smem:[#allocation0]]
  $region129: #{tpu_custom_call.1} parent=0
    _
  %s20 = ssub.s32 1, %s18
  %s21 = scalar_select 0, %s20, %s18
  $region1: #{tpu_custom_call.1} parent=0
    #allocation2 [shape = 'u8[8192]{0}', space=vmem, size = 0x2000, scoped, tag = 'input window, operand 0, single buffered']
    #allocation3 [shape = 's32[2]{0}', space=sflag, size = 0x8, scoped, tag = 'scoped memory for tpu_custom_call.1']
    #allocation4 [shape = 's32[2]{0}', space=sflag, size = 0x8, scoped, tag = 'scoped memory for tpu_custom_call.1']
    #allocation5 [shape = 'u8[1024]{0}', space=vmem, size = 0x400, scoped, tag = 'input window, operand 2']
    #allocation6 [shape = 's32[2]{0}', space=sflag, size = 0x8, scoped, tag = 'scoped memory for tpu_custom_call.1']
    #allocation7 [shape = 'u8[1024]{0}', space=vmem, size = 0x400, scoped, tag = 'input window, operand 9']
    #allocation8 [shape = 'u8[1024]{0}', space=vmem, size = 0x400, scoped, tag = 'input window, operand 10']
    #allocation9 [shape = 's32[2]{0}', space=sflag, size = 0x8, scoped, tag = 'scoped memory for tpu_custom_call.1']
    #allocation10 [shape = 'u8[1024]{0}', space=vmem, size = 0x400, scoped, tag = 'input window, operand 12']
    #allocation11 [shape = 'u8[8192]{0}', space=vmem, size = 0x2000, scoped, tag = 'output window, operand 0, single buffered']
    %22 = vsyncpa [#allocation3], 0
    %23 = vsyncpa [#allocation6], 0
    %s24 = scalar_lea.sflag [#allocation6], 1
    %25 = vsyncpa %s24, 0
    %26 = vsyncpa [#allocation9], 0
    %s27 = scalar_lea.sflag [#allocation9], 1
    %28 = vsyncpa %s27, 0
    %29 = vsyncpa [#allocation4], 0
    loop: start=0, step=1, limit=4
    $region2: #{tpu_custom_call.1} parent=1 // loop_pre_header
      _
    $region3: #{tpu_custom_call.1} parent=1 // loop_header
      %s31 = sphi 0, %s35
      %p32 = scmp.ge.s32.totalorder %s31, 4
      %s39 = sphi 0, %s39
      %s41 = sphi 0, %s39
      %s42 = sphi 0, %s41
      %s56 = sphi 0, %s42
      %s62 = sphi 0, %s64
      %s65 = sphi 0, %s62
      %s66 = sphi 0, %s65
      %s82 = sphi 0, %s66
      %s88 = sphi 0, %s90
      %s91 = sphi 0, %s88
      %s92 = sphi 0, %s91
      %s108 = sphi 0, %s92
      %s114 = sphi 0, %s116
      %s117 = sphi 0, %s114
      %s118 = sphi 0, %s117
      %s134 = sphi 0, %s118
      %s140 = sphi 0, %s142
      %s143 = sphi 0, %s140
      %s144 = sphi 0, %s143
      %s160 = sphi 0, %s144
      %s166 = sphi 0, %s168
      %s169 = sphi 0, %s166
      %s170 = sphi 0, %s169
      %s186 = sphi 0, %s170
      %s192 = sphi 0, %s194
      %s195 = sphi 0, %s192
      %s196 = sphi 0, %s195
      %s212 = sphi 0, %s196
      %s218 = sphi 0, %s220
      %s221 = sphi 0, %s218
      %s222 = sphi 0, %s221
      %s238 = sphi 0, %s222
      %s244 = sphi 0, %s246
      %s247 = sphi 0, %s244
      %s248 = sphi 0, %s247
      %s264 = sphi 0, %s248
      %s270 = sphi 0, %s272
      %s273 = sphi 0, %s270
      %s274 = sphi 0, %s273
      %s290 = sphi 0, %s274
      %s296 = sphi 0, %s298
      %s299 = sphi 0, %s296
      %s300 = sphi 0, %s299
      %s316 = sphi 0, %s300
      %s322 = sphi 0, %s324
      %s325 = sphi 0, %s322
      %s326 = sphi 0, %s325
      %s342 = sphi 0, %s326
      %s348 = sphi 0, %s350
      %s351 = sphi 0, %s348
      %s352 = sphi 0, %s351
      %s368 = sphi 0, %s352
      %s374 = sphi 0, %s376
      %s377 = sphi 0, %s374
      %s378 = sphi 0, %s377
      %s394 = sphi 0, %s378
      %s400 = sphi 0, %s402
      %s403 = sphi 0, %s400
      %s404 = sphi 0, %s403
      %s420 = sphi 0, %s404
      %s424 = sphi 0, %s424
      %s426 = sphi 0, %s424
      %s427 = sphi 0, %s426
      %s441 = sphi 0, %s427
      %s445 = sphi 0, %s445
      %s447 = sphi 0, %s445
      %s448 = sphi 0, %s447
      %s462 = sphi 0, %s448
      %s466 = sphi 0, %s466
      %s468 = sphi 0, %s466
      %s469 = sphi 0, %s468
      %s483 = sphi 0, %s469
    $region4: #{tpu_custom_call.1} parent=1 // loop_header_branch
      %34 = sbr.rel (%p32) target = $region8
    $region5: #{tpu_custom_call.1} parent=1 // loop_body
      %s36 = ssub.s32 %s31, 1
      %s37 = ssub.s32 %s31, 2
      %s38 = sadd.s32 %s31, 1
      %s40 = sadd.s32 %s39, 1
      %p43 = scmp.eq.s32.totalorder %s31, 1
      %p44 = scmp.ne.s32.totalorder %s39, %s41
      %p45 = scmp.eq.s32.totalorder %s31, 0
      %p46 = por %p44, %p45
      %p47 = scmp.ne.s32.totalorder %s39, %s41
      %p48 = scmp.eq.s32.totalorder %s36, 1
      %p49 = por %p47, %p48
      %p50 = scmp.ne.s32.totalorder %s41, %s42
      %p51 = scmp.eq.s32.totalorder %s36, 0
      %p52 = por %p50, %p51
      %p53 = scmp.ne.s32.totalorder %s41, %s42
      %p54 = scmp.eq.s32.totalorder %s37, 1
      %p55 = por %p53, %p54
      %p57 = scmp.ne.s32.totalorder %s42, %s56
      %p58 = scmp.eq.s32.totalorder %s37, 0
      %p59 = por %p57, %p58
      %s60 = ssub.s32 %s31, %s38
      %p61 = scmp.eq.s32.totalorder %s60, 0
      %s63 = sadd.s32 %s62, 1
      %s64 = scalar_select %p61, %s62, %s63
      %p67 = pneg %p61
      %p68 = scmp.eq.s32.totalorder %s31, 1
      %p69 = por %p67, %p68
      %p70 = scmp.ne.s32.totalorder %s62, %s65
      %p71 = scmp.eq.s32.totalorder %s31, 0
      %p72 = por %p70, %p71
      %p73 = scmp.ne.s32.totalorder %s62, %s65
      %p74 = scmp.eq.s32.totalorder %s36, 1
      %p75 = por %p73, %p74
      %p76 = scmp.ne.s32.totalorder %s65, %s66
      %p77 = scmp.eq.s32.totalorder %s36, 0
      %p78 = por %p76, %p77
      %p79 = scmp.ne.s32.totalorder %s65, %s66
      %p80 = scmp.eq.s32.totalorder %s37, 1
      %p81 = por %p79, %p80
      %p83 = scmp.ne.s32.totalorder %s66, %s82
      %p84 = scmp.eq.s32.totalorder %s37, 0
      %p85 = por %p83, %p84
      %s86 = ssub.s32 %s31, %s38
      %p87 = scmp.eq.s32.totalorder %s86, 0
      %s89 = sadd.s32 %s88, 1
      %s90 = scalar_select %p87, %s88, %s89
      %p93 = pneg %p87
      %p94 = scmp.eq.s32.totalorder %s31, 1
      %p95 = por %p93, %p94
      %p96 = scmp.ne.s32.totalorder %s88, %s91
      %p97 = scmp.eq.s32.totalorder %s31, 0
      %p98 = por %p96, %p97
      %p99 = scmp.ne.s32.totalorder %s88, %s91
      %p100 = scmp.eq.s32.totalorder %s36, 1
      %p101 = por %p99, %p100
      %p102 = scmp.ne.s32.totalorder %s91, %s92
      %p103 = scmp.eq.s32.totalorder %s36, 0
      %p104 = por %p102, %p103
      %p105 = scmp.ne.s32.totalorder %s91, %s92
      %p106 = scmp.eq.s32.totalorder %s37, 1
      %p107 = por %p105, %p106
      %p109 = scmp.ne.s32.totalorder %s92, %s108
      %p110 = scmp.eq.s32.totalorder %s37, 0
      %p111 = por %p109, %p110
      %s112 = ssub.s32 %s31, %s38
      %p113 = scmp.eq.s32.totalorder %s112, 0
      %s115 = sadd.s32 %s114, 1
      %s116 = scalar_select %p113, %s114, %s115
      %p119 = pneg %p113
      %p120 = scmp.eq.s32.totalorder %s31, 1
      %p121 = por %p119, %p120
      %p122 = scmp.ne.s32.totalorder %s114, %s117
      %p123 = scmp.eq.s32.totalorder %s31, 0
      %p124 = por %p122, %p123
      %p125 = scmp.ne.s32.totalorder %s114, %s117
      %p126 = scmp.eq.s32.totalorder %s36, 1
      %p127 = por %p125, %p126
      %p128 = scmp.ne.s32.totalorder %s117, %s118
      %p129 = scmp.eq.s32.totalorder %s36, 0
      %p130 = por %p128, %p129
      %p131 = scmp.ne.s32.totalorder %s117, %s118
      %p132 = scmp.eq.s32.totalorder %s37, 1
      %p133 = por %p131, %p132
      %p135 = scmp.ne.s32.totalorder %s118, %s134
      %p136 = scmp.eq.s32.totalorder %s37, 0
      %p137 = por %p135, %p136
      %s138 = ssub.s32 %s31, %s38
      %p139 = scmp.eq.s32.totalorder %s138, 0
      %s141 = sadd.s32 %s140, 1
      %s142 = scalar_select %p139, %s140, %s141
      %p145 = pneg %p139
      %p146 = scmp.eq.s32.totalorder %s31, 1
      %p147 = por %p145, %p146
      %p148 = scmp.ne.s32.totalorder %s140, %s143
      %p149 = scmp.eq.s32.totalorder %s31, 0
      %p150 = por %p148, %p149
      %p151 = scmp.ne.s32.totalorder %s140, %s143
      %p152 = scmp.eq.s32.totalorder %s36, 1
      %p153 = por %p151, %p152
      %p154 = scmp.ne.s32.totalorder %s143, %s144
      %p155 = scmp.eq.s32.totalorder %s36, 0
      %p156 = por %p154, %p155
      %p157 = scmp.ne.s32.totalorder %s143, %s144
      %p158 = scmp.eq.s32.totalorder %s37, 1
      %p159 = por %p157, %p158
      %p161 = scmp.ne.s32.totalorder %s144, %s160
      %p162 = scmp.eq.s32.totalorder %s37, 0
      %p163 = por %p161, %p162
      %s164 = ssub.s32 %s31, %s38
      %p165 = scmp.eq.s32.totalorder %s164, 0
      %s167 = sadd.s32 %s166, 1
      %s168 = scalar_select %p165, %s166, %s167
      %p171 = pneg %p165
      %p172 = scmp.eq.s32.totalorder %s31, 1
      %p173 = por %p171, %p172
      %p174 = scmp.ne.s32.totalorder %s166, %s169
      %p175 = scmp.eq.s32.totalorder %s31, 0
      %p176 = por %p174, %p175
      %p177 = scmp.ne.s32.totalorder %s166, %s169
      %p178 = scmp.eq.s32.totalorder %s36, 1
      %p179 = por %p177, %p178
      %p180 = scmp.ne.s32.totalorder %s169, %s170
      %p181 = scmp.eq.s32.totalorder %s36, 0
      %p182 = por %p180, %p181
      %p183 = scmp.ne.s32.totalorder %s169, %s170
      %p184 = scmp.eq.s32.totalorder %s37, 1
      %p185 = por %p183, %p184
      %p187 = scmp.ne.s32.totalorder %s170, %s186
      %p188 = scmp.eq.s32.totalorder %s37, 0
      %p189 = por %p187, %p188
      %s190 = ssub.s32 %s31, %s38
      %p191 = scmp.eq.s32.totalorder %s190, 0
      %s193 = sadd.s32 %s192, 1
      %s194 = scalar_select %p191, %s192, %s193
      %p197 = pneg %p191
      %p198 = scmp.eq.s32.totalorder %s31, 1
      %p199 = por %p197, %p198
      %p200 = scmp.ne.s32.totalorder %s192, %s195
      %p201 = scmp.eq.s32.totalorder %s31, 0
      %p202 = por %p200, %p201
      %p203 = scmp.ne.s32.totalorder %s192, %s195
      %p204 = scmp.eq.s32.totalorder %s36, 1
      %p205 = por %p203, %p204
      %p206 = scmp.ne.s32.totalorder %s195, %s196
      %p207 = scmp.eq.s32.totalorder %s36, 0
      %p208 = por %p206, %p207
      %p209 = scmp.ne.s32.totalorder %s195, %s196
      %p210 = scmp.eq.s32.totalorder %s37, 1
      %p211 = por %p209, %p210
      %p213 = scmp.ne.s32.totalorder %s196, %s212
      %p214 = scmp.eq.s32.totalorder %s37, 0
      %p215 = por %p213, %p214
      %s216 = ssub.s32 %s31, %s38
      %p217 = scmp.eq.s32.totalorder %s216, 0
      %s219 = sadd.s32 %s218, 1
      %s220 = scalar_select %p217, %s218, %s219
      %p223 = pneg %p217
      %p224 = scmp.eq.s32.totalorder %s31, 1
      %p225 = por %p223, %p224
      %p226 = scmp.ne.s32.totalorder %s218, %s221
      %p227 = scmp.eq.s32.totalorder %s31, 0
      %p228 = por %p226, %p227
      %p229 = scmp.ne.s32.totalorder %s218, %s221
      %p230 = scmp.eq.s32.totalorder %s36, 1
      %p231 = por %p229, %p230
      %p232 = scmp.ne.s32.totalorder %s221, %s222
      %p233 = scmp.eq.s32.totalorder %s36, 0
      %p234 = por %p232, %p233
      %p235 = scmp.ne.s32.totalorder %s221, %s222
      %p236 = scmp.eq.s32.totalorder %s37, 1
      %p237 = por %p235, %p236
      %p239 = scmp.ne.s32.totalorder %s222, %s238
      %p240 = scmp.eq.s32.totalorder %s37, 0
      %p241 = por %p239, %p240
      %s242 = ssub.s32 %s31, %s38
      %p243 = scmp.eq.s32.totalorder %s242, 0
      %s245 = sadd.s32 %s244, 1
      %s246 = scalar_select %p243, %s244, %s245
      %p249 = pneg %p243
      %p250 = scmp.eq.s32.totalorder %s31, 1
      %p251 = por %p249, %p250
      %p252 = scmp.ne.s32.totalorder %s244, %s247
      %p253 = scmp.eq.s32.totalorder %s31, 0
      %p254 = por %p252, %p253
      %p255 = scmp.ne.s32.totalorder %s244, %s247
      %p256 = scmp.eq.s32.totalorder %s36, 1
      %p257 = por %p255, %p256
      %p258 = scmp.ne.s32.totalorder %s247, %s248
      %p259 = scmp.eq.s32.totalorder %s36, 0
      %p260 = por %p258, %p259
      %p261 = scmp.ne.s32.totalorder %s247, %s248
      %p262 = scmp.eq.s32.totalorder %s37, 1
      %p263 = por %p261, %p262
      %p265 = scmp.ne.s32.totalorder %s248, %s264
      %p266 = scmp.eq.s32.totalorder %s37, 0
      %p267 = por %p265, %p266
      %s268 = ssub.s32 %s31, %s38
      %p269 = scmp.eq.s32.totalorder %s268, 0
      %s271 = sadd.s32 %s270, 1
      %s272 = scalar_select %p269, %s270, %s271
      %p275 = pneg %p269
      %p276 = scmp.eq.s32.totalorder %s31, 1
      %p277 = por %p275, %p276
      %p278 = scmp.ne.s32.totalorder %s270, %s273
      %p279 = scmp.eq.s32.totalorder %s31, 0
      %p280 = por %p278, %p279
      %p281 = scmp.ne.s32.totalorder %s270, %s273
      %p282 = scmp.eq.s32.totalorder %s36, 1
      %p283 = por %p281, %p282
      %p284 = scmp.ne.s32.totalorder %s273, %s274
      %p285 = scmp.eq.s32.totalorder %s36, 0
      %p286 = por %p284, %p285
      %p287 = scmp.ne.s32.totalorder %s273, %s274
      %p288 = scmp.eq.s32.totalorder %s37, 1
      %p289 = por %p287, %p288
      %p291 = scmp.ne.s32.totalorder %s274, %s290
      %p292 = scmp.eq.s32.totalorder %s37, 0
      %p293 = por %p291, %p292
      %s294 = ssub.s32 %s31, %s38
      %p295 = scmp.eq.s32.totalorder %s294, 0
      %s297 = sadd.s32 %s296, 1
      %s298 = scalar_select %p295, %s296, %s297
      %p301 = pneg %p295
      %p302 = scmp.eq.s32.totalorder %s31, 1
      %p303 = por %p301, %p302
      %p304 = scmp.ne.s32.totalorder %s296, %s299
      %p305 = scmp.eq.s32.totalorder %s31, 0
      %p306 = por %p304, %p305
      %p307 = scmp.ne.s32.totalorder %s296, %s299
      %p308 = scmp.eq.s32.totalorder %s36, 1
      %p309 = por %p307, %p308
      %p310 = scmp.ne.s32.totalorder %s299, %s300
      %p311 = scmp.eq.s32.totalorder %s36, 0
      %p312 = por %p310, %p311
      %p313 = scmp.ne.s32.totalorder %s299, %s300
      %p314 = scmp.eq.s32.totalorder %s37, 1
      %p315 = por %p313, %p314
      %p317 = scmp.ne.s32.totalorder %s300, %s316
      %p318 = scmp.eq.s32.totalorder %s37, 0
      %p319 = por %p317, %p318
      %s320 = ssub.s32 %s31, %s38
      %p321 = scmp.eq.s32.totalorder %s320, 0
      %s323 = sadd.s32 %s322, 1
      %s324 = scalar_select %p321, %s322, %s323
      %p327 = pneg %p321
      %p328 = scmp.eq.s32.totalorder %s31, 1
      %p329 = por %p327, %p328
      %p330 = scmp.ne.s32.totalorder %s322, %s325
      %p331 = scmp.eq.s32.totalorder %s31, 0
      %p332 = por %p330, %p331
      %p333 = scmp.ne.s32.totalorder %s322, %s325
      %p334 = scmp.eq.s32.totalorder %s36, 1
      %p335 = por %p333, %p334
      %p336 = scmp.ne.s32.totalorder %s325, %s326
      %p337 = scmp.eq.s32.totalorder %s36, 0
      %p338 = por %p336, %p337
      %p339 = scmp.ne.s32.totalorder %s325, %s326
      %p340 = scmp.eq.s32.totalorder %s37, 1
      %p341 = por %p339, %p340
      %p343 = scmp.ne.s32.totalorder %s326, %s342
      %p344 = scmp.eq.s32.totalorder %s37, 0
      %p345 = por %p343, %p344
      %s346 = ssub.s32 %s31, %s38
      %p347 = scmp.eq.s32.totalorder %s346, 0
      %s349 = sadd.s32 %s348, 1
      %s350 = scalar_select %p347, %s348, %s349
      %p353 = pneg %p347
      %p354 = scmp.eq.s32.totalorder %s31, 1
      %p355 = por %p353, %p354
      %p356 = scmp.ne.s32.totalorder %s348, %s351
      %p357 = scmp.eq.s32.totalorder %s31, 0
      %p358 = por %p356, %p357
      %p359 = scmp.ne.s32.totalorder %s348, %s351
      %p360 = scmp.eq.s32.totalorder %s36, 1
      %p361 = por %p359, %p360
      %p362 = scmp.ne.s32.totalorder %s351, %s352
      %p363 = scmp.eq.s32.totalorder %s36, 0
      %p364 = por %p362, %p363
      %p365 = scmp.ne.s32.totalorder %s351, %s352
      %p366 = scmp.eq.s32.totalorder %s37, 1
      %p367 = por %p365, %p366
      %p369 = scmp.ne.s32.totalorder %s352, %s368
      %p370 = scmp.eq.s32.totalorder %s37, 0
      %p371 = por %p369, %p370
      %s372 = ssub.s32 %s31, %s38
      %p373 = scmp.eq.s32.totalorder %s372, 0
      %s375 = sadd.s32 %s374, 1
      %s376 = scalar_select %p373, %s374, %s375
      %p379 = pneg %p373
      %p380 = scmp.eq.s32.totalorder %s31, 1
      %p381 = por %p379, %p380
      %p382 = scmp.ne.s32.totalorder %s374, %s377
      %p383 = scmp.eq.s32.totalorder %s31, 0
      %p384 = por %p382, %p383
      %p385 = scmp.ne.s32.totalorder %s374, %s377
      %p386 = scmp.eq.s32.totalorder %s36, 1
      %p387 = por %p385, %p386
      %p388 = scmp.ne.s32.totalorder %s377, %s378
      %p389 = scmp.eq.s32.totalorder %s36, 0
      %p390 = por %p388, %p389
      %p391 = scmp.ne.s32.totalorder %s377, %s378
      %p392 = scmp.eq.s32.totalorder %s37, 1
      %p393 = por %p391, %p392
      %p395 = scmp.ne.s32.totalorder %s378, %s394
      %p396 = scmp.eq.s32.totalorder %s37, 0
      %p397 = por %p395, %p396
      %s398 = ssub.s32 %s31, %s38
      %p399 = scmp.eq.s32.totalorder %s398, 0
      %s401 = sadd.s32 %s400, 1
      %s402 = scalar_select %p399, %s400, %s401
      %p405 = pneg %p399
      %p406 = scmp.eq.s32.totalorder %s31, 1
      %p407 = por %p405, %p406
      %p408 = scmp.ne.s32.totalorder %s400, %s403
      %p409 = scmp.eq.s32.totalorder %s31, 0
      %p410 = por %p408, %p409
      %p411 = scmp.ne.s32.totalorder %s400, %s403
      %p412 = scmp.eq.s32.totalorder %s36, 1
      %p413 = por %p411, %p412
      %p414 = scmp.ne.s32.totalorder %s403, %s404
      %p415 = scmp.eq.s32.totalorder %s36, 0
      %p416 = por %p414, %p415
      %p417 = scmp.ne.s32.totalorder %s403, %s404
      %p418 = scmp.eq.s32.totalorder %s37, 1
      %p419 = por %p417, %p418
      %p421 = scmp.ne.s32.totalorder %s404, %s420
      %p422 = scmp.eq.s32.totalorder %s37, 0
      %p423 = por %p421, %p422
      %s425 = sadd.s32 %s424, 1
      %p428 = scmp.eq.s32.totalorder %s31, 1
      %p429 = scmp.ne.s32.totalorder %s424, %s426
      %p430 = scmp.eq.s32.totalorder %s31, 0
      %p431 = por %p429, %p430
      %p432 = scmp.ne.s32.totalorder %s424, %s426
      %p433 = scmp.eq.s32.totalorder %s36, 1
      %p434 = por %p432, %p433
      %p435 = scmp.ne.s32.totalorder %s426, %s427
      %p436 = scmp.eq.s32.totalorder %s36, 0
      %p437 = por %p435, %p436
      %p438 = scmp.ne.s32.totalorder %s426, %s427
      %p439 = scmp.eq.s32.totalorder %s37, 1
      %p440 = por %p438, %p439
      %p442 = scmp.ne.s32.totalorder %s427, %s441
      %p443 = scmp.eq.s32.totalorder %s37, 0
      %p444 = por %p442, %p443
      %s446 = sadd.s32 %s445, 1
      %p449 = scmp.eq.s32.totalorder %s31, 1
      %p450 = scmp.ne.s32.totalorder %s445, %s447
      %p451 = scmp.eq.s32.totalorder %s31, 0
      %p452 = por %p450, %p451
      %p453 = scmp.ne.s32.totalorder %s445, %s447
      %p454 = scmp.eq.s32.totalorder %s36, 1
      %p455 = por %p453, %p454
      %p456 = scmp.ne.s32.totalorder %s447, %s448
      %p457 = scmp.eq.s32.totalorder %s36, 0
      %p458 = por %p456, %p457
      %p459 = scmp.ne.s32.totalorder %s447, %s448
      %p460 = scmp.eq.s32.totalorder %s37, 1
      %p461 = por %p459, %p460
      %p463 = scmp.ne.s32.totalorder %s448, %s462
      %p464 = scmp.eq.s32.totalorder %s37, 0
      %p465 = por %p463, %p464
      %s467 = sadd.s32 %s466, 1
      %p470 = scmp.eq.s32.totalorder %s31, 1
      %p471 = scmp.ne.s32.totalorder %s466, %s468
      %p472 = scmp.eq.s32.totalorder %s31, 0
      %p473 = por %p471, %p472
      %p474 = scmp.ne.s32.totalorder %s466, %s468
      %p475 = scmp.eq.s32.totalorder %s36, 1
      %p476 = por %p474, %p475
      %p477 = scmp.ne.s32.totalorder %s468, %s469
      %p478 = scmp.eq.s32.totalorder %s36, 0
      %p479 = por %p477, %p478
      %p480 = scmp.ne.s32.totalorder %s468, %s469
      %p481 = scmp.eq.s32.totalorder %s37, 1
      %p482 = por %p480, %p481
      %p484 = scmp.ne.s32.totalorder %s469, %s483
      %p485 = scmp.eq.s32.totalorder %s37, 0
      %p486 = por %p484, %p485
      %p487 = scmp.le.s32.totalorder 1, %s31
      %p488 = scmp.lt.s32.totalorder %s31, 3
      %p489 = pnand %p487, %p488
      %p490 = pneg %p489
      // Predicated region
      $region9: #{tpu_custom_call.1} parent=5 // pred_check
        _
      $region10: #{tpu_custom_call.1} parent=5 // pred_check_branch
        %492 = sbr.rel (%p489) target = $region12
      $region11: #{tpu_custom_call.1} parent=5 // pred_region
        %s493 = ssub.s32 %s31, 1
        // Predicated region
        $region13: #{tpu_custom_call.1} parent=11 // pred_check
          %p494 = pneg %p52
        $region14: #{tpu_custom_call.1} parent=11 // pred_check_branch
          %496 = sbr.rel (%p494) target = $region16
        $region15: #{tpu_custom_call.1} parent=11 // pred_region
          %s498 = ssub.s32 256, 256
          %499 = vsyncadd [#allocation3], %s498
          %s500 = sshll.u32 [#allocation2], 4
          %s501 = int_to_ptr.vmem [resolvable:$true] %s500
          %506 = dma.hbm_to_vmem [thread:$0]  %s0, 256, %s501, [#allocation3], 128, 128, 8
        $region16: #{tpu_custom_call.1} parent=11 // pred_fallthru
          _
        // Predicated region
        $region17: #{tpu_custom_call.1} parent=11 // pred_check
          %p507 = pneg %p437
        $region18: #{tpu_custom_call.1} parent=11 // pred_check_branch
          %509 = sbr.rel (%p507) target = $region20
        $region19: #{tpu_custom_call.1} parent=11 // pred_region
          _
        $region20: #{tpu_custom_call.1} parent=11 // pred_fallthru
          _
        // Predicated region
        $region21: #{tpu_custom_call.1} parent=11 // pred_check
          %p510 = pneg %p458
        $region22: #{tpu_custom_call.1} parent=11 // pred_check_branch
          %512 = sbr.rel (%p510) target = $region24
        $region23: #{tpu_custom_call.1} parent=11 // pred_region
          _
        $region24: #{tpu_custom_call.1} parent=11 // pred_fallthru
          _
      $region12: #{tpu_custom_call.1} parent=5 // pred_fallthru
        _
      %p513 = scmp.lt.s32.totalorder %s31, 2
      // Predicated region
      $region25: #{tpu_custom_call.1} parent=5 // pred_check
        %p514 = pneg %p513
      $region26: #{tpu_custom_call.1} parent=5 // pred_check_branch
        %516 = sbr.rel (%p514) target = $region28
      $region27: #{tpu_custom_call.1} parent=5 // pred_region
        // Predicated region
        $region29: #{tpu_custom_call.1} parent=27 // pred_check
          %p517 = pneg %p72
        $region30: #{tpu_custom_call.1} parent=27 // pred_check_branch
          %519 = sbr.rel (%p517) target = $region32
        $region31: #{tpu_custom_call.1} parent=27 // pred_region
          %p520 = scmp.lt.s32.totalorder %s31, 1
          %s521 = scalar_select %p520, %s31, 1
          %s522 = scalar_lea.vmem %s1, %s521
        $region32: #{tpu_custom_call.1} parent=27 // pred_fallthru
          _
        // Predicated region
        $region33: #{tpu_custom_call.1} parent=27 // pred_check
          %p523 = pneg %p98
        $region34: #{tpu_custom_call.1} parent=27 // pred_check_branch
          %525 = sbr.rel (%p523) target = $region36
        $region35: #{tpu_custom_call.1} parent=27 // pred_region
          %s526 = sand.u32 %s31, 1
          %s527 = scalar_lea.sflag [#allocation6], %s526
          %s528 = sand.u32 %s88, 1
          %s529 = scalar_lea.vmem [#allocation5], %s528
          %s531 = ssub.s32 16, 16
          %532 = vsyncadd %s527, %s531
          %s533 = smul.addr %s31, 16
          %s534 = scalar_lea.hbm %s2, %s533
          %s536 = sshll.u32 %s529, 4
          %s537 = int_to_ptr.vmem [resolvable:$true] %s536
          %539 = dma.hbm_to_vmem [thread:$0]  %s534, 16, %s537, %s527
        $region36: #{tpu_custom_call.1} parent=27 // pred_fallthru
          _
        // Predicated region
        $region37: #{tpu_custom_call.1} parent=27 // pred_check
          %p540 = pneg %p124
        $region38: #{tpu_custom_call.1} parent=27 // pred_check_branch
          %542 = sbr.rel (%p540) target = $region40
        $region39: #{tpu_custom_call.1} parent=27 // pred_region
          %p543 = scmp.lt.s32.totalorder %s31, 1
          %s544 = scalar_select %p543, %s31, 1
          %s545 = smul.addr %s544, 4
          %s546 = smul.addr %s545, 4
          %s547 = scalar_lea.vmem %s3, %s546
        $region40: #{tpu_custom_call.1} parent=27 // pred_fallthru
          _
        // Predicated region
        $region41: #{tpu_custom_call.1} parent=27 // pred_check
          %p548 = pneg %p150
        $region42: #{tpu_custom_call.1} parent=27 // pred_check_branch
          %550 = sbr.rel (%p548) target = $region44
        $region43: #{tpu_custom_call.1} parent=27 // pred_region
          %p551 = scmp.lt.s32.totalorder %s31, 1
          %s552 = scalar_select %p551, %s31, 1
          %s553 = smul.addr %s552, 4
          %s554 = scalar_lea.vmem %s4, %s553
        $region44: #{tpu_custom_call.1} parent=27 // pred_fallthru
          _
        // Predicated region
        $region45: #{tpu_custom_call.1} parent=27 // pred_check
          %p555 = pneg %p176
        $region46: #{tpu_custom_call.1} parent=27 // pred_check_branch
          %557 = sbr.rel (%p555) target = $region48
        $region47: #{tpu_custom_call.1} parent=27 // pred_region
          %p558 = scmp.lt.s32.totalorder %s31, 1
          %s559 = scalar_select %p558, %s31, 1
          %s560 = scalar_lea.vmem %s5, %s559
        $region48: #{tpu_custom_call.1} parent=27 // pred_fallthru
          _
        // Predicated region
        $region49: #{tpu_custom_call.1} parent=27 // pred_check
          %p561 = pneg %p202
        $region50: #{tpu_custom_call.1} parent=27 // pred_check_branch
          %563 = sbr.rel (%p561) target = $region52
        $region51: #{tpu_custom_call.1} parent=27 // pred_region
          %p564 = scmp.lt.s32.totalorder %s31, 1
          %s565 = scalar_select %p564, %s31, 1
          %s566 = scalar_lea.vmem %s6, %s565
        $region52: #{tpu_custom_call.1} parent=27 // pred_fallthru
          _
        // Predicated region
        $region53: #{tpu_custom_call.1} parent=27 // pred_check
          %p567 = pneg %p228
        $region54: #{tpu_custom_call.1} parent=27 // pred_check_branch
          %569 = sbr.rel (%p567) target = $region56
        $region55: #{tpu_custom_call.1} parent=27 // pred_region
          %p570 = scmp.lt.s32.totalorder %s31, 1
          %s571 = scalar_select %p570, %s31, 1
          %s572 = smul.addr %s571, 4
          %s573 = smul.addr %s572, 4
          %s574 = scalar_lea.vmem %s7, %s573
        $region56: #{tpu_custom_call.1} parent=27 // pred_fallthru
          _
        // Predicated region
        $region57: #{tpu_custom_call.1} parent=27 // pred_check
          %p575 = pneg %p254
        $region58: #{tpu_custom_call.1} parent=27 // pred_check_branch
          %577 = sbr.rel (%p575) target = $region60
        $region59: #{tpu_custom_call.1} parent=27 // pred_region
          %p578 = scmp.lt.s32.totalorder %s31, 1
          %s579 = scalar_select %p578, %s31, 1
          %s580 = scalar_lea.vmem %s8, %s579
        $region60: #{tpu_custom_call.1} parent=27 // pred_fallthru
          _
        // Predicated region
        $region61: #{tpu_custom_call.1} parent=27 // pred_check
          %p581 = pneg %p280
        $region62: #{tpu_custom_call.1} parent=27 // pred_check_branch
          %583 = sbr.rel (%p581) target = $region64
        $region63: #{tpu_custom_call.1} parent=27 // pred_region
          %s584 = sand.u32 %s31, 1
          %s585 = scalar_lea.sflag [#allocation6], %s584
          %s586 = sand.u32 %s270, 1
          %s587 = scalar_lea.vmem [#allocation7], %s586
          %s589 = ssub.s32 16, 16
          %590 = vsyncadd %s585, %s589
          %s591 = smul.addr %s31, 16
          %s592 = scalar_lea.hbm %s9, %s591
          %s594 = sshll.u32 %s587, 4
          %s595 = int_to_ptr.vmem [resolvable:$true] %s594
          %597 = dma.hbm_to_vmem [thread:$0]  %s592, 16, %s595, %s585
        $region64: #{tpu_custom_call.1} parent=27 // pred_fallthru
          _
        // Predicated region
        $region65: #{tpu_custom_call.1} parent=27 // pred_check
          %p598 = pneg %p306
        $region66: #{tpu_custom_call.1} parent=27 // pred_check_branch
          %600 = sbr.rel (%p598) target = $region68
        $region67: #{tpu_custom_call.1} parent=27 // pred_region
          %s601 = sand.u32 %s31, 1
          %s602 = scalar_lea.sflag [#allocation9], %s601
          %s603 = sand.u32 %s296, 1
          %s604 = scalar_lea.vmem [#allocation8], %s603
          %s606 = ssub.s32 16, 16
          %607 = vsyncadd %s602, %s606
          %s608 = smul.addr %s31, 16
          %s609 = scalar_lea.hbm %s10, %s608
          %s611 = sshll.u32 %s604, 4
          %s612 = int_to_ptr.vmem [resolvable:$true] %s611
          %614 = dma.hbm_to_vmem [thread:$0]  %s609, 16, %s612, %s602
        $region68: #{tpu_custom_call.1} parent=27 // pred_fallthru
          _
        // Predicated region
        $region69: #{tpu_custom_call.1} parent=27 // pred_check
          %p615 = pneg %p332
        $region70: #{tpu_custom_call.1} parent=27 // pred_check_branch
          %617 = sbr.rel (%p615) target = $region72
        $region71: #{tpu_custom_call.1} parent=27 // pred_region
          %p618 = scmp.lt.s32.totalorder %s31, 1
          %s619 = scalar_select %p618, %s31, 1
          %s620 = smul.addr %s619, 4
          %s621 = smul.addr %s620, 4
          %s622 = scalar_lea.vmem %s11, %s621
        $region72: #{tpu_custom_call.1} parent=27 // pred_fallthru
          _
        // Predicated region
        $region73: #{tpu_custom_call.1} parent=27 // pred_check
          %p623 = pneg %p358
        $region74: #{tpu_custom_call.1} parent=27 // pred_check_branch
          %625 = sbr.rel (%p623) target = $region76
        $region75: #{tpu_custom_call.1} parent=27 // pred_region
          %s626 = sand.u32 %s31, 1
          %s627 = scalar_lea.sflag [#allocation9], %s626
          %s628 = sand.u32 %s348, 1
          %s629 = scalar_lea.vmem [#allocation10], %s628
          %s631 = ssub.s32 16, 16
          %632 = vsyncadd %s627, %s631
          %s633 = smul.addr %s31, 16
          %s634 = scalar_lea.hbm %s12, %s633
          %s636 = sshll.u32 %s629, 4
          %s637 = int_to_ptr.vmem [resolvable:$true] %s636
          %639 = dma.hbm_to_vmem [thread:$0]  %s634, 16, %s637, %s627
        $region76: #{tpu_custom_call.1} parent=27 // pred_fallthru
          _
        // Predicated region
        $region77: #{tpu_custom_call.1} parent=27 // pred_check
          %p640 = pneg %p384
        $region78: #{tpu_custom_call.1} parent=27 // pred_check_branch
          %642 = sbr.rel (%p640) target = $region80
        $region79: #{tpu_custom_call.1} parent=27 // pred_region
          %p643 = scmp.lt.s32.totalorder %s31, 1
          %s644 = scalar_select %p643, %s31, 1
          %s645 = smul.addr %s644, 8
          %s646 = smul.addr %s645, 4
          %s647 = scalar_lea.vmem %s13, %s646
        $region80: #{tpu_custom_call.1} parent=27 // pred_fallthru
          _
        // Predicated region
        $region81: #{tpu_custom_call.1} parent=27 // pred_check
          %p648 = pneg %p410
        $region82: #{tpu_custom_call.1} parent=27 // pred_check_branch
          %650 = sbr.rel (%p648) target = $region84
        $region83: #{tpu_custom_call.1} parent=27 // pred_region
          %p651 = scmp.lt.s32.totalorder %s31, 1
          %s652 = scalar_select %p651, %s31, 1
          %s653 = scalar_lea.vmem %s14, %s652
        $region84: #{tpu_custom_call.1} parent=27 // pred_fallthru
          _
      $region28: #{tpu_custom_call.1} parent=5 // pred_fallthru
        _
      %p654 = scmp.le.s32.totalorder 1, %s31
      %p655 = scmp.lt.s32.totalorder %s31, 3
      %p656 = pnand %p654, %p655
      %p657 = pneg %p656
      // Predicated region
      $region85: #{tpu_custom_call.1} parent=5 // pred_check
        _
      $region86: #{tpu_custom_call.1} parent=5 // pred_check_branch
        %659 = sbr.rel (%p656) target = $region88
      $region87: #{tpu_custom_call.1} parent=5 // pred_region
        %s660 = ssub.s32 %s31, 1
        // Predicated region
        $region89: #{tpu_custom_call.1} parent=87 // pred_check
          %p661 = pneg %p52
        $region90: #{tpu_custom_call.1} parent=87 // pred_check_branch
          %663 = sbr.rel (%p661) target = $region92
        $region91: #{tpu_custom_call.1} parent=87 // pred_region
          %664 = dma.done [#allocation3], 256
        $region92: #{tpu_custom_call.1} parent=87 // pred_fallthru
          _
        %s665 = sand.u32 %s36, 1
        %s666 = scalar_lea.sflag [#allocation6], %s665
        %s667 = sand.u32 %s91, 1
        %s668 = scalar_lea.vmem [#allocation5], %s667
        // Predicated region
        $region93: #{tpu_custom_call.1} parent=87 // pred_check
          %p669 = pneg %p104
        $region94: #{tpu_custom_call.1} parent=87 // pred_check_branch
          %671 = sbr.rel (%p669) target = $region96
        $region95: #{tpu_custom_call.1} parent=87 // pred_region
          %672 = dma.done %s666, 16
        $region96: #{tpu_custom_call.1} parent=87 // pred_fallthru
          _
        %s673 = sand.u32 %s36, 1
        %s674 = scalar_lea.sflag [#allocation6], %s673
        %s675 = sand.u32 %s273, 1
        %s676 = scalar_lea.vmem [#allocation7], %s675
        // Predicated region
        $region97: #{tpu_custom_call.1} parent=87 // pred_check
          %p677 = pneg %p286
        $region98: #{tpu_custom_call.1} parent=87 // pred_check_branch
          %679 = sbr.rel (%p677) target = $region100
        $region99: #{tpu_custom_call.1} parent=87 // pred_region
          %680 = dma.done %s674, 16
        $region100: #{tpu_custom_call.1} parent=87 // pred_fallthru
          _
        %s681 = sand.u32 %s36, 1
        %s682 = scalar_lea.sflag [#allocation9], %s681
        %s683 = sand.u32 %s299, 1
        %s684 = scalar_lea.vmem [#allocation8], %s683
        // Predicated region
        $region101: #{tpu_custom_call.1} parent=87 // pred_check
          %p685 = pneg %p312
        $region102: #{tpu_custom_call.1} parent=87 // pred_check_branch
          %687 = sbr.rel (%p685) target = $region104
        $region103: #{tpu_custom_call.1} parent=87 // pred_region
          %688 = dma.done %s682, 16
        $region104: #{tpu_custom_call.1} parent=87 // pred_fallthru
          _
        %s689 = sand.u32 %s36, 1
        %s690 = scalar_lea.sflag [#allocation9], %s689
        %s691 = sand.u32 %s351, 1
        %s692 = scalar_lea.vmem [#allocation10], %s691
        // Predicated region
        $region105: #{tpu_custom_call.1} parent=87 // pred_check
          %p693 = pneg %p364
        $region106: #{tpu_custom_call.1} parent=87 // pred_check_branch
          %695 = sbr.rel (%p693) target = $region108
        $region107: #{tpu_custom_call.1} parent=87 // pred_region
          %696 = dma.done %s690, 16
        $region108: #{tpu_custom_call.1} parent=87 // pred_fallthru
          _
        %p697 = pneg %p52
        %p698 = pneg %p49
        %p699 = scmp.lt.s32.totalorder %s36, 1
        %s700 = scalar_select %p699, %s36, 1
        %s701 = scalar_lea.vmem %s1, %s700
        %p702 = pneg %p78
        %p703 = pneg %p75
        %s704 = sand.u32 %s36, 1
        %s705 = scalar_lea.sflag [#allocation6], %s704
        %s706 = sand.u32 %s91, 1
        %s707 = scalar_lea.vmem [#allocation5], %s706
        %p708 = pneg %p104
        %p709 = pneg %p101
        %p710 = scmp.lt.s32.totalorder %s36, 1
        %s711 = scalar_select %p710, %s36, 1
        %s712 = smul.addr %s711, 4
        %s713 = smul.addr %s712, 4
        %s714 = scalar_lea.vmem %s3, %s713
        %p715 = pneg %p130
        %p716 = pneg %p127
        %p717 = scmp.lt.s32.totalorder %s36, 1
        %s718 = scalar_select %p717, %s36, 1
        %s719 = smul.addr %s718, 4
        %s720 = scalar_lea.vmem %s4, %s719
        %p721 = pneg %p156
        %p722 = pneg %p153
        %p723 = scmp.lt.s32.totalorder %s36, 1
        %s724 = scalar_select %p723, %s36, 1
        %s725 = scalar_lea.vmem %s5, %s724
        %p726 = pneg %p182
        %p727 = pneg %p179
        %p728 = scmp.lt.s32.totalorder %s36, 1
        %s729 = scalar_select %p728, %s36, 1
        %s730 = scalar_lea.vmem %s6, %s729
        %p731 = pneg %p208
        %p732 = pneg %p205
        %p733 = scmp.lt.s32.totalorder %s36, 1
        %s734 = scalar_select %p733, %s36, 1
        %s735 = smul.addr %s734, 4
        %s736 = smul.addr %s735, 4
        %s737 = scalar_lea.vmem %s7, %s736
        %p738 = pneg %p234
        %p739 = pneg %p231
        %p740 = scmp.lt.s32.totalorder %s36, 1
        %s741 = scalar_select %p740, %s36, 1
        %s742 = scalar_lea.vmem %s8, %s741
        %p743 = pneg %p260
        %p744 = pneg %p257
        %s745 = sand.u32 %s36, 1
        %s746 = scalar_lea.sflag [#allocation6], %s745
        %s747 = sand.u32 %s273, 1
        %s748 = scalar_lea.vmem [#allocation7], %s747
        %p749 = pneg %p286
        %p750 = pneg %p283
        %s751 = sand.u32 %s36, 1
        %s752 = scalar_lea.sflag [#allocation9], %s751
        %s753 = sand.u32 %s299, 1
        %s754 = scalar_lea.vmem [#allocation8], %s753
        %p755 = pneg %p312
        %p756 = pneg %p309
        %p757 = scmp.lt.s32.totalorder %s36, 1
        %s758 = scalar_select %p757, %s36, 1
        %s759 = smul.addr %s758, 4
        %s760 = smul.addr %s759, 4
        %s761 = scalar_lea.vmem %s11, %s760
        %p762 = pneg %p338
        %p763 = pneg %p335
        %s764 = sand.u32 %s36, 1
        %s765 = scalar_lea.sflag [#allocation9], %s764
        %s766 = sand.u32 %s351, 1
        %s767 = scalar_lea.vmem [#allocation10], %s766
        %p768 = pneg %p364
        %p769 = pneg %p361
        %p770 = scmp.lt.s32.totalorder %s36, 1
        %s771 = scalar_select %p770, %s36, 1
        %s772 = smul.addr %s771, 8
        %s773 = smul.addr %s772, 4
        %s774 = scalar_lea.vmem %s13, %s773
        %p775 = pneg %p390
        %p776 = pneg %p387
        %p777 = scmp.lt.s32.totalorder %s36, 1
        %s778 = scalar_select %p777, %s36, 1
        %s779 = scalar_lea.vmem %s14, %s778
        %p780 = pneg %p416
        %p781 = pneg %p413
        %p782 = pneg %p437
        %p783 = pneg %p434
        %p784 = pneg %p458
        %p785 = pneg %p455
        %p786 = pneg %p479
        %p787 = pneg %p476
        %p788 = scmp.lt.s32.totalorder %s36, 1
        %s789 = scalar_select %p788, %s36, 1
        %s790 = scalar_lea.vmem %s1, %s789
        %p791 = scmp.lt.s32.totalorder %s36, 1
        %s792 = scalar_select %p791, %s36, 1
        %s793 = smul.addr %s792, 4
        %s794 = smul.addr %s793, 4
        %s795 = scalar_lea.vmem %s3, %s794
        %p796 = scmp.lt.s32.totalorder %s36, 1
        %s797 = scalar_select %p796, %s36, 1
        %s798 = smul.addr %s797, 4
        %s799 = scalar_lea.vmem %s4, %s798
        %p800 = scmp.lt.s32.totalorder %s36, 1
        %s801 = scalar_select %p800, %s36, 1
        %s802 = scalar_lea.vmem %s5, %s801
        %p803 = scmp.lt.s32.totalorder %s36, 1
        %s804 = scalar_select %p803, %s36, 1
        %s805 = scalar_lea.vmem %s6, %s804
        %p806 = scmp.lt.s32.totalorder %s36, 1
        %s807 = scalar_select %p806, %s36, 1
        %s808 = smul.addr %s807, 4
        %s809 = smul.addr %s808, 4
        %s810 = scalar_lea.vmem %s7, %s809
        %p811 = scmp.lt.s32.totalorder %s36, 1
        %s812 = scalar_select %p811, %s36, 1
        %s813 = scalar_lea.vmem %s8, %s812
        %p814 = scmp.lt.s32.totalorder %s36, 1
        %s815 = scalar_select %p814, %s36, 1
        %s816 = smul.addr %s815, 4
        %s817 = smul.addr %s816, 4
        %s818 = scalar_lea.vmem %s11, %s817
        %p819 = scmp.lt.s32.totalorder %s36, 1
        %s820 = scalar_select %p819, %s36, 1
        %s821 = smul.addr %s820, 8
        %s822 = smul.addr %s821, 4
        %s823 = scalar_lea.vmem %s13, %s822
        %p824 = scmp.lt.s32.totalorder %s36, 1
        %s825 = scalar_select %p824, %s36, 1
        %s826 = scalar_lea.vmem %s14, %s825
        %p828 = scmp.eq.s32.totalorder %s36, 0
        // Predicated region
        $region109: #{tpu_custom_call.1} parent=87 // pred_check
          %p829 = pneg %p828
        $region110: #{tpu_custom_call.1} parent=87 // pred_check_branch
          %831 = sbr.rel (%p829) target = $region112
        $region111: #{tpu_custom_call.1} parent=87 // pred_region
          %v832 = vld [vmem:[#allocation2] sm:$0xff]
          %v833 = vld [vmem:[#allocation2 + $0x8] sm:$0xff]
          %vm834 = vcmask 261120
          %835 = vst.msk [vmem:[#allocation11] sm:$0xff] %vm834, %v832
          %836 = vst.msk [vmem:[#allocation11 + $0x8] sm:$0xff] %vm834, %v833
        $region112: #{tpu_custom_call.1} parent=87 // pred_fallthru
          _
        %v837 = vld [vmem:[#allocation11] sm:$0xff]
        %v838 = vld [vmem:[#allocation11 + $0x8] sm:$0xff]
        %v839 = vld [vmem:[%s790] sm:$0x1]
        %v840 = vld [vmem:[%s668] sm:$0x1]
        %vm841 = vcmask 261120
        %v842 = vsel %vm841, %v837, 0.0
        %843 = vadd.xlane.f32.xlu0 %v842
        %v844 = vpop.xlane.xlu0 %843
        %v845 = vsel %vm841, %v838, 0.0
        %846 = vadd.xlane.f32.xlu0 %v845
        %v847 = vpop.xlane.xlu0 %846
        %v848 = vrcp.pop 32.0
        %v849 = vmul.f32 %v844, %v848
        %v850 = vmul.f32 %v847, %v848
        %v851 = vsub.f32 %v837, %v849
        %v852 = vsub.f32 %v838, %v850
        %v853 = vmul.f32 %v851, %v851
        %v854 = vmul.f32 %v852, %v852
        %v855 = vsel %vm841, %v853, 0.0
        %856 = vadd.xlane.f32.xlu0 %v855
        %v857 = vpop.xlane.xlu0 %856
        %v858 = vsel %vm841, %v854, 0.0
        %859 = vadd.xlane.f32.xlu0 %v858
        %v860 = vpop.xlane.xlu0 %859
        %v861 = vmul.f32 %v857, %v848
        %v862 = vmul.f32 %v860, %v848
        %v863 = vadd.f32 %v861, 1e-05
        %v864 = vadd.f32 %v862, 1e-05
        %v865 = vrsqrt.pop %v863
        %v866 = vrsqrt.pop %v864
        %v867 = vmul.f32 %v851, %v865
        %v868 = vmul.f32 %v852, %v866
        %v870 = vlaneseq
        %v871 = vshrl.u32 %v870, 7
        %v872 = vsub.s32 0, %v871
        %v873 = vrot.slane %v839, %v872
        %v875 = vmul.f32 %v867, %v873
        %v876 = vmul.f32 %v868, %v873
        %v878 = vlaneseq
        %v879 = vshrl.u32 %v878, 7
        %v880 = vsub.s32 0, %v879
        %v881 = vrot.slane %v840, %v880
        %v883 = vadd.f32 %v875, %v881
        %v884 = vadd.f32 %v876, %v881
        %v885 = vpack.c.bf16 %v884, %v883
        %v886 = vld [vmem:[%s795] sm:$0xf]
        %v887 = vld [vmem:[%s795 + $0x4] sm:$0xf]
        %v888 = vld [vmem:[%s795 + $0x8] sm:$0xf]
        %v889 = vld [vmem:[%s795 + $0xc] sm:$0xf]
        %v894 = vunpack.c.l.b16 %v886
        %v895 = vunpack.c.l.b16 %v887
        %v896 = vunpack.c.l.b16 %v888
        %v897 = vunpack.c.l.b16 %v889
        %v898 = vpack.c.b16 %v895, %v894
        %v899 = vpack.c.b16 %v897, %v896
        %v903 = vsel %vm841, %v885, 0
        %905 = vmatprep.subr.bf16.mxu0 0
        %906 = vmatpush1.bf16.msra.mxu0 %v898
        %907 = vmatprep.subr.bf16.mxu0 0
        %908 = vmatpush1.bf16.msra.mxu0 %v899
        %909 = vmatprep.subr.bf16.mxu0 0
        %910 = vmatpush1.bf16.msra.mxu0 0
        %911 = vmatprep.subr.bf16.mxu0 0
        %912 = vmatpush1.bf16.msra.mxu0 0
        %913 = vmatprep.subr.bf16.mxu0 0
        %914 = vmatpush1.bf16.msra.mxu0 0
        %915 = vmatprep.subr.bf16.mxu0 0
        %916 = vmatpush1.bf16.msra.mxu0 0
        %917 = vmatprep.subr.bf16.mxu0 0
        %918 = vmatpush1.bf16.msra.mxu0 0
        %919 = vmatprep.subr.bf16.mxu0 0
        %920 = vmatpush1.bf16.msra.mxu0 0
        %921 = vmatprep.subr.bf16.mxu0 0
        %922 = vmatpush1.bf16.msra.mxu0 0
        %923 = vmatprep.subr.bf16.mxu0 0
        %924 = vmatpush1.bf16.msra.mxu0 0
        %925 = vmatprep.subr.bf16.mxu0 0
        %926 = vmatpush1.bf16.msra.mxu0 0
        %927 = vmatprep.subr.bf16.mxu0 0
        %928 = vmatpush1.bf16.msra.mxu0 0
        %929 = vmatprep.subr.bf16.mxu0 0
        %930 = vmatpush1.bf16.msra.mxu0 0
        %931 = vmatprep.subr.bf16.mxu0 0
        %932 = vmatpush1.bf16.msra.mxu0 0
        %933 = vmatprep.subr.bf16.mxu0 0
        %934 = vmatpush1.bf16.msra.mxu0 0
        %935 = vmatprep.subr.bf16.mxu0 0
        %936 = vmatpush1.bf16.msra.mxu0 0
        %937 = vmatprep.mubr.bf16.mxu0 0
        %938 = vmatmul.mubr.bf16.gmra.mrb[0].mxu0 %v903
        %v939 = vpop.f32.mrb[0].mxu0
        %v940 = vadd.f32 0.0, %v939
        %v941 = vpop.f32.mrb[0].mxu0
        %v942 = vpop.f32.mrb[0].mxu0
        %v943 = vadd.f32 0.0, %v942
        %v944 = vpop.f32.mrb[0].mxu0
        %945 = vdwg.mxu0
        %v946 = vld [vmem:[%s799] sm:$0xf]
        %v947 = vld [vmem:[%s802] sm:$0x1]
        %v948 = vld [vmem:[%s805] sm:$0x1]
        %v949 = vlaneseq
        %v950 = vand.u32 %v949, 127
        %952 = vrot.lane.b32.xlu0 %v940, 96
        %v953 = vpop.permute.xlu0 %952
        %vm954 = vcmask 64512
        %v955 = vsel %vm954, %v940, 0
        %v957 = vsel %vm954, %v953, 0
        %959 = vmatprep.subr.mxu0 0.0
        %960 = vmatpush1.xpose.msra.mxu0 %v957
        %961 = vmatprep.subr.mxu0 0.0
        %962 = vmatpush1.xpose.msra.mxu0 0.0
        %963 = vmatprep.subr.mxu0 0.0
        %964 = vmatpush1.xpose.msra.mxu0 0.0
        %965 = vmatprep.subr.mxu0 0.0
        %966 = vmatpush1.xpose.msra.mxu0 0.0
        %967 = vmatprep.subr.mxu0 0.0
        %968 = vmatpush1.xpose.msra.mxu0 0.0
        %969 = vmatprep.subr.mxu0 0.0
        %970 = vmatpush1.xpose.msra.mxu0 0.0
        %971 = vmatprep.subr.mxu0 0.0
        %972 = vmatpush1.xpose.msra.mxu0 0.0
        %973 = vmatprep.subr.mxu0 0.0
        %974 = vmatpush1.xpose.msra.mxu0 0.0
        %975 = vmatprep.subr.mxu0 0.0
        %976 = vmatpush1.xpose.msra.mxu0 0.0
        %977 = vmatprep.subr.mxu0 0.0
        %978 = vmatpush1.xpose.msra.mxu0 0.0
        %979 = vmatprep.subr.mxu0 0.0
        %980 = vmatpush1.xpose.msra.mxu0 0.0
        %981 = vmatprep.subr.mxu0 0.0
        %982 = vmatpush1.xpose.msra.mxu0 0.0
        %983 = vmatprep.subr.mxu0 0.0
        %984 = vmatpush1.xpose.msra.mxu0 0.0
        %985 = vmatprep.subr.mxu0 0.0
        %986 = vmatpush1.xpose.msra.mxu0 0.0
        %987 = vmatprep.subr.mxu0 0.0
        %988 = vmatpush1.xpose.msra.mxu0 0.0
        %989 = vmatprep.subr.mxu0 0.0
        %990 = vmatpush1.xpose.msra.mxu0 0.0
        %991 = vmatprep.subr.mxu0 0.0
        %992 = vmatpush1.xpose.msra.mxu0 0.0
        %993 = vmatprep.subr.mxu0 0.0
        %994 = vmatpush1.xpose.msra.mxu0 0.0
        %995 = vmatprep.subr.mxu0 0.0
        %996 = vmatpush1.xpose.msra.mxu0 0.0
        %997 = vmatprep.subr.mxu0 0.0
        %998 = vmatpush1.xpose.msra.mxu0 0.0
        %999 = vmatprep.subr.mxu0 0.0
        %1000 = vmatpush1.xpose.msra.mxu0 0.0
        %1001 = vmatprep.subr.mxu0 0.0
        %1002 = vmatpush1.xpose.msra.mxu0 0.0
        %1003 = vmatprep.subr.mxu0 0.0
        %1004 = vmatpush1.xpose.msra.mxu0 0.0
        %1005 = vmatprep.subr.mxu0 0.0
        %1006 = vmatpush1.xpose.msra.mxu0 0.0
        %1007 = vmatprep.subr.mxu0 0.0
        %1008 = vmatpush1.xpose.msra.mxu0 0.0
        %1009 = vmatprep.subr.mxu0 0.0
        %1010 = vmatpush1.xpose.msra.mxu0 0.0
        %1011 = vmatprep.subr.mxu0 0.0
        %1012 = vmatpush1.xpose.msra.mxu0 0.0
        %1013 = vmatprep.subr.mxu0 0.0
        %1014 = vmatpush1.xpose.msra.mxu0 0.0
        %1015 = vmatprep.subr.mxu0 0.0
        %1016 = vmatpush1.xpose.msra.mxu0 0.0
        %1017 = vmatprep.subr.mxu0 0.0
        %1018 = vmatpush1.xpose.msra.mxu0 0.0
        %1019 = vmatprep.subr.mxu0 0.0
        %1020 = vmatpush1.xpose.msra.mxu0 0.0
        %1021 = vmatprep.subr.mxu0 0.0
        %1022 = vmatpush1.xpose.msra.mxu0 0.0
        %1023 = vmatprep.mubr.f32.mxu0 0.0
        %1024 = vmatmul.mubr.f32.gmra.mrb[0].mxu0 %v955
        %v1025 = vpop.f32.mrb[0].mxu0
        %v1026 = vadd.f32 0.0, %v1025
        %v1027 = vpop.f32.mrb[0].mxu0
        %1028 = vdwg.mxu0
        %1029 = vrot.lane.b32.xlu0 %v940, 120
        %v1030 = vpop.permute.xlu0 %1029
        %1031 = vrot.lane.b32.xlu0 %v940, 88
        %v1032 = vpop.permute.xlu0 %1031
        %v1033 = vsel %vm954, %v1030, 0
        %v1035 = vsel %vm954, %v1032, 0
        %1037 = vmatprep.subr.mxu0 0.0
        %1038 = vmatpush1.xpose.msra.mxu0 %v1035
        %1039 = vmatprep.subr.mxu0 0.0
        %1040 = vmatpush1.xpose.msra.mxu0 0.0
        %1041 = vmatprep.subr.mxu0 0.0
        %1042 = vmatpush1.xpose.msra.mxu0 0.0
        %1043 = vmatprep.subr.mxu0 0.0
        %1044 = vmatpush1.xpose.msra.mxu0 0.0
        %1045 = vmatprep.subr.mxu0 0.0
        %1046 = vmatpush1.xpose.msra.mxu0 0.0
        %1047 = vmatprep.subr.mxu0 0.0
        %1048 = vmatpush1.xpose.msra.mxu0 0.0
        %1049 = vmatprep.subr.mxu0 0.0
        %1050 = vmatpush1.xpose.msra.mxu0 0.0
        %1051 = vmatprep.subr.mxu0 0.0
        %1052 = vmatpush1.xpose.msra.mxu0 0.0
        %1053 = vmatprep.subr.mxu0 0.0
        %1054 = vmatpush1.xpose.msra.mxu0 0.0
        %1055 = vmatprep.subr.mxu0 0.0
        %1056 = vmatpush1.xpose.msra.mxu0 0.0
        %1057 = vmatprep.subr.mxu0 0.0
        %1058 = vmatpush1.xpose.msra.mxu0 0.0
        %1059 = vmatprep.subr.mxu0 0.0
        %1060 = vmatpush1.xpose.msra.mxu0 0.0
        %1061 = vmatprep.subr.mxu0 0.0
        %1062 = vmatpush1.xpose.msra.mxu0 0.0
        %1063 = vmatprep.subr.mxu0 0.0
        %1064 = vmatpush1.xpose.msra.mxu0 0.0
        %1065 = vmatprep.subr.mxu0 0.0
        %1066 = vmatpush1.xpose.msra.mxu0 0.0
        %1067 = vmatprep.subr.mxu0 0.0
        %1068 = vmatpush1.xpose.msra.mxu0 0.0
        %1069 = vmatprep.subr.mxu0 0.0
        %1070 = vmatpush1.xpose.msra.mxu0 0.0
        %1071 = vmatprep.subr.mxu0 0.0
        %1072 = vmatpush1.xpose.msra.mxu0 0.0
        %1073 = vmatprep.subr.mxu0 0.0
        %1074 = vmatpush1.xpose.msra.mxu0 0.0
        %1075 = vmatprep.subr.mxu0 0.0
        %1076 = vmatpush1.xpose.msra.mxu0 0.0
        %1077 = vmatprep.subr.mxu0 0.0
        %1078 = vmatpush1.xpose.msra.mxu0 0.0
        %1079 = vmatprep.subr.mxu0 0.0
        %1080 = vmatpush1.xpose.msra.mxu0 0.0
        %1081 = vmatprep.subr.mxu0 0.0
        %1082 = vmatpush1.xpose.msra.mxu0 0.0
        %1083 = vmatprep.subr.mxu0 0.0
        %1084 = vmatpush1.xpose.msra.mxu0 0.0
        %1085 = vmatprep.subr.mxu0 0.0
        %1086 = vmatpush1.xpose.msra.mxu0 0.0
        %1087 = vmatprep.subr.mxu0 0.0
        %1088 = vmatpush1.xpose.msra.mxu0 0.0
        %1089 = vmatprep.subr.mxu0 0.0
        %1090 = vmatpush1.xpose.msra.mxu0 0.0
        %1091 = vmatprep.subr.mxu0 0.0
        %1092 = vmatpush1.xpose.msra.mxu0 0.0
        %1093 = vmatprep.subr.mxu0 0.0
        %1094 = vmatpush1.xpose.msra.mxu0 0.0
        %1095 = vmatprep.subr.mxu0 0.0
        %1096 = vmatpush1.xpose.msra.mxu0 0.0
        %1097 = vmatprep.subr.mxu0 0.0
        %1098 = vmatpush1.xpose.msra.mxu0 0.0
        %1099 = vmatprep.subr.mxu0 0.0
        %1100 = vmatpush1.xpose.msra.mxu0 0.0
        %1101 = vmatprep.mubr.f32.mxu0 0.0
        %1102 = vmatmul.mubr.f32.gmra.mrb[0].mxu0 %v1033
        %v1103 = vpop.f32.mrb[0].mxu0
        %v1104 = vadd.f32 0.0, %v1103
        %v1105 = vpop.f32.mrb[0].mxu0
        %1106 = vdwg.mxu0
        %1107 = vrot.lane.b32.xlu0 %v940, 112
        %v1108 = vpop.permute.xlu0 %1107
        %1109 = vrot.lane.b32.xlu0 %v940, 80
        %v1110 = vpop.permute.xlu0 %1109
        %v1111 = vsel %vm954, %v1108, 0
        %v1113 = vsel %vm954, %v1110, 0
        %1115 = vmatprep.subr.mxu0 0.0
        %1116 = vmatpush1.xpose.msra.mxu0 %v1113
        %1117 = vmatprep.subr.mxu0 0.0
        %1118 = vmatpush1.xpose.msra.mxu0 0.0
        %1119 = vmatprep.subr.mxu0 0.0
        %1120 = vmatpush1.xpose.msra.mxu0 0.0
        %1121 = vmatprep.subr.mxu0 0.0
        %1122 = vmatpush1.xpose.msra.mxu0 0.0
        %1123 = vmatprep.subr.mxu0 0.0
        %1124 = vmatpush1.xpose.msra.mxu0 0.0
        %1125 = vmatprep.subr.mxu0 0.0
        %1126 = vmatpush1.xpose.msra.mxu0 0.0
        %1127 = vmatprep.subr.mxu0 0.0
        %1128 = vmatpush1.xpose.msra.mxu0 0.0
        %1129 = vmatprep.subr.mxu0 0.0
        %1130 = vmatpush1.xpose.msra.mxu0 0.0
        %1131 = vmatprep.subr.mxu0 0.0
        %1132 = vmatpush1.xpose.msra.mxu0 0.0
        %1133 = vmatprep.subr.mxu0 0.0
        %1134 = vmatpush1.xpose.msra.mxu0 0.0
        %1135 = vmatprep.subr.mxu0 0.0
        %1136 = vmatpush1.xpose.msra.mxu0 0.0
        %1137 = vmatprep.subr.mxu0 0.0
        %1138 = vmatpush1.xpose.msra.mxu0 0.0
        %1139 = vmatprep.subr.mxu0 0.0
        %1140 = vmatpush1.xpose.msra.mxu0 0.0
        %1141 = vmatprep.subr.mxu0 0.0
        %1142 = vmatpush1.xpose.msra.mxu0 0.0
        %1143 = vmatprep.subr.mxu0 0.0
        %1144 = vmatpush1.xpose.msra.mxu0 0.0
        %1145 = vmatprep.subr.mxu0 0.0
        %1146 = vmatpush1.xpose.msra.mxu0 0.0
        %1147 = vmatprep.subr.mxu0 0.0
        %1148 = vmatpush1.xpose.msra.mxu0 0.0
        %1149 = vmatprep.subr.mxu0 0.0
        %1150 = vmatpush1.xpose.msra.mxu0 0.0
        %1151 = vmatprep.subr.mxu0 0.0
        %1152 = vmatpush1.xpose.msra.mxu0 0.0
        %1153 = vmatprep.subr.mxu0 0.0
        %1154 = vmatpush1.xpose.msra.mxu0 0.0
        %1155 = vmatprep.subr.mxu0 0.0
        %1156 = vmatpush1.xpose.msra.mxu0 0.0
        %1157 = vmatprep.subr.mxu0 0.0
        %1158 = vmatpush1.xpose.msra.mxu0 0.0
        %1159 = vmatprep.subr.mxu0 0.0
        %1160 = vmatpush1.xpose.msra.mxu0 0.0
        %1161 = vmatprep.subr.mxu0 0.0
        %1162 = vmatpush1.xpose.msra.mxu0 0.0
        %1163 = vmatprep.subr.mxu0 0.0
        %1164 = vmatpush1.xpose.msra.mxu0 0.0
        %1165 = vmatprep.subr.mxu0 0.0
        %1166 = vmatpush1.xpose.msra.mxu0 0.0
        %1167 = vmatprep.subr.mxu0 0.0
        %1168 = vmatpush1.xpose.msra.mxu0 0.0
        %1169 = vmatprep.subr.mxu0 0.0
        %1170 = vmatpush1.xpose.msra.mxu0 0.0
        %1171 = vmatprep.subr.mxu0 0.0
        %1172 = vmatpush1.xpose.msra.mxu0 0.0
        %1173 = vmatprep.subr.mxu0 0.0
        %1174 = vmatpush1.xpose.msra.mxu0 0.0
        %1175 = vmatprep.subr.mxu0 0.0
        %1176 = vmatpush1.xpose.msra.mxu0 0.0
        %1177 = vmatprep.subr.mxu0 0.0
        %1178 = vmatpush1.xpose.msra.mxu0 0.0
        %1179 = vmatprep.mubr.f32.mxu0 0.0
        %1180 = vmatmul.mubr.f32.gmra.mrb[0].mxu0 %v1111
        %v1181 = vpop.f32.mrb[0].mxu0
        %v1182 = vadd.f32 0.0, %v1181
        %v1183 = vpop.f32.mrb[0].mxu0
        %1184 = vdwg.mxu0
        %1185 = vrot.lane.b32.xlu0 %v940, 104
        %v1186 = vpop.permute.xlu0 %1185
        %1187 = vrot.lane.b32.xlu0 %v940, 72
        %v1188 = vpop.permute.xlu0 %1187
        %v1189 = vsel %vm954, %v1186, 0
        %v1191 = vsel %vm954, %v1188, 0
        %1193 = vmatprep.subr.mxu0 0.0
        %1194 = vmatpush1.xpose.msra.mxu0 %v1191
        %1195 = vmatprep.subr.mxu0 0.0
        %1196 = vmatpush1.xpose.msra.mxu0 0.0
        %1197 = vmatprep.subr.mxu0 0.0
        %1198 = vmatpush1.xpose.msra.mxu0 0.0
        %1199 = vmatprep.subr.mxu0 0.0
        %1200 = vmatpush1.xpose.msra.mxu0 0.0
        %1201 = vmatprep.subr.mxu0 0.0
        %1202 = vmatpush1.xpose.msra.mxu0 0.0
        %1203 = vmatprep.subr.mxu0 0.0
        %1204 = vmatpush1.xpose.msra.mxu0 0.0
        %1205 = vmatprep.subr.mxu0 0.0
        %1206 = vmatpush1.xpose.msra.mxu0 0.0
        %1207 = vmatprep.subr.mxu0 0.0
        %1208 = vmatpush1.xpose.msra.mxu0 0.0
        %1209 = vmatprep.subr.mxu0 0.0
        %1210 = vmatpush1.xpose.msra.mxu0 0.0
        %1211 = vmatprep.subr.mxu0 0.0
        %1212 = vmatpush1.xpose.msra.mxu0 0.0
        %1213 = vmatprep.subr.mxu0 0.0
        %1214 = vmatpush1.xpose.msra.mxu0 0.0
        %1215 = vmatprep.subr.mxu0 0.0
        %1216 = vmatpush1.xpose.msra.mxu0 0.0
        %1217 = vmatprep.subr.mxu0 0.0
        %1218 = vmatpush1.xpose.msra.mxu0 0.0
        %1219 = vmatprep.subr.mxu0 0.0
        %1220 = vmatpush1.xpose.msra.mxu0 0.0
        %1221 = vmatprep.subr.mxu0 0.0
        %1222 = vmatpush1.xpose.msra.mxu0 0.0
        %1223 = vmatprep.subr.mxu0 0.0
        %1224 = vmatpush1.xpose.msra.mxu0 0.0
        %1225 = vmatprep.subr.mxu0 0.0
        %1226 = vmatpush1.xpose.msra.mxu0 0.0
        %1227 = vmatprep.subr.mxu0 0.0
        %1228 = vmatpush1.xpose.msra.mxu0 0.0
        %1229 = vmatprep.subr.mxu0 0.0
        %1230 = vmatpush1.xpose.msra.mxu0 0.0
        %1231 = vmatprep.subr.mxu0 0.0
        %1232 = vmatpush1.xpose.msra.mxu0 0.0
        %1233 = vmatprep.subr.mxu0 0.0
        %1234 = vmatpush1.xpose.msra.mxu0 0.0
        %1235 = vmatprep.subr.mxu0 0.0
        %1236 = vmatpush1.xpose.msra.mxu0 0.0
        %1237 = vmatprep.subr.mxu0 0.0
        %1238 = vmatpush1.xpose.msra.mxu0 0.0
        %1239 = vmatprep.subr.mxu0 0.0
        %1240 = vmatpush1.xpose.msra.mxu0 0.0
        %1241 = vmatprep.subr.mxu0 0.0
        %1242 = vmatpush1.xpose.msra.mxu0 0.0
        %1243 = vmatprep.subr.mxu0 0.0
        %1244 = vmatpush1.xpose.msra.mxu0 0.0
        %1245 = vmatprep.subr.mxu0 0.0
        %1246 = vmatpush1.xpose.msra.mxu0 0.0
        %1247 = vmatprep.subr.mxu0 0.0
        %1248 = vmatpush1.xpose.msra.mxu0 0.0
        %1249 = vmatprep.subr.mxu0 0.0
        %1250 = vmatpush1.xpose.msra.mxu0 0.0
        %1251 = vmatprep.subr.mxu0 0.0
        %1252 = vmatpush1.xpose.msra.mxu0 0.0
        %1253 = vmatprep.subr.mxu0 0.0
        %1254 = vmatpush1.xpose.msra.mxu0 0.0
        %1255 = vmatprep.subr.mxu0 0.0
        %1256 = vmatpush1.xpose.msra.mxu0 0.0
        %1257 = vmatprep.mubr.f32.mxu0 0.0
        %1258 = vmatmul.mubr.f32.gmra.mrb[0].mxu0 %v1189
        %v1259 = vpop.f32.mrb[0].mxu0
        %v1260 = vadd.f32 0.0, %v1259
        %v1261 = vpop.f32.mrb[0].mxu0
        %1262 = vdwg.mxu0
        %v1263 = vmul.f32 %v1026, 0.35355338
        %v1264 = vmul.f32 %v1104, 0.35355338
        %v1265 = vmul.f32 %v1182, 0.35355338
        %v1266 = vmul.f32 %v1260, 0.35355338
        %v1267 = vsel %vm954, %v1263, -inf
        %1268 = vmax.xlane.f32.xlu0 %v1267
        %v1269 = vpop.xlane.xlu0 %1268
        %v1270 = vsel %vm954, %v1264, -inf
        %1271 = vmax.xlane.f32.xlu0 %v1270
        %v1272 = vpop.xlane.xlu0 %1271
        %v1273 = vsel %vm954, %v1265, -inf
        %1274 = vmax.xlane.f32.xlu0 %v1273
        %v1275 = vpop.xlane.xlu0 %1274
        %v1276 = vsel %vm954, %v1266, -inf
        %1277 = vmax.xlane.f32.xlu0 %v1276
        %v1278 = vpop.xlane.xlu0 %1277
        %v1279 = vsub.f32 %v1263, %v1269
        %v1280 = vsub.f32 %v1264, %v1272
        %v1281 = vsub.f32 %v1265, %v1275
        %v1282 = vsub.f32 %v1266, %v1278
        %v1283 = vmul.f32 %v1279, 1.442695
        %v1284 = vpow.pop %v1283
        %v1285 = vmul.f32 %v1280, 1.442695
        %v1286 = vpow.pop %v1285
        %v1287 = vmul.f32 %v1281, 1.442695
        %v1288 = vpow.pop %v1287
        %v1289 = vmul.f32 %v1282, 1.442695
        %v1290 = vpow.pop %v1289
        %v1291 = vsel %vm954, %v1284, 0.0
        %1292 = vadd.xlane.f32.xlu0 %v1291
        %v1293 = vpop.xlane.xlu0 %1292
        %v1294 = vsel %vm954, %v1286, 0.0
        %1295 = vadd.xlane.f32.xlu0 %v1294
        %v1296 = vpop.xlane.xlu0 %1295
        %v1297 = vsel %vm954, %v1288, 0.0
        %1298 = vadd.xlane.f32.xlu0 %v1297
        %v1299 = vpop.xlane.xlu0 %1298
        %v1300 = vsel %vm954, %v1290, 0.0
        %1301 = vadd.xlane.f32.xlu0 %v1300
        %v1302 = vpop.xlane.xlu0 %1301
        %v1303 = vrcp.pop %v1293
        %v1304 = vrcp.pop %v1296
        %v1305 = vrcp.pop %v1299
        %v1306 = vrcp.pop %v1302
        %v1307 = vmul.f32 %v1284, %v1303
        %v1308 = vmul.f32 %v1286, %v1304
        %v1309 = vmul.f32 %v1288, %v1305
        %v1310 = vmul.f32 %v1290, %v1306
        %s1312 = vtos %v946
        %v1313 = vstv %s1312
        %v1315 = vmul.f32 %v1307, %v1313
        %v1316 = vrot.slane %v946, 1
        %s1317 = vtos %v1316
        %v1318 = vstv %s1317
        %v1320 = vmul.f32 %v1308, %v1318
        %v1321 = vadd.f32 %v1315, %v1320
        %v1322 = vrot.slane %v946, 2
        %s1323 = vtos %v1322
        %v1324 = vstv %s1323
        %v1326 = vmul.f32 %v1309, %v1324
        %v1327 = vadd.f32 %v1321, %v1326
        %v1328 = vrot.slane %v946, 3
        %s1329 = vtos %v1328
        %v1330 = vstv %s1329
        %v1332 = vmul.f32 %v1310, %v1330
        %v1333 = vadd.f32 %v1327, %v1332
        %1334 = vrot.lane.b32.xlu0 %v946, 127
        %v1335 = vpop.permute.xlu0 %1334
        %s1336 = vtos %v1335
        %v1337 = vstv %s1336
        %v1339 = vmul.f32 %v1307, %v1337
        %1340 = vrot.lane.b32.xlu0 %v1316, 127
        %v1341 = vpop.permute.xlu0 %1340
        %s1342 = vtos %v1341
        %v1343 = vstv %s1342
        %v1345 = vmul.f32 %v1308, %v1343
        %v1346 = vadd.f32 %v1339, %v1345
        %1347 = vrot.lane.b32.xlu0 %v1322, 127
        %v1348 = vpop.permute.xlu0 %1347
        %s1349 = vtos %v1348
        %v1350 = vstv %s1349
        %v1352 = vmul.f32 %v1309, %v1350
        %v1353 = vadd.f32 %v1346, %v1352
        %1354 = vrot.lane.b32.xlu0 %v1328, 127
        %v1355 = vpop.permute.xlu0 %1354
        %s1356 = vtos %v1355
        %v1357 = vstv %s1356
        %v1359 = vmul.f32 %v1310, %v1357
        %v1360 = vadd.f32 %v1353, %v1359
        %1361 = vrot.lane.b32.xlu0 %v946, 126
        %v1362 = vpop.permute.xlu0 %1361
        %s1363 = vtos %v1362
        %v1364 = vstv %s1363
        %v1366 = vmul.f32 %v1307, %v1364
        %1367 = vrot.lane.b32.xlu0 %v1316, 126
        %v1368 = vpop.permute.xlu0 %1367
        %s1369 = vtos %v1368
        %v1370 = vstv %s1369
        %v1372 = vmul.f32 %v1308, %v1370
        %v1373 = vadd.f32 %v1366, %v1372
        %1374 = vrot.lane.b32.xlu0 %v1322, 126
        %v1375 = vpop.permute.xlu0 %1374
        %s1376 = vtos %v1375
        %v1377 = vstv %s1376
        %v1379 = vmul.f32 %v1309, %v1377
        %v1380 = vadd.f32 %v1373, %v1379
        %1381 = vrot.lane.b32.xlu0 %v1328, 126
        %v1382 = vpop.permute.xlu0 %1381
        %s1383 = vtos %v1382
        %v1384 = vstv %s1383
        %v1386 = vmul.f32 %v1310, %v1384
        %v1387 = vadd.f32 %v1380, %v1386
        %1388 = vrot.lane.b32.xlu0 %v946, 125
        %v1389 = vpop.permute.xlu0 %1388
        %s1390 = vtos %v1389
        %v1391 = vstv %s1390
        %v1393 = vmul.f32 %v1307, %v1391
        %1394 = vrot.lane.b32.xlu0 %v1316, 125
        %v1395 = vpop.permute.xlu0 %1394
        %s1396 = vtos %v1395
        %v1397 = vstv %s1396
        %v1399 = vmul.f32 %v1308, %v1397
        %v1400 = vadd.f32 %v1393, %v1399
        %1401 = vrot.lane.b32.xlu0 %v1322, 125
        %v1402 = vpop.permute.xlu0 %1401
        %s1403 = vtos %v1402
        %v1404 = vstv %s1403
        %v1406 = vmul.f32 %v1309, %v1404
        %v1407 = vadd.f32 %v1400, %v1406
        %1408 = vrot.lane.b32.xlu0 %v1328, 125
        %v1409 = vpop.permute.xlu0 %1408
        %s1410 = vtos %v1409
        %v1411 = vstv %s1410
        %v1413 = vmul.f32 %v1310, %v1411
        %v1414 = vadd.f32 %v1407, %v1413
        %v1415 = vadd.f32 %v1333, %v1360
        %v1416 = vadd.f32 %v1415, %v1387
        %v1417 = vadd.f32 %v1416, %v1414
        %v1418 = vmul.f32 %v1417, 0.25
        %v1419 = vsub.f32 %v1333, %v1418
        %v1420 = vmul.f32 %v1419, %v1419
        %v1421 = vsub.f32 %v1360, %v1418
        %v1422 = vmul.f32 %v1421, %v1421
        %v1423 = vadd.f32 %v1420, %v1422
        %v1424 = vsub.f32 %v1387, %v1418
        %v1425 = vmul.f32 %v1424, %v1424
        %v1426 = vadd.f32 %v1423, %v1425
        %v1427 = vsub.f32 %v1414, %v1418
        %v1428 = vmul.f32 %v1427, %v1427
        %v1429 = vadd.f32 %v1426, %v1428
        %v1430 = vmul.f32 %v1429, 0.25
        %v1431 = vadd.f32 %v1430, 1e-05
        %v1432 = vrsqrt.pop %v1431
        %v1433 = vmul.f32 %v1419, %v1432
        %v1435 = vlaneseq
        %v1436 = vshrl.u32 %v1435, 7
        %v1437 = vsub.s32 0, %v1436
        %v1438 = vrot.slane %v947, %v1437
        %1439 = vset.pattern.permute.xlu0 0
        %1440 = vperm.xlu0 %1439, %v1438
        %v1441 = vpop.permute.xlu0 %1440
        %v1443 = vmul.f32 %v1433, %v1441
        %v1445 = vlaneseq
        %v1446 = vshrl.u32 %v1445, 7
        %v1447 = vsub.s32 0, %v1446
        %v1448 = vrot.slane %v948, %v1447
        %1449 = vset.pattern.permute.xlu0 0
        %1450 = vperm.xlu0 %1449, %v1448
        %v1451 = vpop.permute.xlu0 %1450
        %v1453 = vadd.f32 %v1443, %v1451
        %vm1454 = vcmp.ge.s32.totalorder %v950, 0
        %vm1455 = vcmp.lt.s32.totalorder %v950, 8
        %vm1456 = vmand %vm1454, %vm1455
        %v1457 = vsel %vm1456, 1, 0
        %vm1458 = vcmp.eq.s32.totalorder %v1457, 1
        %1459 = vrot.lane.b32.xlu0 %v940, 64
        %v1460 = vpop.permute.xlu0 %1459
        %v1462 = vsel %vm1458, %v1460, 0.0
        %v1463 = vmul.f32 %v1421, %v1432
        %1464 = vset.pattern.permute.xlu0 1
        %1465 = vperm.xlu0 %1464, %v1438
        %v1466 = vpop.permute.xlu0 %1465
        %v1468 = vmul.f32 %v1463, %v1466
        %1469 = vset.pattern.permute.xlu0 1
        %1470 = vperm.xlu0 %1469, %v1448
        %v1471 = vpop.permute.xlu0 %1470
        %v1473 = vadd.f32 %v1468, %v1471
        %vm1474 = vcmp.ge.s32.totalorder %v950, 8
        %vm1475 = vcmp.lt.s32.totalorder %v950, 16
        %vm1476 = vmand %vm1474, %vm1475
        %v1477 = vsel %vm1476, 1, 0
        %vm1478 = vcmp.eq.s32.totalorder %v1477, 1
        %v1479 = vsel %vm1478, %v1460, 0.0
        %v1481 = vsel %vm954, %v1473, 0
        %1483 = vmatprep.subr.mxu0 0.0
        %1484 = vmatpush1.msra.mxu0 %v1479
        %1485 = vmatprep.subr.mxu0 0.0
        %1486 = vmatpush1.msra.mxu0 0.0
        %1487 = vmatprep.subr.mxu0 0.0
        %1488 = vmatpush1.msra.mxu0 0.0
        %1489 = vmatprep.subr.mxu0 0.0
        %1490 = vmatpush1.msra.mxu0 0.0
        %1491 = vmatprep.subr.mxu0 0.0
        %1492 = vmatpush1.msra.mxu0 0.0
        %1493 = vmatprep.subr.mxu0 0.0
        %1494 = vmatpush1.msra.mxu0 0.0
        %1495 = vmatprep.subr.mxu0 0.0
        %1496 = vmatpush1.msra.mxu0 0.0
        %1497 = vmatprep.subr.mxu0 0.0
        %1498 = vmatpush1.msra.mxu0 0.0
        %1499 = vmatprep.subr.mxu0 0.0
        %1500 = vmatpush1.msra.mxu0 0.0
        %1501 = vmatprep.subr.mxu0 0.0
        %1502 = vmatpush1.msra.mxu0 0.0
        %1503 = vmatprep.subr.mxu0 0.0
        %1504 = vmatpush1.msra.mxu0 0.0
        %1505 = vmatprep.subr.mxu0 0.0
        %1506 = vmatpush1.msra.mxu0 0.0
        %1507 = vmatprep.subr.mxu0 0.0
        %1508 = vmatpush1.msra.mxu0 0.0
        %1509 = vmatprep.subr.mxu0 0.0
        %1510 = vmatpush1.msra.mxu0 0.0
        %1511 = vmatprep.subr.mxu0 0.0
        %1512 = vmatpush1.msra.mxu0 0.0
        %1513 = vmatprep.subr.mxu0 0.0
        %1514 = vmatpush1.msra.mxu0 0.0
        %1515 = vmatprep.subr.mxu0 0.0
        %1516 = vmatpush1.msra.mxu0 0.0
        %1517 = vmatprep.subr.mxu0 0.0
        %1518 = vmatpush1.msra.mxu0 0.0
        %1519 = vmatprep.subr.mxu0 0.0
        %1520 = vmatpush1.msra.mxu0 0.0
        %1521 = vmatprep.subr.mxu0 0.0
        %1522 = vmatpush1.msra.mxu0 0.0
        %1523 = vmatprep.subr.mxu0 0.0
        %1524 = vmatpush1.msra.mxu0 0.0
        %1525 = vmatprep.subr.mxu0 0.0
        %1526 = vmatpush1.msra.mxu0 0.0
        %1527 = vmatprep.subr.mxu0 0.0
        %1528 = vmatpush1.msra.mxu0 0.0
        %1529 = vmatprep.subr.mxu0 0.0
        %1530 = vmatpush1.msra.mxu0 0.0
        %1531 = vmatprep.subr.mxu0 0.0
        %1532 = vmatpush1.msra.mxu0 0.0
        %1533 = vmatprep.subr.mxu0 0.0
        %1534 = vmatpush1.msra.mxu0 0.0
        %1535 = vmatprep.subr.mxu0 0.0
        %1536 = vmatpush1.msra.mxu0 0.0
        %1537 = vmatprep.subr.mxu0 0.0
        %1538 = vmatpush1.msra.mxu0 0.0
        %1539 = vmatprep.subr.mxu0 0.0
        %1540 = vmatpush1.msra.mxu0 0.0
        %1541 = vmatprep.subr.mxu0 0.0
        %1542 = vmatpush1.msra.mxu0 0.0
        %1543 = vmatprep.subr.mxu0 0.0
        %1544 = vmatpush1.msra.mxu0 0.0
        %1545 = vmatprep.subr.mxu0 0.0
        %1546 = vmatpush1.msra.mxu0 0.0
        %1547 = vmatprep.mubr.f32.mxu0 0.0
        %1548 = vmatmul.mubr.f32.gmra.mrb[0].mxu0 %v1481
        %v1549 = vpop.f32.mrb[0].mxu0
        %v1550 = vadd.f32 0.0, %v1549
        %v1551 = vpop.f32.mrb[0].mxu0
        %1552 = vdwg.mxu0
        %v1554 = vsel %vm954, %v1453, 0
        %1556 = vmatprep.subr.mxu0 0.0
        %1557 = vmatpush1.msra.mxu0 %v1462
        %1558 = vmatprep.subr.mxu0 0.0
        %1559 = vmatpush1.msra.mxu0 0.0
        %1560 = vmatprep.subr.mxu0 0.0
        %1561 = vmatpush1.msra.mxu0 0.0
        %1562 = vmatprep.subr.mxu0 0.0
        %1563 = vmatpush1.msra.mxu0 0.0
        %1564 = vmatprep.subr.mxu0 0.0
        %1565 = vmatpush1.msra.mxu0 0.0
        %1566 = vmatprep.subr.mxu0 0.0
        %1567 = vmatpush1.msra.mxu0 0.0
        %1568 = vmatprep.subr.mxu0 0.0
        %1569 = vmatpush1.msra.mxu0 0.0
        %1570 = vmatprep.subr.mxu0 0.0
        %1571 = vmatpush1.msra.mxu0 0.0
        %1572 = vmatprep.subr.mxu0 0.0
        %1573 = vmatpush1.msra.mxu0 0.0
        %1574 = vmatprep.subr.mxu0 0.0
        %1575 = vmatpush1.msra.mxu0 0.0
        %1576 = vmatprep.subr.mxu0 0.0
        %1577 = vmatpush1.msra.mxu0 0.0
        %1578 = vmatprep.subr.mxu0 0.0
        %1579 = vmatpush1.msra.mxu0 0.0
        %1580 = vmatprep.subr.mxu0 0.0
        %1581 = vmatpush1.msra.mxu0 0.0
        %1582 = vmatprep.subr.mxu0 0.0
        %1583 = vmatpush1.msra.mxu0 0.0
        %1584 = vmatprep.subr.mxu0 0.0
        %1585 = vmatpush1.msra.mxu0 0.0
        %1586 = vmatprep.subr.mxu0 0.0
        %1587 = vmatpush1.msra.mxu0 0.0
        %1588 = vmatprep.subr.mxu0 0.0
        %1589 = vmatpush1.msra.mxu0 0.0
        %1590 = vmatprep.subr.mxu0 0.0
        %1591 = vmatpush1.msra.mxu0 0.0
        %1592 = vmatprep.subr.mxu0 0.0
        %1593 = vmatpush1.msra.mxu0 0.0
        %1594 = vmatprep.subr.mxu0 0.0
        %1595 = vmatpush1.msra.mxu0 0.0
        %1596 = vmatprep.subr.mxu0 0.0
        %1597 = vmatpush1.msra.mxu0 0.0
        %1598 = vmatprep.subr.mxu0 0.0
        %1599 = vmatpush1.msra.mxu0 0.0
        %1600 = vmatprep.subr.mxu0 0.0
        %1601 = vmatpush1.msra.mxu0 0.0
        %1602 = vmatprep.subr.mxu0 0.0
        %1603 = vmatpush1.msra.mxu0 0.0
        %1604 = vmatprep.subr.mxu0 0.0
        %1605 = vmatpush1.msra.mxu0 0.0
        %1606 = vmatprep.subr.mxu0 0.0
        %1607 = vmatpush1.msra.mxu0 0.0
        %1608 = vmatprep.subr.mxu0 0.0
        %1609 = vmatpush1.msra.mxu0 0.0
        %1610 = vmatprep.subr.mxu0 0.0
        %1611 = vmatpush1.msra.mxu0 0.0
        %1612 = vmatprep.subr.mxu0 0.0
        %1613 = vmatpush1.msra.mxu0 0.0
        %1614 = vmatprep.subr.mxu0 0.0
        %1615 = vmatpush1.msra.mxu0 0.0
        %1616 = vmatprep.subr.mxu0 0.0
        %1617 = vmatpush1.msra.mxu0 0.0
        %1618 = vmatprep.subr.mxu0 0.0
        %1619 = vmatpush1.msra.mxu0 0.0
        %1620 = vmatprep.mubr.f32.mxu0 0.0
        %1621 = vmatmul.mubr.f32.gmra.mrb[0].mxu0 %v1554
        %v1622 = vpop.f32.mrb[0].mxu0
        %v1623 = vadd.f32 %v1550, %v1622
        %v1624 = vpop.f32.mrb[0].mxu0
        %1625 = vdwg.mxu0
        %v1626 = vmul.f32 %v1424, %v1432
        %1627 = vset.pattern.permute.xlu0 2
        %1628 = vperm.xlu0 %1627, %v1438
        %v1629 = vpop.permute.xlu0 %1628
        %v1631 = vmul.f32 %v1626, %v1629
        %1632 = vset.pattern.permute.xlu0 2
        %1633 = vperm.xlu0 %1632, %v1448
        %v1634 = vpop.permute.xlu0 %1633
        %v1636 = vadd.f32 %v1631, %v1634
        %vm1637 = vcmp.ge.s32.totalorder %v950, 16
        %vm1638 = vcmp.lt.s32.totalorder %v950, 24
        %vm1639 = vmand %vm1637, %vm1638
        %v1640 = vsel %vm1639, 1, 0
        %vm1641 = vcmp.eq.s32.totalorder %v1640, 1
        %v1642 = vsel %vm1641, %v1460, 0.0
        %v1644 = vsel %vm954, %v1636, 0
        %1646 = vmatprep.subr.mxu0 0.0
        %1647 = vmatpush1.msra.mxu0 %v1642
        %1648 = vmatprep.subr.mxu0 0.0
        %1649 = vmatpush1.msra.mxu0 0.0
        %1650 = vmatprep.subr.mxu0 0.0
        %1651 = vmatpush1.msra.mxu0 0.0
        %1652 = vmatprep.subr.mxu0 0.0
        %1653 = vmatpush1.msra.mxu0 0.0
        %1654 = vmatprep.subr.mxu0 0.0
        %1655 = vmatpush1.msra.mxu0 0.0
        %1656 = vmatprep.subr.mxu0 0.0
        %1657 = vmatpush1.msra.mxu0 0.0
        %1658 = vmatprep.subr.mxu0 0.0
        %1659 = vmatpush1.msra.mxu0 0.0
        %1660 = vmatprep.subr.mxu0 0.0
        %1661 = vmatpush1.msra.mxu0 0.0
        %1662 = vmatprep.subr.mxu0 0.0
        %1663 = vmatpush1.msra.mxu0 0.0
        %1664 = vmatprep.subr.mxu0 0.0
        %1665 = vmatpush1.msra.mxu0 0.0
        %1666 = vmatprep.subr.mxu0 0.0
        %1667 = vmatpush1.msra.mxu0 0.0
        %1668 = vmatprep.subr.mxu0 0.0
        %1669 = vmatpush1.msra.mxu0 0.0
        %1670 = vmatprep.subr.mxu0 0.0
        %1671 = vmatpush1.msra.mxu0 0.0
        %1672 = vmatprep.subr.mxu0 0.0
        %1673 = vmatpush1.msra.mxu0 0.0
        %1674 = vmatprep.subr.mxu0 0.0
        %1675 = vmatpush1.msra.mxu0 0.0
        %1676 = vmatprep.subr.mxu0 0.0
        %1677 = vmatpush1.msra.mxu0 0.0
        %1678 = vmatprep.subr.mxu0 0.0
        %1679 = vmatpush1.msra.mxu0 0.0
        %1680 = vmatprep.subr.mxu0 0.0
        %1681 = vmatpush1.msra.mxu0 0.0
        %1682 = vmatprep.subr.mxu0 0.0
        %1683 = vmatpush1.msra.mxu0 0.0
        %1684 = vmatprep.subr.mxu0 0.0
        %1685 = vmatpush1.msra.mxu0 0.0
        %1686 = vmatprep.subr.mxu0 0.0
        %1687 = vmatpush1.msra.mxu0 0.0
        %1688 = vmatprep.subr.mxu0 0.0
        %1689 = vmatpush1.msra.mxu0 0.0
        %1690 = vmatprep.subr.mxu0 0.0
        %1691 = vmatpush1.msra.mxu0 0.0
        %1692 = vmatprep.subr.mxu0 0.0
        %1693 = vmatpush1.msra.mxu0 0.0
        %1694 = vmatprep.subr.mxu0 0.0
        %1695 = vmatpush1.msra.mxu0 0.0
        %1696 = vmatprep.subr.mxu0 0.0
        %1697 = vmatpush1.msra.mxu0 0.0
        %1698 = vmatprep.subr.mxu0 0.0
        %1699 = vmatpush1.msra.mxu0 0.0
        %1700 = vmatprep.subr.mxu0 0.0
        %1701 = vmatpush1.msra.mxu0 0.0
        %1702 = vmatprep.subr.mxu0 0.0
        %1703 = vmatpush1.msra.mxu0 0.0
        %1704 = vmatprep.subr.mxu0 0.0
        %1705 = vmatpush1.msra.mxu0 0.0
        %1706 = vmatprep.subr.mxu0 0.0
        %1707 = vmatpush1.msra.mxu0 0.0
        %1708 = vmatprep.subr.mxu0 0.0
        %1709 = vmatpush1.msra.mxu0 0.0
        %1710 = vmatprep.mubr.f32.mxu0 0.0
        %1711 = vmatmul.mubr.f32.gmra.mrb[0].mxu0 %v1644
        %v1712 = vpop.f32.mrb[0].mxu0
        %v1713 = vadd.f32 0.0, %v1712
        %v1714 = vpop.f32.mrb[0].mxu0
        %1715 = vdwg.mxu0
        %v1716 = vadd.f32 %v1623, %v1713
        %v1717 = vmul.f32 %v1427, %v1432
        %1718 = vset.pattern.permute.xlu0 3
        %1719 = vperm.xlu0 %1718, %v1438
        %v1720 = vpop.permute.xlu0 %1719
        %v1722 = vmul.f32 %v1717, %v1720
        %1723 = vset.pattern.permute.xlu0 3
        %1724 = vperm.xlu0 %1723, %v1448
        %v1725 = vpop.permute.xlu0 %1724
        %v1727 = vadd.f32 %v1722, %v1725
        %vm1728 = vcmp.ge.s32.totalorder %v950, 24
        %vm1729 = vcmp.lt.s32.totalorder %v950, 32
        %vm1730 = vmand %vm1728, %vm1729
        %v1731 = vsel %vm1730, 1, 0
        %vm1732 = vcmp.eq.s32.totalorder %v1731, 1
        %v1733 = vsel %vm1732, %v1460, 0.0
        %v1735 = vsel %vm954, %v1727, 0
        %1737 = vmatprep.subr.mxu0 0.0
        %1738 = vmatpush1.msra.mxu0 %v1733
        %1739 = vmatprep.subr.mxu0 0.0
        %1740 = vmatpush1.msra.mxu0 0.0
        %1741 = vmatprep.subr.mxu0 0.0
        %1742 = vmatpush1.msra.mxu0 0.0
        %1743 = vmatprep.subr.mxu0 0.0
        %1744 = vmatpush1.msra.mxu0 0.0
        %1745 = vmatprep.subr.mxu0 0.0
        %1746 = vmatpush1.msra.mxu0 0.0
        %1747 = vmatprep.subr.mxu0 0.0
        %1748 = vmatpush1.msra.mxu0 0.0
        %1749 = vmatprep.subr.mxu0 0.0
        %1750 = vmatpush1.msra.mxu0 0.0
        %1751 = vmatprep.subr.mxu0 0.0
        %1752 = vmatpush1.msra.mxu0 0.0
        %1753 = vmatprep.subr.mxu0 0.0
        %1754 = vmatpush1.msra.mxu0 0.0
        %1755 = vmatprep.subr.mxu0 0.0
        %1756 = vmatpush1.msra.mxu0 0.0
        %1757 = vmatprep.subr.mxu0 0.0
        %1758 = vmatpush1.msra.mxu0 0.0
        %1759 = vmatprep.subr.mxu0 0.0
        %1760 = vmatpush1.msra.mxu0 0.0
        %1761 = vmatprep.subr.mxu0 0.0
        %1762 = vmatpush1.msra.mxu0 0.0
        %1763 = vmatprep.subr.mxu0 0.0
        %1764 = vmatpush1.msra.mxu0 0.0
        %1765 = vmatprep.subr.mxu0 0.0
        %1766 = vmatpush1.msra.mxu0 0.0
        %1767 = vmatprep.subr.mxu0 0.0
        %1768 = vmatpush1.msra.mxu0 0.0
        %1769 = vmatprep.subr.mxu0 0.0
        %1770 = vmatpush1.msra.mxu0 0.0
        %1771 = vmatprep.subr.mxu0 0.0
        %1772 = vmatpush1.msra.mxu0 0.0
        %1773 = vmatprep.subr.mxu0 0.0
        %1774 = vmatpush1.msra.mxu0 0.0
        %1775 = vmatprep.subr.mxu0 0.0
        %1776 = vmatpush1.msra.mxu0 0.0
        %1777 = vmatprep.subr.mxu0 0.0
        %1778 = vmatpush1.msra.mxu0 0.0
        %1779 = vmatprep.subr.mxu0 0.0
        %1780 = vmatpush1.msra.mxu0 0.0
        %1781 = vmatprep.subr.mxu0 0.0
        %1782 = vmatpush1.msra.mxu0 0.0
        %1783 = vmatprep.subr.mxu0 0.0
        %1784 = vmatpush1.msra.mxu0 0.0
        %1785 = vmatprep.subr.mxu0 0.0
        %1786 = vmatpush1.msra.mxu0 0.0
        %1787 = vmatprep.subr.mxu0 0.0
        %1788 = vmatpush1.msra.mxu0 0.0
        %1789 = vmatprep.subr.mxu0 0.0
        %1790 = vmatpush1.msra.mxu0 0.0
        %1791 = vmatprep.subr.mxu0 0.0
        %1792 = vmatpush1.msra.mxu0 0.0
        %1793 = vmatprep.subr.mxu0 0.0
        %1794 = vmatpush1.msra.mxu0 0.0
        %1795 = vmatprep.subr.mxu0 0.0
        %1796 = vmatpush1.msra.mxu0 0.0
        %1797 = vmatprep.subr.mxu0 0.0
        %1798 = vmatpush1.msra.mxu0 0.0
        %1799 = vmatprep.subr.mxu0 0.0
        %1800 = vmatpush1.msra.mxu0 0.0
        %1801 = vmatprep.mubr.f32.mxu0 0.0
        %1802 = vmatmul.mubr.f32.gmra.mrb[0].mxu0 %v1735
        %v1803 = vpop.f32.mrb[0].mxu0
        %v1804 = vadd.f32 0.0, %v1803
        %v1805 = vpop.f32.mrb[0].mxu0
        %1806 = vdwg.mxu0
        %v1807 = vadd.f32 %v1716, %v1804
        %1809 = vrot.lane.b32.xlu0 %v943, 96
        %v1810 = vpop.permute.xlu0 %1809
        %v1811 = vsel %vm954, %v943, 0
        %v1813 = vsel %vm954, %v1810, 0
        %1815 = vmatprep.subr.mxu0 0.0
        %1816 = vmatpush1.xpose.msra.mxu0 %v1813
        %1817 = vmatprep.subr.mxu0 0.0
        %1818 = vmatpush1.xpose.msra.mxu0 0.0
        %1819 = vmatprep.subr.mxu0 0.0
        %1820 = vmatpush1.xpose.msra.mxu0 0.0
        %1821 = vmatprep.subr.mxu0 0.0
        %1822 = vmatpush1.xpose.msra.mxu0 0.0
        %1823 = vmatprep.subr.mxu0 0.0
        %1824 = vmatpush1.xpose.msra.mxu0 0.0
        %1825 = vmatprep.subr.mxu0 0.0
        %1826 = vmatpush1.xpose.msra.mxu0 0.0
        %1827 = vmatprep.subr.mxu0 0.0
        %1828 = vmatpush1.xpose.msra.mxu0 0.0
        %1829 = vmatprep.subr.mxu0 0.0
        %1830 = vmatpush1.xpose.msra.mxu0 0.0
        %1831 = vmatprep.subr.mxu0 0.0
        %1832 = vmatpush1.xpose.msra.mxu0 0.0
        %1833 = vmatprep.subr.mxu0 0.0
        %1834 = vmatpush1.xpose.msra.mxu0 0.0
        %1835 = vmatprep.subr.mxu0 0.0
        %1836 = vmatpush1.xpose.msra.mxu0 0.0
        %1837 = vmatprep.subr.mxu0 0.0
        %1838 = vmatpush1.xpose.msra.mxu0 0.0
        %1839 = vmatprep.subr.mxu0 0.0
        %1840 = vmatpush1.xpose.msra.mxu0 0.0
        %1841 = vmatprep.subr.mxu0 0.0
        %1842 = vmatpush1.xpose.msra.mxu0 0.0
        %1843 = vmatprep.subr.mxu0 0.0
        %1844 = vmatpush1.xpose.msra.mxu0 0.0
        %1845 = vmatprep.subr.mxu0 0.0
        %1846 = vmatpush1.xpose.msra.mxu0 0.0
        %1847 = vmatprep.subr.mxu0 0.0
        %1848 = vmatpush1.xpose.msra.mxu0 0.0
        %1849 = vmatprep.subr.mxu0 0.0
        %1850 = vmatpush1.xpose.msra.mxu0 0.0
        %1851 = vmatprep.subr.mxu0 0.0
        %1852 = vmatpush1.xpose.msra.mxu0 0.0
        %1853 = vmatprep.subr.mxu0 0.0
        %1854 = vmatpush1.xpose.msra.mxu0 0.0
        %1855 = vmatprep.subr.mxu0 0.0
        %1856 = vmatpush1.xpose.msra.mxu0 0.0
        %1857 = vmatprep.subr.mxu0 0.0
        %1858 = vmatpush1.xpose.msra.mxu0 0.0
        %1859 = vmatprep.subr.mxu0 0.0
        %1860 = vmatpush1.xpose.msra.mxu0 0.0
        %1861 = vmatprep.subr.mxu0 0.0
        %1862 = vmatpush1.xpose.msra.mxu0 0.0
        %1863 = vmatprep.subr.mxu0 0.0
        %1864 = vmatpush1.xpose.msra.mxu0 0.0
        %1865 = vmatprep.subr.mxu0 0.0
        %1866 = vmatpush1.xpose.msra.mxu0 0.0
        %1867 = vmatprep.subr.mxu0 0.0
        %1868 = vmatpush1.xpose.msra.mxu0 0.0
        %1869 = vmatprep.subr.mxu0 0.0
        %1870 = vmatpush1.xpose.msra.mxu0 0.0
        %1871 = vmatprep.subr.mxu0 0.0
        %1872 = vmatpush1.xpose.msra.mxu0 0.0
        %1873 = vmatprep.subr.mxu0 0.0
        %1874 = vmatpush1.xpose.msra.mxu0 0.0
        %1875 = vmatprep.subr.mxu0 0.0
        %1876 = vmatpush1.xpose.msra.mxu0 0.0
        %1877 = vmatprep.subr.mxu0 0.0
        %1878 = vmatpush1.xpose.msra.mxu0 0.0
        %1879 = vmatprep.mubr.f32.mxu0 0.0
        %1880 = vmatmul.mubr.f32.gmra.mrb[0].mxu0 %v1811
        %v1881 = vpop.f32.mrb[0].mxu0
        %v1882 = vadd.f32 0.0, %v1881
        %v1883 = vpop.f32.mrb[0].mxu0
        %1884 = vdwg.mxu0
        %1885 = vrot.lane.b32.xlu0 %v943, 120
        %v1886 = vpop.permute.xlu0 %1885
        %1887 = vrot.lane.b32.xlu0 %v943, 88
        %v1888 = vpop.permute.xlu0 %1887
        %v1889 = vsel %vm954, %v1886, 0
        %v1891 = vsel %vm954, %v1888, 0
        %1893 = vmatprep.subr.mxu0 0.0
        %1894 = vmatpush1.xpose.msra.mxu0 %v1891
        %1895 = vmatprep.subr.mxu0 0.0
        %1896 = vmatpush1.xpose.msra.mxu0 0.0
        %1897 = vmatprep.subr.mxu0 0.0
        %1898 = vmatpush1.xpose.msra.mxu0 0.0
        %1899 = vmatprep.subr.mxu0 0.0
        %1900 = vmatpush1.xpose.msra.mxu0 0.0
        %1901 = vmatprep.subr.mxu0 0.0
        %1902 = vmatpush1.xpose.msra.mxu0 0.0
        %1903 = vmatprep.subr.mxu0 0.0
        %1904 = vmatpush1.xpose.msra.mxu0 0.0
        %1905 = vmatprep.subr.mxu0 0.0
        %1906 = vmatpush1.xpose.msra.mxu0 0.0
        %1907 = vmatprep.subr.mxu0 0.0
        %1908 = vmatpush1.xpose.msra.mxu0 0.0
        %1909 = vmatprep.subr.mxu0 0.0
        %1910 = vmatpush1.xpose.msra.mxu0 0.0
        %1911 = vmatprep.subr.mxu0 0.0
        %1912 = vmatpush1.xpose.msra.mxu0 0.0
        %1913 = vmatprep.subr.mxu0 0.0
        %1914 = vmatpush1.xpose.msra.mxu0 0.0
        %1915 = vmatprep.subr.mxu0 0.0
        %1916 = vmatpush1.xpose.msra.mxu0 0.0
        %1917 = vmatprep.subr.mxu0 0.0
        %1918 = vmatpush1.xpose.msra.mxu0 0.0
        %1919 = vmatprep.subr.mxu0 0.0
        %1920 = vmatpush1.xpose.msra.mxu0 0.0
        %1921 = vmatprep.subr.mxu0 0.0
        %1922 = vmatpush1.xpose.msra.mxu0 0.0
        %1923 = vmatprep.subr.mxu0 0.0
        %1924 = vmatpush1.xpose.msra.mxu0 0.0
        %1925 = vmatprep.subr.mxu0 0.0
        %1926 = vmatpush1.xpose.msra.mxu0 0.0
        %1927 = vmatprep.subr.mxu0 0.0
        %1928 = vmatpush1.xpose.msra.mxu0 0.0
        %1929 = vmatprep.subr.mxu0 0.0
        %1930 = vmatpush1.xpose.msra.mxu0 0.0
        %1931 = vmatprep.subr.mxu0 0.0
        %1932 = vmatpush1.xpose.msra.mxu0 0.0
        %1933 = vmatprep.subr.mxu0 0.0
        %1934 = vmatpush1.xpose.msra.mxu0 0.0
        %1935 = vmatprep.subr.mxu0 0.0
        %1936 = vmatpush1.xpose.msra.mxu0 0.0
        %1937 = vmatprep.subr.mxu0 0.0
        %1938 = vmatpush1.xpose.msra.mxu0 0.0
        %1939 = vmatprep.subr.mxu0 0.0
        %1940 = vmatpush1.xpose.msra.mxu0 0.0
        %1941 = vmatprep.subr.mxu0 0.0
        %1942 = vmatpush1.xpose.msra.mxu0 0.0
        %1943 = vmatprep.subr.mxu0 0.0
        %1944 = vmatpush1.xpose.msra.mxu0 0.0
        %1945 = vmatprep.subr.mxu0 0.0
        %1946 = vmatpush1.xpose.msra.mxu0 0.0
        %1947 = vmatprep.subr.mxu0 0.0
        %1948 = vmatpush1.xpose.msra.mxu0 0.0
        %1949 = vmatprep.subr.mxu0 0.0
        %1950 = vmatpush1.xpose.msra.mxu0 0.0
        %1951 = vmatprep.subr.mxu0 0.0
        %1952 = vmatpush1.xpose.msra.mxu0 0.0
        %1953 = vmatprep.subr.mxu0 0.0
        %1954 = vmatpush1.xpose.msra.mxu0 0.0
        %1955 = vmatprep.subr.mxu0 0.0
        %1956 = vmatpush1.xpose.msra.mxu0 0.0
        %1957 = vmatprep.mubr.f32.mxu0 0.0
        %1958 = vmatmul.mubr.f32.gmra.mrb[0].mxu0 %v1889
        %v1959 = vpop.f32.mrb[0].mxu0
        %v1960 = vadd.f32 0.0, %v1959
        %v1961 = vpop.f32.mrb[0].mxu0
        %1962 = vdwg.mxu0
        %1963 = vrot.lane.b32.xlu0 %v943, 112
        %v1964 = vpop.permute.xlu0 %1963
        %1965 = vrot.lane.b32.xlu0 %v943, 80
        %v1966 = vpop.permute.xlu0 %1965
        %v1967 = vsel %vm954, %v1964, 0
        %v1969 = vsel %vm954, %v1966, 0
        %1971 = vmatprep.subr.mxu0 0.0
        %1972 = vmatpush1.xpose.msra.mxu0 %v1969
        %1973 = vmatprep.subr.mxu0 0.0
        %1974 = vmatpush1.xpose.msra.mxu0 0.0
        %1975 = vmatprep.subr.mxu0 0.0
        %1976 = vmatpush1.xpose.msra.mxu0 0.0
        %1977 = vmatprep.subr.mxu0 0.0
        %1978 = vmatpush1.xpose.msra.mxu0 0.0
        %1979 = vmatprep.subr.mxu0 0.0
        %1980 = vmatpush1.xpose.msra.mxu0 0.0
        %1981 = vmatprep.subr.mxu0 0.0
        %1982 = vmatpush1.xpose.msra.mxu0 0.0
        %1983 = vmatprep.subr.mxu0 0.0
        %1984 = vmatpush1.xpose.msra.mxu0 0.0
        %1985 = vmatprep.subr.mxu0 0.0
        %1986 = vmatpush1.xpose.msra.mxu0 0.0
        %1987 = vmatprep.subr.mxu0 0.0
        %1988 = vmatpush1.xpose.msra.mxu0 0.0
        %1989 = vmatprep.subr.mxu0 0.0
        %1990 = vmatpush1.xpose.msra.mxu0 0.0
        %1991 = vmatprep.subr.mxu0 0.0
        %1992 = vmatpush1.xpose.msra.mxu0 0.0
        %1993 = vmatprep.subr.mxu0 0.0
        %1994 = vmatpush1.xpose.msra.mxu0 0.0
        %1995 = vmatprep.subr.mxu0 0.0
        %1996 = vmatpush1.xpose.msra.mxu0 0.0
        %1997 = vmatprep.subr.mxu0 0.0
        %1998 = vmatpush1.xpose.msra.mxu0 0.0
        %1999 = vmatprep.subr.mxu0 0.0
        %2000 = vmatpush1.xpose.msra.mxu0 0.0
        %2001 = vmatprep.subr.mxu0 0.0
        %2002 = vmatpush1.xpose.msra.mxu0 0.0
        %2003 = vmatprep.subr.mxu0 0.0
        %2004 = vmatpush1.xpose.msra.mxu0 0.0
        %2005 = vmatprep.subr.mxu0 0.0
        %2006 = vmatpush1.xpose.msra.mxu0 0.0
        %2007 = vmatprep.subr.mxu0 0.0
        %2008 = vmatpush1.xpose.msra.mxu0 0.0
        %2009 = vmatprep.subr.mxu0 0.0
        %2010 = vmatpush1.xpose.msra.mxu0 0.0
        %2011 = vmatprep.subr.mxu0 0.0
        %2012 = vmatpush1.xpose.msra.mxu0 0.0
        %2013 = vmatprep.subr.mxu0 0.0
        %2014 = vmatpush1.xpose.msra.mxu0 0.0
        %2015 = vmatprep.subr.mxu0 0.0
        %2016 = vmatpush1.xpose.msra.mxu0 0.0
        %2017 = vmatprep.subr.mxu0 0.0
        %2018 = vmatpush1.xpose.msra.mxu0 0.0
        %2019 = vmatprep.subr.mxu0 0.0
        %2020 = vmatpush1.xpose.msra.mxu0 0.0
        %2021 = vmatprep.subr.mxu0 0.0
        %2022 = vmatpush1.xpose.msra.mxu0 0.0
        %2023 = vmatprep.subr.mxu0 0.0
        %2024 = vmatpush1.xpose.msra.mxu0 0.0
        %2025 = vmatprep.subr.mxu0 0.0
        %2026 = vmatpush1.xpose.msra.mxu0 0.0
        %2027 = vmatprep.subr.mxu0 0.0
        %2028 = vmatpush1.xpose.msra.mxu0 0.0
        %2029 = vmatprep.subr.mxu0 0.0
        %2030 = vmatpush1.xpose.msra.mxu0 0.0
        %2031 = vmatprep.subr.mxu0 0.0
        %2032 = vmatpush1.xpose.msra.mxu0 0.0
        %2033 = vmatprep.subr.mxu0 0.0
        %2034 = vmatpush1.xpose.msra.mxu0 0.0
        %2035 = vmatprep.mubr.f32.mxu0 0.0
        %2036 = vmatmul.mubr.f32.gmra.mrb[0].mxu0 %v1967
        %v2037 = vpop.f32.mrb[0].mxu0
        %v2038 = vadd.f32 0.0, %v2037
        %v2039 = vpop.f32.mrb[0].mxu0
        %2040 = vdwg.mxu0
        %2041 = vrot.lane.b32.xlu0 %v943, 104
        %v2042 = vpop.permute.xlu0 %2041
        %2043 = vrot.lane.b32.xlu0 %v943, 72
        %v2044 = vpop.permute.xlu0 %2043
        %v2045 = vsel %vm954, %v2042, 0
        %v2047 = vsel %vm954, %v2044, 0
        %2049 = vmatprep.subr.mxu0 0.0
        %2050 = vmatpush1.xpose.msra.mxu0 %v2047
        %2051 = vmatprep.subr.mxu0 0.0
        %2052 = vmatpush1.xpose.msra.mxu0 0.0
        %2053 = vmatprep.subr.mxu0 0.0
        %2054 = vmatpush1.xpose.msra.mxu0 0.0
        %2055 = vmatprep.subr.mxu0 0.0
        %2056 = vmatpush1.xpose.msra.mxu0 0.0
        %2057 = vmatprep.subr.mxu0 0.0
        %2058 = vmatpush1.xpose.msra.mxu0 0.0
        %2059 = vmatprep.subr.mxu0 0.0
        %2060 = vmatpush1.xpose.msra.mxu0 0.0
        %2061 = vmatprep.subr.mxu0 0.0
        %2062 = vmatpush1.xpose.msra.mxu0 0.0
        %2063 = vmatprep.subr.mxu0 0.0
        %2064 = vmatpush1.xpose.msra.mxu0 0.0
        %2065 = vmatprep.subr.mxu0 0.0
        %2066 = vmatpush1.xpose.msra.mxu0 0.0
        %2067 = vmatprep.subr.mxu0 0.0
        %2068 = vmatpush1.xpose.msra.mxu0 0.0
        %2069 = vmatprep.subr.mxu0 0.0
        %2070 = vmatpush1.xpose.msra.mxu0 0.0
        %2071 = vmatprep.subr.mxu0 0.0
        %2072 = vmatpush1.xpose.msra.mxu0 0.0
        %2073 = vmatprep.subr.mxu0 0.0
        %2074 = vmatpush1.xpose.msra.mxu0 0.0
        %2075 = vmatprep.subr.mxu0 0.0
        %2076 = vmatpush1.xpose.msra.mxu0 0.0
        %2077 = vmatprep.subr.mxu0 0.0
        %2078 = vmatpush1.xpose.msra.mxu0 0.0
        %2079 = vmatprep.subr.mxu0 0.0
        %2080 = vmatpush1.xpose.msra.mxu0 0.0
        %2081 = vmatprep.subr.mxu0 0.0
        %2082 = vmatpush1.xpose.msra.mxu0 0.0
        %2083 = vmatprep.subr.mxu0 0.0
        %2084 = vmatpush1.xpose.msra.mxu0 0.0
        %2085 = vmatprep.subr.mxu0 0.0
        %2086 = vmatpush1.xpose.msra.mxu0 0.0
        %2087 = vmatprep.subr.mxu0 0.0
        %2088 = vmatpush1.xpose.msra.mxu0 0.0
        %2089 = vmatprep.subr.mxu0 0.0
        %2090 = vmatpush1.xpose.msra.mxu0 0.0
        %2091 = vmatprep.subr.mxu0 0.0
        %2092 = vmatpush1.xpose.msra.mxu0 0.0
        %2093 = vmatprep.subr.mxu0 0.0
        %2094 = vmatpush1.xpose.msra.mxu0 0.0
        %2095 = vmatprep.subr.mxu0 0.0
        %2096 = vmatpush1.xpose.msra.mxu0 0.0
        %2097 = vmatprep.subr.mxu0 0.0
        %2098 = vmatpush1.xpose.msra.mxu0 0.0
        %2099 = vmatprep.subr.mxu0 0.0
        %2100 = vmatpush1.xpose.msra.mxu0 0.0
        %2101 = vmatprep.subr.mxu0 0.0
        %2102 = vmatpush1.xpose.msra.mxu0 0.0
        %2103 = vmatprep.subr.mxu0 0.0
        %2104 = vmatpush1.xpose.msra.mxu0 0.0
        %2105 = vmatprep.subr.mxu0 0.0
        %2106 = vmatpush1.xpose.msra.mxu0 0.0
        %2107 = vmatprep.subr.mxu0 0.0
        %2108 = vmatpush1.xpose.msra.mxu0 0.0
        %2109 = vmatprep.subr.mxu0 0.0
        %2110 = vmatpush1.xpose.msra.mxu0 0.0
        %2111 = vmatprep.subr.mxu0 0.0
        %2112 = vmatpush1.xpose.msra.mxu0 0.0
        %2113 = vmatprep.mubr.f32.mxu0 0.0
        %2114 = vmatmul.mubr.f32.gmra.mrb[0].mxu0 %v2045
        %v2115 = vpop.f32.mrb[0].mxu0
        %v2116 = vadd.f32 0.0, %v2115
        %v2117 = vpop.f32.mrb[0].mxu0
        %2118 = vdwg.mxu0
        %v2119 = vmul.f32 %v1882, 0.35355338
        %v2120 = vmul.f32 %v1960, 0.35355338
        %v2121 = vmul.f32 %v2038, 0.35355338
        %v2122 = vmul.f32 %v2116, 0.35355338
        %v2123 = vsel %vm954, %v2119, -inf
        %2124 = vmax.xlane.f32.xlu0 %v2123
        %v2125 = vpop.xlane.xlu0 %2124
        %v2126 = vsel %vm954, %v2120, -inf
        %2127 = vmax.xlane.f32.xlu0 %v2126
        %v2128 = vpop.xlane.xlu0 %2127
        %v2129 = vsel %vm954, %v2121, -inf
        %2130 = vmax.xlane.f32.xlu0 %v2129
        %v2131 = vpop.xlane.xlu0 %2130
        %v2132 = vsel %vm954, %v2122, -inf
        %2133 = vmax.xlane.f32.xlu0 %v2132
        %v2134 = vpop.xlane.xlu0 %2133
        %v2135 = vsub.f32 %v2119, %v2125
        %v2136 = vsub.f32 %v2120, %v2128
        %v2137 = vsub.f32 %v2121, %v2131
        %v2138 = vsub.f32 %v2122, %v2134
        %v2139 = vmul.f32 %v2135, 1.442695
        %v2140 = vpow.pop %v2139
        %v2141 = vmul.f32 %v2136, 1.442695
        %v2142 = vpow.pop %v2141
        %v2143 = vmul.f32 %v2137, 1.442695
        %v2144 = vpow.pop %v2143
        %v2145 = vmul.f32 %v2138, 1.442695
        %v2146 = vpow.pop %v2145
        %v2147 = vsel %vm954, %v2140, 0.0
        %2148 = vadd.xlane.f32.xlu0 %v2147
        %v2149 = vpop.xlane.xlu0 %2148
        %v2150 = vsel %vm954, %v2142, 0.0
        %2151 = vadd.xlane.f32.xlu0 %v2150
        %v2152 = vpop.xlane.xlu0 %2151
        %v2153 = vsel %vm954, %v2144, 0.0
        %2154 = vadd.xlane.f32.xlu0 %v2153
        %v2155 = vpop.xlane.xlu0 %2154
        %v2156 = vsel %vm954, %v2146, 0.0
        %2157 = vadd.xlane.f32.xlu0 %v2156
        %v2158 = vpop.xlane.xlu0 %2157
        %v2159 = vrcp.pop %v2149
        %v2160 = vrcp.pop %v2152
        %v2161 = vrcp.pop %v2155
        %v2162 = vrcp.pop %v2158
        %v2163 = vmul.f32 %v2140, %v2159
        %v2164 = vmul.f32 %v2142, %v2160
        %v2165 = vmul.f32 %v2144, %v2161
        %v2166 = vmul.f32 %v2146, %v2162
        %v2167 = vmul.f32 %v2163, %v1313
        %v2168 = vmul.f32 %v2164, %v1318
        %v2169 = vadd.f32 %v2167, %v2168
        %v2170 = vmul.f32 %v2165, %v1324
        %v2171 = vadd.f32 %v2169, %v2170
        %v2172 = vmul.f32 %v2166, %v1330
        %v2173 = vadd.f32 %v2171, %v2172
        %v2174 = vmul.f32 %v2163, %v1337
        %v2175 = vmul.f32 %v2164, %v1343
        %v2176 = vadd.f32 %v2174, %v2175
        %v2177 = vmul.f32 %v2165, %v1350
        %v2178 = vadd.f32 %v2176, %v2177
        %v2179 = vmul.f32 %v2166, %v1357
        %v2180 = vadd.f32 %v2178, %v2179
        %v2181 = vmul.f32 %v2163, %v1364
        %v2182 = vmul.f32 %v2164, %v1370
        %v2183 = vadd.f32 %v2181, %v2182
        %v2184 = vmul.f32 %v2165, %v1377
        %v2185 = vadd.f32 %v2183, %v2184
        %v2186 = vmul.f32 %v2166, %v1384
        %v2187 = vadd.f32 %v2185, %v2186
        %v2188 = vmul.f32 %v2163, %v1391
        %v2189 = vmul.f32 %v2164, %v1397
        %v2190 = vadd.f32 %v2188, %v2189
        %v2191 = vmul.f32 %v2165, %v1404
        %v2192 = vadd.f32 %v2190, %v2191
        %v2193 = vmul.f32 %v2166, %v1411
        %v2194 = vadd.f32 %v2192, %v2193
        %v2195 = vadd.f32 %v2173, %v2180
        %v2196 = vadd.f32 %v2195, %v2187
        %v2197 = vadd.f32 %v2196, %v2194
        %v2198 = vmul.f32 %v2197, 0.25
        %v2199 = vsub.f32 %v2173, %v2198
        %v2200 = vmul.f32 %v2199, %v2199
        %v2201 = vsub.f32 %v2180, %v2198
        %v2202 = vmul.f32 %v2201, %v2201
        %v2203 = vadd.f32 %v2200, %v2202
        %v2204 = vsub.f32 %v2187, %v2198
        %v2205 = vmul.f32 %v2204, %v2204
        %v2206 = vadd.f32 %v2203, %v2205
        %v2207 = vsub.f32 %v2194, %v2198
        %v2208 = vmul.f32 %v2207, %v2207
        %v2209 = vadd.f32 %v2206, %v2208
        %v2210 = vmul.f32 %v2209, 0.25
        %v2211 = vadd.f32 %v2210, 1e-05
        %v2212 = vrsqrt.pop %v2211
        %v2213 = vmul.f32 %v2199, %v2212
        %v2214 = vmul.f32 %v2213, %v1441
        %v2215 = vadd.f32 %v2214, %v1451
        %2216 = vrot.lane.b32.xlu0 %v943, 64
        %v2217 = vpop.permute.xlu0 %2216
        %v2219 = vsel %vm1458, %v2217, 0.0
        %v2220 = vmul.f32 %v2201, %v2212
        %v2221 = vmul.f32 %v2220, %v1466
        %v2222 = vadd.f32 %v2221, %v1471
        %v2223 = vsel %vm1478, %v2217, 0.0
        %v2225 = vsel %vm954, %v2222, 0
        %2227 = vmatprep.subr.mxu0 0.0
        %2228 = vmatpush1.msra.mxu0 %v2223
        %2229 = vmatprep.subr.mxu0 0.0
        %2230 = vmatpush1.msra.mxu0 0.0
        %2231 = vmatprep.subr.mxu0 0.0
        %2232 = vmatpush1.msra.mxu0 0.0
        %2233 = vmatprep.subr.mxu0 0.0
        %2234 = vmatpush1.msra.mxu0 0.0
        %2235 = vmatprep.subr.mxu0 0.0
        %2236 = vmatpush1.msra.mxu0 0.0
        %2237 = vmatprep.subr.mxu0 0.0
        %2238 = vmatpush1.msra.mxu0 0.0
        %2239 = vmatprep.subr.mxu0 0.0
        %2240 = vmatpush1.msra.mxu0 0.0
        %2241 = vmatprep.subr.mxu0 0.0
        %2242 = vmatpush1.msra.mxu0 0.0
        %2243 = vmatprep.subr.mxu0 0.0
        %2244 = vmatpush1.msra.mxu0 0.0
        %2245 = vmatprep.subr.mxu0 0.0
        %2246 = vmatpush1.msra.mxu0 0.0
        %2247 = vmatprep.subr.mxu0 0.0
        %2248 = vmatpush1.msra.mxu0 0.0
        %2249 = vmatprep.subr.mxu0 0.0
        %2250 = vmatpush1.msra.mxu0 0.0
        %2251 = vmatprep.subr.mxu0 0.0
        %2252 = vmatpush1.msra.mxu0 0.0
        %2253 = vmatprep.subr.mxu0 0.0
        %2254 = vmatpush1.msra.mxu0 0.0
        %2255 = vmatprep.subr.mxu0 0.0
        %2256 = vmatpush1.msra.mxu0 0.0
        %2257 = vmatprep.subr.mxu0 0.0
        %2258 = vmatpush1.msra.mxu0 0.0
        %2259 = vmatprep.subr.mxu0 0.0
        %2260 = vmatpush1.msra.mxu0 0.0
        %2261 = vmatprep.subr.mxu0 0.0
        %2262 = vmatpush1.msra.mxu0 0.0
        %2263 = vmatprep.subr.mxu0 0.0
        %2264 = vmatpush1.msra.mxu0 0.0
        %2265 = vmatprep.subr.mxu0 0.0
        %2266 = vmatpush1.msra.mxu0 0.0
        %2267 = vmatprep.subr.mxu0 0.0
        %2268 = vmatpush1.msra.mxu0 0.0
        %2269 = vmatprep.subr.mxu0 0.0
        %2270 = vmatpush1.msra.mxu0 0.0
        %2271 = vmatprep.subr.mxu0 0.0
        %2272 = vmatpush1.msra.mxu0 0.0
        %2273 = vmatprep.subr.mxu0 0.0
        %2274 = vmatpush1.msra.mxu0 0.0
        %2275 = vmatprep.subr.mxu0 0.0
        %2276 = vmatpush1.msra.mxu0 0.0
        %2277 = vmatprep.subr.mxu0 0.0
        %2278 = vmatpush1.msra.mxu0 0.0
        %2279 = vmatprep.subr.mxu0 0.0
        %2280 = vmatpush1.msra.mxu0 0.0
        %2281 = vmatprep.subr.mxu0 0.0
        %2282 = vmatpush1.msra.mxu0 0.0
        %2283 = vmatprep.subr.mxu0 0.0
        %2284 = vmatpush1.msra.mxu0 0.0
        %2285 = vmatprep.subr.mxu0 0.0
        %2286 = vmatpush1.msra.mxu0 0.0
        %2287 = vmatprep.subr.mxu0 0.0
        %2288 = vmatpush1.msra.mxu0 0.0
        %2289 = vmatprep.subr.mxu0 0.0
        %2290 = vmatpush1.msra.mxu0 0.0
        %2291 = vmatprep.mubr.f32.mxu0 0.0
        %2292 = vmatmul.mubr.f32.gmra.mrb[0].mxu0 %v2225
        %v2293 = vpop.f32.mrb[0].mxu0
        %v2294 = vadd.f32 0.0, %v2293
        %v2295 = vpop.f32.mrb[0].mxu0
        %2296 = vdwg.mxu0
        %v2298 = vsel %vm954, %v2215, 0
        %2300 = vmatprep.subr.mxu0 0.0
        %2301 = vmatpush1.msra.mxu0 %v2219
        %2302 = vmatprep.subr.mxu0 0.0
        %2303 = vmatpush1.msra.mxu0 0.0
        %2304 = vmatprep.subr.mxu0 0.0
        %2305 = vmatpush1.msra.mxu0 0.0
        %2306 = vmatprep.subr.mxu0 0.0
        %2307 = vmatpush1.msra.mxu0 0.0
        %2308 = vmatprep.subr.mxu0 0.0
        %2309 = vmatpush1.msra.mxu0 0.0
        %2310 = vmatprep.subr.mxu0 0.0
        %2311 = vmatpush1.msra.mxu0 0.0
        %2312 = vmatprep.subr.mxu0 0.0
        %2313 = vmatpush1.msra.mxu0 0.0
        %2314 = vmatprep.subr.mxu0 0.0
        %2315 = vmatpush1.msra.mxu0 0.0
        %2316 = vmatprep.subr.mxu0 0.0
        %2317 = vmatpush1.msra.mxu0 0.0
        %2318 = vmatprep.subr.mxu0 0.0
        %2319 = vmatpush1.msra.mxu0 0.0
        %2320 = vmatprep.subr.mxu0 0.0
        %2321 = vmatpush1.msra.mxu0 0.0
        %2322 = vmatprep.subr.mxu0 0.0
        %2323 = vmatpush1.msra.mxu0 0.0
        %2324 = vmatprep.subr.mxu0 0.0
        %2325 = vmatpush1.msra.mxu0 0.0
        %2326 = vmatprep.subr.mxu0 0.0
        %2327 = vmatpush1.msra.mxu0 0.0
        %2328 = vmatprep.subr.mxu0 0.0
        %2329 = vmatpush1.msra.mxu0 0.0
        %2330 = vmatprep.subr.mxu0 0.0
        %2331 = vmatpush1.msra.mxu0 0.0
        %2332 = vmatprep.subr.mxu0 0.0
        %2333 = vmatpush1.msra.mxu0 0.0
        %2334 = vmatprep.subr.mxu0 0.0
        %2335 = vmatpush1.msra.mxu0 0.0
        %2336 = vmatprep.subr.mxu0 0.0
        %2337 = vmatpush1.msra.mxu0 0.0
        %2338 = vmatprep.subr.mxu0 0.0
        %2339 = vmatpush1.msra.mxu0 0.0
        %2340 = vmatprep.subr.mxu0 0.0
        %2341 = vmatpush1.msra.mxu0 0.0
        %2342 = vmatprep.subr.mxu0 0.0
        %2343 = vmatpush1.msra.mxu0 0.0
        %2344 = vmatprep.subr.mxu0 0.0
        %2345 = vmatpush1.msra.mxu0 0.0
        %2346 = vmatprep.subr.mxu0 0.0
        %2347 = vmatpush1.msra.mxu0 0.0
        %2348 = vmatprep.subr.mxu0 0.0
        %2349 = vmatpush1.msra.mxu0 0.0
        %2350 = vmatprep.subr.mxu0 0.0
        %2351 = vmatpush1.msra.mxu0 0.0
        %2352 = vmatprep.subr.mxu0 0.0
        %2353 = vmatpush1.msra.mxu0 0.0
        %2354 = vmatprep.subr.mxu0 0.0
        %2355 = vmatpush1.msra.mxu0 0.0
        %2356 = vmatprep.subr.mxu0 0.0
        %2357 = vmatpush1.msra.mxu0 0.0
        %2358 = vmatprep.subr.mxu0 0.0
        %2359 = vmatpush1.msra.mxu0 0.0
        %2360 = vmatprep.subr.mxu0 0.0
        %2361 = vmatpush1.msra.mxu0 0.0
        %2362 = vmatprep.subr.mxu0 0.0
        %2363 = vmatpush1.msra.mxu0 0.0
        %2364 = vmatprep.mubr.f32.mxu0 0.0
        %2365 = vmatmul.mubr.f32.gmra.mrb[0].mxu0 %v2298
        %v2366 = vpop.f32.mrb[0].mxu0
        %v2367 = vadd.f32 %v2294, %v2366
        %v2368 = vpop.f32.mrb[0].mxu0
        %2369 = vdwg.mxu0
        %v2370 = vmul.f32 %v2204, %v2212
        %v2371 = vmul.f32 %v2370, %v1629
        %v2372 = vadd.f32 %v2371, %v1634
        %v2373 = vsel %vm1641, %v2217, 0.0
        %v2375 = vsel %vm954, %v2372, 0
        %2377 = vmatprep.subr.mxu0 0.0
        %2378 = vmatpush1.msra.mxu0 %v2373
        %2379 = vmatprep.subr.mxu0 0.0
        %2380 = vmatpush1.msra.mxu0 0.0
        %2381 = vmatprep.subr.mxu0 0.0
        %2382 = vmatpush1.msra.mxu0 0.0
        %2383 = vmatprep.subr.mxu0 0.0
        %2384 = vmatpush1.msra.mxu0 0.0
        %2385 = vmatprep.subr.mxu0 0.0
        %2386 = vmatpush1.msra.mxu0 0.0
        %2387 = vmatprep.subr.mxu0 0.0
        %2388 = vmatpush1.msra.mxu0 0.0
        %2389 = vmatprep.subr.mxu0 0.0
        %2390 = vmatpush1.msra.mxu0 0.0
        %2391 = vmatprep.subr.mxu0 0.0
        %2392 = vmatpush1.msra.mxu0 0.0
        %2393 = vmatprep.subr.mxu0 0.0
        %2394 = vmatpush1.msra.mxu0 0.0
        %2395 = vmatprep.subr.mxu0 0.0
        %2396 = vmatpush1.msra.mxu0 0.0
        %2397 = vmatprep.subr.mxu0 0.0
        %2398 = vmatpush1.msra.mxu0 0.0
        %2399 = vmatprep.subr.mxu0 0.0
        %2400 = vmatpush1.msra.mxu0 0.0
        %2401 = vmatprep.subr.mxu0 0.0
        %2402 = vmatpush1.msra.mxu0 0.0
        %2403 = vmatprep.subr.mxu0 0.0
        %2404 = vmatpush1.msra.mxu0 0.0
        %2405 = vmatprep.subr.mxu0 0.0
        %2406 = vmatpush1.msra.mxu0 0.0
        %2407 = vmatprep.subr.mxu0 0.0
        %2408 = vmatpush1.msra.mxu0 0.0
        %2409 = vmatprep.subr.mxu0 0.0
        %2410 = vmatpush1.msra.mxu0 0.0
        %2411 = vmatprep.subr.mxu0 0.0
        %2412 = vmatpush1.msra.mxu0 0.0
        %2413 = vmatprep.subr.mxu0 0.0
        %2414 = vmatpush1.msra.mxu0 0.0
        %2415 = vmatprep.subr.mxu0 0.0
        %2416 = vmatpush1.msra.mxu0 0.0
        %2417 = vmatprep.subr.mxu0 0.0
        %2418 = vmatpush1.msra.mxu0 0.0
        %2419 = vmatprep.subr.mxu0 0.0
        %2420 = vmatpush1.msra.mxu0 0.0
        %2421 = vmatprep.subr.mxu0 0.0
        %2422 = vmatpush1.msra.mxu0 0.0
        %2423 = vmatprep.subr.mxu0 0.0
        %2424 = vmatpush1.msra.mxu0 0.0
        %2425 = vmatprep.subr.mxu0 0.0
        %2426 = vmatpush1.msra.mxu0 0.0
        %2427 = vmatprep.subr.mxu0 0.0
        %2428 = vmatpush1.msra.mxu0 0.0
        %2429 = vmatprep.subr.mxu0 0.0
        %2430 = vmatpush1.msra.mxu0 0.0
        %2431 = vmatprep.subr.mxu0 0.0
        %2432 = vmatpush1.msra.mxu0 0.0
        %2433 = vmatprep.subr.mxu0 0.0
        %2434 = vmatpush1.msra.mxu0 0.0
        %2435 = vmatprep.subr.mxu0 0.0
        %2436 = vmatpush1.msra.mxu0 0.0
        %2437 = vmatprep.subr.mxu0 0.0
        %2438 = vmatpush1.msra.mxu0 0.0
        %2439 = vmatprep.subr.mxu0 0.0
        %2440 = vmatpush1.msra.mxu0 0.0
        %2441 = vmatprep.mubr.f32.mxu0 0.0
        %2442 = vmatmul.mubr.f32.gmra.mrb[0].mxu0 %v2375
        %v2443 = vpop.f32.mrb[0].mxu0
        %v2444 = vadd.f32 0.0, %v2443
        %v2445 = vpop.f32.mrb[0].mxu0
        %2446 = vdwg.mxu0
        %v2447 = vadd.f32 %v2367, %v2444
        %v2448 = vmul.f32 %v2207, %v2212
        %v2449 = vmul.f32 %v2448, %v1720
        %v2450 = vadd.f32 %v2449, %v1725
        %v2451 = vsel %vm1732, %v2217, 0.0
        %v2453 = vsel %vm954, %v2450, 0
        %2455 = vmatprep.subr.mxu0 0.0
        %2456 = vmatpush1.msra.mxu0 %v2451
        %2457 = vmatprep.subr.mxu0 0.0
        %2458 = vmatpush1.msra.mxu0 0.0
        %2459 = vmatprep.subr.mxu0 0.0
        %2460 = vmatpush1.msra.mxu0 0.0
        %2461 = vmatprep.subr.mxu0 0.0
        %2462 = vmatpush1.msra.mxu0 0.0
        %2463 = vmatprep.subr.mxu0 0.0
        %2464 = vmatpush1.msra.mxu0 0.0
        %2465 = vmatprep.subr.mxu0 0.0
        %2466 = vmatpush1.msra.mxu0 0.0
        %2467 = vmatprep.subr.mxu0 0.0
        %2468 = vmatpush1.msra.mxu0 0.0
        %2469 = vmatprep.subr.mxu0 0.0
        %2470 = vmatpush1.msra.mxu0 0.0
        %2471 = vmatprep.subr.mxu0 0.0
        %2472 = vmatpush1.msra.mxu0 0.0
        %2473 = vmatprep.subr.mxu0 0.0
        %2474 = vmatpush1.msra.mxu0 0.0
        %2475 = vmatprep.subr.mxu0 0.0
        %2476 = vmatpush1.msra.mxu0 0.0
        %2477 = vmatprep.subr.mxu0 0.0
        %2478 = vmatpush1.msra.mxu0 0.0
        %2479 = vmatprep.subr.mxu0 0.0
        %2480 = vmatpush1.msra.mxu0 0.0
        %2481 = vmatprep.subr.mxu0 0.0
        %2482 = vmatpush1.msra.mxu0 0.0
        %2483 = vmatprep.subr.mxu0 0.0
        %2484 = vmatpush1.msra.mxu0 0.0
        %2485 = vmatprep.subr.mxu0 0.0
        %2486 = vmatpush1.msra.mxu0 0.0
        %2487 = vmatprep.subr.mxu0 0.0
        %2488 = vmatpush1.msra.mxu0 0.0
        %2489 = vmatprep.subr.mxu0 0.0
        %2490 = vmatpush1.msra.mxu0 0.0
        %2491 = vmatprep.subr.mxu0 0.0
        %2492 = vmatpush1.msra.mxu0 0.0
        %2493 = vmatprep.subr.mxu0 0.0
        %2494 = vmatpush1.msra.mxu0 0.0
        %2495 = vmatprep.subr.mxu0 0.0
        %2496 = vmatpush1.msra.mxu0 0.0
        %2497 = vmatprep.subr.mxu0 0.0
        %2498 = vmatpush1.msra.mxu0 0.0
        %2499 = vmatprep.subr.mxu0 0.0
        %2500 = vmatpush1.msra.mxu0 0.0
        %2501 = vmatprep.subr.mxu0 0.0
        %2502 = vmatpush1.msra.mxu0 0.0
        %2503 = vmatprep.subr.mxu0 0.0
        %2504 = vmatpush1.msra.mxu0 0.0
        %2505 = vmatprep.subr.mxu0 0.0
        %2506 = vmatpush1.msra.mxu0 0.0
        %2507 = vmatprep.subr.mxu0 0.0
        %2508 = vmatpush1.msra.mxu0 0.0
        %2509 = vmatprep.subr.mxu0 0.0
        %2510 = vmatpush1.msra.mxu0 0.0
        %2511 = vmatprep.subr.mxu0 0.0
        %2512 = vmatpush1.msra.mxu0 0.0
        %2513 = vmatprep.subr.mxu0 0.0
        %2514 = vmatpush1.msra.mxu0 0.0
        %2515 = vmatprep.subr.mxu0 0.0
        %2516 = vmatpush1.msra.mxu0 0.0
        %2517 = vmatprep.subr.mxu0 0.0
        %2518 = vmatpush1.msra.mxu0 0.0
        %2519 = vmatprep.mubr.f32.mxu0 0.0
        %2520 = vmatmul.mubr.f32.gmra.mrb[0].mxu0 %v2453
        %v2521 = vpop.f32.mrb[0].mxu0
        %v2522 = vadd.f32 0.0, %v2521
        %v2523 = vpop.f32.mrb[0].mxu0
        %2524 = vdwg.mxu0
        %v2525 = vadd.f32 %v2447, %v2522
        %v2526 = vpack.c.bf16 %v2525, %v1807
        %v2527 = vld [vmem:[%s810] sm:$0xf]
        %v2528 = vld [vmem:[%s810 + $0x4] sm:$0xf]
        %v2529 = vld [vmem:[%s810 + $0x8] sm:$0xf]
        %v2530 = vld [vmem:[%s810 + $0xc] sm:$0xf]
        %v2535 = vunpack.c.l.b16 %v2527
        %v2536 = vunpack.c.l.b16 %v2528
        %v2537 = vunpack.c.l.b16 %v2529
        %v2538 = vunpack.c.l.b16 %v2530
        %v2539 = vpack.c.b16 %v2536, %v2535
        %v2540 = vpack.c.b16 %v2538, %v2537
        %v2544 = vsel %vm841, %v2526, 0
        %2546 = vmatprep.subr.bf16.mxu0 0
        %2547 = vmatpush1.bf16.msra.mxu0 %v2539
        %2548 = vmatprep.subr.bf16.mxu0 0
        %2549 = vmatpush1.bf16.msra.mxu0 %v2540
        %2550 = vmatprep.subr.bf16.mxu0 0
        %2551 = vmatpush1.bf16.msra.mxu0 0
        %2552 = vmatprep.subr.bf16.mxu0 0
        %2553 = vmatpush1.bf16.msra.mxu0 0
        %2554 = vmatprep.subr.bf16.mxu0 0
        %2555 = vmatpush1.bf16.msra.mxu0 0
        %2556 = vmatprep.subr.bf16.mxu0 0
        %2557 = vmatpush1.bf16.msra.mxu0 0
        %2558 = vmatprep.subr.bf16.mxu0 0
        %2559 = vmatpush1.bf16.msra.mxu0 0
        %2560 = vmatprep.subr.bf16.mxu0 0
        %2561 = vmatpush1.bf16.msra.mxu0 0
        %2562 = vmatprep.subr.bf16.mxu0 0
        %2563 = vmatpush1.bf16.msra.mxu0 0
        %2564 = vmatprep.subr.bf16.mxu0 0
        %2565 = vmatpush1.bf16.msra.mxu0 0
        %2566 = vmatprep.subr.bf16.mxu0 0
        %2567 = vmatpush1.bf16.msra.mxu0 0
        %2568 = vmatprep.subr.bf16.mxu0 0
        %2569 = vmatpush1.bf16.msra.mxu0 0
        %2570 = vmatprep.subr.bf16.mxu0 0
        %2571 = vmatpush1.bf16.msra.mxu0 0
        %2572 = vmatprep.subr.bf16.mxu0 0
        %2573 = vmatpush1.bf16.msra.mxu0 0
        %2574 = vmatprep.subr.bf16.mxu0 0
        %2575 = vmatpush1.bf16.msra.mxu0 0
        %2576 = vmatprep.subr.bf16.mxu0 0
        %2577 = vmatpush1.bf16.msra.mxu0 0
        %2578 = vmatprep.mubr.bf16.mxu0 0
        %2579 = vmatmul.mubr.bf16.gmra.mrb[0].mxu0 %v2544
        %v2580 = vpop.f32.mrb[0].mxu0
        %v2581 = vadd.f32 0.0, %v2580
        %v2582 = vpop.f32.mrb[0].mxu0
        %v2583 = vpop.f32.mrb[0].mxu0
        %v2584 = vadd.f32 0.0, %v2583
        %v2585 = vpop.f32.mrb[0].mxu0
        %2586 = vdwg.mxu0
        %v2587 = vadd.f32 %v837, %v2581
        %v2588 = vadd.f32 %v838, %v2584
        %v2589 = vld [vmem:[%s813] sm:$0x1]
        %v2591 = vlaneseq
        %v2592 = vshrl.u32 %v2591, 7
        %v2593 = vsub.s32 0, %v2592
        %v2594 = vrot.slane %v2589, %v2593
        %v2596 = vadd.f32 %v2587, %v2594
        %v2597 = vadd.f32 %v2588, %v2594
        %v2598 = vld [vmem:[%s676] sm:$0x1]
        %v2599 = vld [vmem:[%s684] sm:$0x1]
        %v2600 = vsel %vm841, %v2596, 0.0
        %2601 = vadd.xlane.f32.xlu0 %v2600
        %v2602 = vpop.xlane.xlu0 %2601
        %v2603 = vsel %vm841, %v2597, 0.0
        %2604 = vadd.xlane.f32.xlu0 %v2603
        %v2605 = vpop.xlane.xlu0 %2604
        %v2606 = vmul.f32 %v2602, %v848
        %v2607 = vmul.f32 %v2605, %v848
        %v2608 = vsub.f32 %v2596, %v2606
        %v2609 = vsub.f32 %v2597, %v2607
        %v2610 = vmul.f32 %v2608, %v2608
        %v2611 = vmul.f32 %v2609, %v2609
        %v2612 = vsel %vm841, %v2610, 0.0
        %2613 = vadd.xlane.f32.xlu0 %v2612
        %v2614 = vpop.xlane.xlu0 %2613
        %v2615 = vsel %vm841, %v2611, 0.0
        %2616 = vadd.xlane.f32.xlu0 %v2615
        %v2617 = vpop.xlane.xlu0 %2616
        %v2618 = vmul.f32 %v2614, %v848
        %v2619 = vmul.f32 %v2617, %v848
        %v2620 = vadd.f32 %v2618, 1e-05
        %v2621 = vadd.f32 %v2619, 1e-05
        %v2622 = vrsqrt.pop %v2620
        %v2623 = vrsqrt.pop %v2621
        %v2624 = vmul.f32 %v2608, %v2622
        %v2625 = vmul.f32 %v2609, %v2623
        %v2627 = vlaneseq
        %v2628 = vshrl.u32 %v2627, 7
        %v2629 = vsub.s32 0, %v2628
        %v2630 = vrot.slane %v2598, %v2629
        %v2632 = vmul.f32 %v2624, %v2630
        %v2633 = vmul.f32 %v2625, %v2630
        %v2635 = vlaneseq
        %v2636 = vshrl.u32 %v2635, 7
        %v2637 = vsub.s32 0, %v2636
        %v2638 = vrot.slane %v2599, %v2637
        %v2640 = vadd.f32 %v2632, %v2638
        %v2641 = vadd.f32 %v2633, %v2638
        %v2642 = vpack.c.bf16 %v2641, %v2640
        %v2643 = vld [vmem:[%s818] sm:$0xf]
        %v2644 = vld [vmem:[%s818 + $0x4] sm:$0xf]
        %v2645 = vld [vmem:[%s818 + $0x8] sm:$0xf]
        %v2646 = vld [vmem:[%s818 + $0xc] sm:$0xf]
        %v2647 = vld [vmem:[%s692] sm:$0x1]
        %v2649 = vlaneseq
        %v2650 = vshrl.u32 %v2649, 7
        %v2651 = vsub.s32 0, %v2650
        %v2652 = vrot.slane %v2647, %v2651
        %v2658 = vunpack.c.l.b16 %v2643
        %v2659 = vunpack.c.l.b16 %v2644
        %v2660 = vunpack.c.l.b16 %v2645
        %v2661 = vunpack.c.l.b16 %v2646
        %v2662 = vpack.c.b16 %v2659, %v2658
        %v2663 = vpack.c.b16 %v2661, %v2660
        %v2667 = vsel %vm841, %v2642, 0
        %2669 = vmatprep.subr.bf16.mxu0 0
        %2670 = vmatpush1.bf16.msra.mxu0 %v2662
        %2671 = vmatprep.subr.bf16.mxu0 0
        %2672 = vmatpush1.bf16.msra.mxu0 %v2663
        %2673 = vmatprep.subr.bf16.mxu0 0
        %2674 = vmatpush1.bf16.msra.mxu0 0
        %2675 = vmatprep.subr.bf16.mxu0 0
        %2676 = vmatpush1.bf16.msra.mxu0 0
        %2677 = vmatprep.subr.bf16.mxu0 0
        %2678 = vmatpush1.bf16.msra.mxu0 0
        %2679 = vmatprep.subr.bf16.mxu0 0
        %2680 = vmatpush1.bf16.msra.mxu0 0
        %2681 = vmatprep.subr.bf16.mxu0 0
        %2682 = vmatpush1.bf16.msra.mxu0 0
        %2683 = vmatprep.subr.bf16.mxu0 0
        %2684 = vmatpush1.bf16.msra.mxu0 0
        %2685 = vmatprep.subr.bf16.mxu0 0
        %2686 = vmatpush1.bf16.msra.mxu0 0
        %2687 = vmatprep.subr.bf16.mxu0 0
        %2688 = vmatpush1.bf16.msra.mxu0 0
        %2689 = vmatprep.subr.bf16.mxu0 0
        %2690 = vmatpush1.bf16.msra.mxu0 0
        %2691 = vmatprep.subr.bf16.mxu0 0
        %2692 = vmatpush1.bf16.msra.mxu0 0
        %2693 = vmatprep.subr.bf16.mxu0 0
        %2694 = vmatpush1.bf16.msra.mxu0 0
        %2695 = vmatprep.subr.bf16.mxu0 0
        %2696 = vmatpush1.bf16.msra.mxu0 0
        %2697 = vmatprep.subr.bf16.mxu0 0
        %2698 = vmatpush1.bf16.msra.mxu0 0
        %2699 = vmatprep.subr.bf16.mxu0 0
        %2700 = vmatpush1.bf16.msra.mxu0 0
        %2701 = vmatprep.mubr.bf16.mxu0 0
        %2702 = vmatmul.mubr.bf16.gmra.mrb[0].mxu0 %v2667
        %v2703 = vpop.f32.mrb[0].mxu0
        %v2704 = vadd.f32 %v2652, %v2703
        %v2705 = vpop.f32.mrb[0].mxu0
        %v2706 = vpop.f32.mrb[0].mxu0
        %v2707 = vadd.f32 %v2652, %v2706
        %v2708 = vpop.f32.mrb[0].mxu0
        %2709 = vdwg.mxu0
        %v2710 = vmul.f32 %v2704, 0.5
        %v2711 = vmul.f32 %v2707, 0.5
        %v2712 = vmul.f32 %v2704, 0.044715
        %v2713 = vmul.f32 %v2707, 0.044715
        %v2714 = vmul.f32 %v2712, %v2704
        %v2715 = vmul.f32 %v2713, %v2707
        %v2716 = vmul.f32 %v2714, %v2704
        %v2717 = vmul.f32 %v2715, %v2707
        %v2718 = vadd.f32 %v2704, %v2716
        %v2719 = vadd.f32 %v2707, %v2717
        %v2720 = vmul.f32 %v2718, 0.7978846
        %v2721 = vmul.f32 %v2719, 0.7978846
        %v2722 = vtanh.pop %v2720
        %v2723 = vtanh.pop %v2721
        %v2724 = vadd.f32 %v2722, 1.0
        %v2725 = vadd.f32 %v2723, 1.0
        %v2726 = vmul.f32 %v2710, %v2724
        %v2727 = vmul.f32 %v2711, %v2725
        %v2728 = vpack.c.bf16 %v2727, %v2726
        %v2729 = vld [vmem:[%s823] sm:$0xf]
        %v2730 = vld [vmem:[%s823 + $0x4] sm:$0xf]
        %v2731 = vld [vmem:[%s823 + $0x8] sm:$0xf]
        %v2732 = vld [vmem:[%s823 + $0xc] sm:$0xf]
        %v2733 = vld [vmem:[%s823 + $0x10] sm:$0xf]
        %v2734 = vld [vmem:[%s823 + $0x14] sm:$0xf]
        %v2735 = vld [vmem:[%s823 + $0x18] sm:$0xf]
        %v2736 = vld [vmem:[%s823 + $0x1c] sm:$0xf]
        %v2745 = vunpack.c.l.b16 %v2729
        %v2746 = vunpack.c.l.b16 %v2730
        %v2747 = vunpack.c.l.b16 %v2731
        %v2748 = vunpack.c.l.b16 %v2732
        %v2749 = vunpack.c.l.b16 %v2733
        %v2750 = vunpack.c.l.b16 %v2734
        %v2751 = vunpack.c.l.b16 %v2735
        %v2752 = vunpack.c.l.b16 %v2736
        %v2753 = vpack.c.b16 %v2746, %v2745
        %v2754 = vpack.c.b16 %v2748, %v2747
        %v2755 = vpack.c.b16 %v2750, %v2749
        %v2756 = vpack.c.b16 %v2752, %v2751
        %vm2761 = vcmask 523264
        %v2763 = vsel %vm2761, %v2728, 0
        %2765 = vmatprep.subr.bf16.mxu0 0
        %2766 = vmatpush1.bf16.msra.mxu0 %v2753
        %2767 = vmatprep.subr.bf16.mxu0 0
        %2768 = vmatpush1.bf16.msra.mxu0 %v2754
        %2769 = vmatprep.subr.bf16.mxu0 0
        %2770 = vmatpush1.bf16.msra.mxu0 %v2755
        %2771 = vmatprep.subr.bf16.mxu0 0
        %2772 = vmatpush1.bf16.msra.mxu0 %v2756
        %2773 = vmatprep.subr.bf16.mxu0 0
        %2774 = vmatpush1.bf16.msra.mxu0 0
        %2775 = vmatprep.subr.bf16.mxu0 0
        %2776 = vmatpush1.bf16.msra.mxu0 0
        %2777 = vmatprep.subr.bf16.mxu0 0
        %2778 = vmatpush1.bf16.msra.mxu0 0
        %2779 = vmatprep.subr.bf16.mxu0 0
        %2780 = vmatpush1.bf16.msra.mxu0 0
        %2781 = vmatprep.subr.bf16.mxu0 0
        %2782 = vmatpush1.bf16.msra.mxu0 0
        %2783 = vmatprep.subr.bf16.mxu0 0
        %2784 = vmatpush1.bf16.msra.mxu0 0
        %2785 = vmatprep.subr.bf16.mxu0 0
        %2786 = vmatpush1.bf16.msra.mxu0 0
        %2787 = vmatprep.subr.bf16.mxu0 0
        %2788 = vmatpush1.bf16.msra.mxu0 0
        %2789 = vmatprep.subr.bf16.mxu0 0
        %2790 = vmatpush1.bf16.msra.mxu0 0
        %2791 = vmatprep.subr.bf16.mxu0 0
        %2792 = vmatpush1.bf16.msra.mxu0 0
        %2793 = vmatprep.subr.bf16.mxu0 0
        %2794 = vmatpush1.bf16.msra.mxu0 0
        %2795 = vmatprep.subr.bf16.mxu0 0
        %2796 = vmatpush1.bf16.msra.mxu0 0
        %2797 = vmatprep.mubr.bf16.mxu0 0
        %2798 = vmatmul.mubr.bf16.gmra.mrb[0].mxu0 %v2763
        %v2799 = vpop.f32.mrb[0].mxu0
        %v2800 = vadd.f32 0.0, %v2799
        %v2801 = vpop.f32.mrb[0].mxu0
        %v2802 = vpop.f32.mrb[0].mxu0
        %v2803 = vadd.f32 0.0, %v2802
        %v2804 = vpop.f32.mrb[0].mxu0
        %2805 = vdwg.mxu0
        %v2806 = vadd.f32 %v2596, %v2800
        %v2807 = vadd.f32 %v2597, %v2803
        %v2808 = vld [vmem:[%s826] sm:$0x1]
        %v2810 = vlaneseq
        %v2811 = vshrl.u32 %v2810, 7
        %v2812 = vsub.s32 0, %v2811
        %v2813 = vrot.slane %v2808, %v2812
        %v2815 = vadd.f32 %v2806, %v2813
        %v2816 = vadd.f32 %v2807, %v2813
        %2817 = vst.msk [vmem:[#allocation11] sm:$0xff] %vm841, %v2815
        %2818 = vst.msk [vmem:[#allocation11 + $0x8] sm:$0xff] %vm841, %v2816
        %p2819 = scmp.eq.s32.totalorder %s36, 1
        // Predicated region
        $region113: #{tpu_custom_call.1} parent=87 // pred_check
          %p2820 = pneg %p2819
        $region114: #{tpu_custom_call.1} parent=87 // pred_check_branch
          %2822 = sbr.rel (%p2820) target = $region116
        $region115: #{tpu_custom_call.1} parent=87 // pred_region
          %v2823 = vld [vmem:[#allocation11] sm:$0xff]
          %v2824 = vld [vmem:[#allocation11 + $0x8] sm:$0xff]
          %v2825 = vld [vmem:[%s15] sm:$0x1]
          %v2826 = vld [vmem:[%s16] sm:$0x1]
          %v2827 = vsel %vm841, %v2823, 0.0
          %2828 = vadd.xlane.f32.xlu0 %v2827
          %v2829 = vpop.xlane.xlu0 %2828
          %v2830 = vsel %vm841, %v2824, 0.0
          %2831 = vadd.xlane.f32.xlu0 %v2830
          %v2832 = vpop.xlane.xlu0 %2831
          %v2833 = vmul.f32 %v2829, %v848
          %v2834 = vmul.f32 %v2832, %v848
          %v2835 = vsub.f32 %v2823, %v2833
          %v2836 = vsub.f32 %v2824, %v2834
          %v2837 = vmul.f32 %v2835, %v2835
          %v2838 = vmul.f32 %v2836, %v2836
          %v2839 = vsel %vm841, %v2837, 0.0
          %2840 = vadd.xlane.f32.xlu0 %v2839
          %v2841 = vpop.xlane.xlu0 %2840
          %v2842 = vsel %vm841, %v2838, 0.0
          %2843 = vadd.xlane.f32.xlu0 %v2842
          %v2844 = vpop.xlane.xlu0 %2843
          %v2845 = vmul.f32 %v2841, %v848
          %v2846 = vmul.f32 %v2844, %v848
          %v2847 = vadd.f32 %v2845, 1e-05
          %v2848 = vadd.f32 %v2846, 1e-05
          %v2849 = vrsqrt.pop %v2847
          %v2850 = vrsqrt.pop %v2848
          %v2851 = vmul.f32 %v2835, %v2849
          %v2852 = vmul.f32 %v2836, %v2850
          %v2854 = vlaneseq
          %v2855 = vshrl.u32 %v2854, 7
          %v2856 = vsub.s32 0, %v2855
          %v2857 = vrot.slane %v2825, %v2856
          %v2859 = vmul.f32 %v2851, %v2857
          %v2860 = vmul.f32 %v2852, %v2857
          %v2862 = vlaneseq
          %v2863 = vshrl.u32 %v2862, 7
          %v2864 = vsub.s32 0, %v2863
          %v2865 = vrot.slane %v2826, %v2864
          %v2867 = vadd.f32 %v2859, %v2865
          %v2868 = vadd.f32 %v2860, %v2865
          %2869 = vst.msk [vmem:[#allocation11] sm:$0xff] %vm841, %v2867
          %2870 = vst.msk [vmem:[#allocation11 + $0x8] sm:$0xff] %vm841, %v2868
        $region116: #{tpu_custom_call.1} parent=87 // pred_fallthru
          _
        // Predicated region
        $region117: #{tpu_custom_call.1} parent=87 // pred_check
          %p2871 = pneg %p476
        $region118: #{tpu_custom_call.1} parent=87 // pred_check_branch
          %2873 = sbr.rel (%p2871) target = $region120
        $region119: #{tpu_custom_call.1} parent=87 // pred_region
          %s2875 = ssub.s32 256, 256
          %2876 = vsyncadd [#allocation4], %s2875
          %s2877 = sshll.u32 [#allocation11], 4
          %s2878 = int_to_ptr.vmem [resolvable:$true] %s2877
          %2883 = dma.vmem_to_hbm [thread:$0]  %s2878, 256, %s17, [#allocation4], 128, 128, 8
        $region120: #{tpu_custom_call.1} parent=87 // pred_fallthru
          _
        // Predicated region
        $region121: #{tpu_custom_call.1} parent=87 // pred_check
          %p2884 = pneg %p476
        $region122: #{tpu_custom_call.1} parent=87 // pred_check_branch
          %2886 = sbr.rel (%p2884) target = $region124
        $region123: #{tpu_custom_call.1} parent=87 // pred_region
          %2887 = dma.done [#allocation4], 256
        $region124: #{tpu_custom_call.1} parent=87 // pred_fallthru
          _
      $region88: #{tpu_custom_call.1} parent=5 // pred_fallthru
        _
      %p2888 = scmp.le.s32.totalorder 2, %s31
      // Predicated region
      $region125: #{tpu_custom_call.1} parent=5 // pred_check
        %p2889 = pneg %p2888
      $region126: #{tpu_custom_call.1} parent=5 // pred_check_branch
        %2891 = sbr.rel (%p2889) target = $region128
      $region127: #{tpu_custom_call.1} parent=5 // pred_region
        %s2892 = ssub.s32 %s31, 2
      $region128: #{tpu_custom_call.1} parent=5 // pred_fallthru
        _
    $region6: #{tpu_custom_call.1} parent=1 // loop_footer
      %s35 = sadd.s32 1, %s31
    $region7: #{tpu_custom_call.1} parent=1 // loop_footer_branch
      %30 = sbr.rel target = $region3
    $region8: #{tpu_custom_call.1} parent=1 // loop_exit
      _
    %2893 = vsyncpa [#allocation3], 1
    %s2894 = scalar_lea.sflag [#allocation3], 1
    %2895 = vsyncpa %s2894, 1
    %2896 = vsyncpa [#allocation6], 1
    %s2897 = scalar_lea.sflag [#allocation6], 1
    %2898 = vsyncpa %s2897, 1
    %2899 = vsyncpa [#allocation9], 1
    %s2900 = scalar_lea.sflag [#allocation9], 1
    %2901 = vsyncpa %s2900, 1
    %2902 = vsyncpa [#allocation4], 1
    %s2903 = scalar_lea.sflag [#allocation4], 1
    %2904 = vsyncpa %s2903, 1

</llo_original>
